<compile_context>
chip_gen: v5e
topology: v5e:2x2
jax: 0.10.0
libtpu: 0.0.40
codegen_flags: <defaults>
</compile_context>

<pallas_src>
import functools
import math

import jax
import jax.numpy as jnp
import numpy as np
from jax import lax
from jax.experimental import pallas as pl
from jax.experimental.pallas import tpu as pltpu

_SUB_ROWS = 256  # rows per in-kernel compute chunk (bounds live vreg ranges)


# -----------------------------------------------------------------------------
# Parameter construction (matches DcFloatEncoder / depthcharge FloatEncoder).
# -----------------------------------------------------------------------------
def _float_encoder_terms(d_model: int, min_wavelength: float, max_wavelength: float):
    """Sin/cos wavelength terms of a sinusoidal float encoder."""
    d_sin = math.ceil(d_model / 2)
    d_cos = d_model - d_sin
    base = min_wavelength / (2.0 * math.pi)
    scale = max_wavelength / min_wavelength
    sin_exp = np.arange(0, d_sin, dtype=np.float64) / max(d_sin - 1, 1)
    cos_exp = (np.arange(d_sin, d_model, dtype=np.float64) - d_sin) / max(d_cos - 1, 1)
    sin_term = base * scale ** sin_exp          # (d_sin,)
    cos_term = base * scale ** cos_exp          # (d_cos,)
    return sin_term, cos_term, d_sin, d_cos


def build_static_peak_encoder_params(
    d_model: int,
    min_mz_wavelength: float = 0.001,
    max_mz_wavelength: float = 10000.0,
    min_intensity_wavelength: float = 1e-06,
    max_intensity_wavelength: float = 1.0,
    mz_to_int_ratio: float = 2.0 / 3.0,
):
    """Deterministic (3, d_model) float32 parameter table.

      row 0: 1/term on m/z columns, 0 on intensity columns   (w_mz)
      row 1: 1/term on intensity columns, 0 on m/z columns   (w_int)
      row 2: 0 on sin columns, pi/2 on cos columns           (phase)
    Output column layout: [mz_sin | mz_cos | int_sin | int_cos].
    """
    d_mz = math.ceil(mz_to_int_ratio * d_model)
    d_int = d_model - d_mz

    mz_sin, mz_cos, d_mz_sin, d_mz_cos = _float_encoder_terms(
        d_mz, min_mz_wavelength, max_mz_wavelength
    )
    it_sin, it_cos, d_it_sin, d_it_cos = _float_encoder_terms(
        d_int, min_intensity_wavelength, max_intensity_wavelength
    )

    w_mz = np.concatenate([1.0 / mz_sin, 1.0 / mz_cos, np.zeros(d_int)])
    w_int = np.concatenate([np.zeros(d_mz), 1.0 / it_sin, 1.0 / it_cos])
    phase = np.concatenate(
        [
            np.zeros(d_mz_sin),
            np.full(d_mz_cos, np.pi / 2.0),
            np.zeros(d_it_sin),
            np.full(d_it_cos, np.pi / 2.0),
        ]
    )
    params = np.stack([w_mz, w_int, phase]).astype(np.float32)   # (3, d_model)
    return jnp.asarray(params)


# -----------------------------------------------------------------------------
# Pallas kernel: the elementwise hot path.
# -----------------------------------------------------------------------------
def _peak_encoder_kernel(x_ref, w_ref, o_ref, *, sub_rows: int):
    # x_ref: (row_tile, 2)        -- (m/z, intensity) per peak
    # w_ref: (3, d_model)         -- [w_mz ; w_int ; phase]
    # o_ref: (row_tile, d_model)
    w = w_ref[...]
    w_mz = w[0:1, :]
    w_int = w[1:2, :]
    phase = w[2:3, :]

    rows = x_ref.shape[0]
    n_sub = rows // sub_rows            # row_tile is a multiple of sub_rows

    def encode_rows(r0):
        x = x_ref[pl.ds(r0, sub_rows), :]            # (sub, 2)
        # 2 mul + 2 add on the VPU, one sin per element; keep K=2 FMA off the MXU.
        angle = x[:, 0:1] * w_mz + x[:, 1:2] * w_int + phase
        o_ref[pl.ds(r0, sub_rows), :] = jnp.sin(angle).astype(o_ref.dtype)

    if n_sub <= 1:
        encode_rows(0)
    else:
        # fori_loop (not a Python for) so the (sub, d_model) intermediate's
        # live range is bounded per chunk -> no vreg spills at big row tiles.
        def body(i, carry):
            encode_rows(pl.multiple_of(i * sub_rows, sub_rows))
            return carry

        lax.fori_loop(0, n_sub, body, 0)


# -----------------------------------------------------------------------------
# Wrapper
# -----------------------------------------------------------------------------
def _cdiv(a: int, b: int) -> int:
    return -(-a // b)


def _round_up(x: int, m: int) -> int:
    return _cdiv(x, m) * m


def _choose_row_tile(n_rows: int, max_tile: int, granule: int = 8) -> int:
    """Pick the row-block size.

    Constraints / goals:
      * multiple of `granule` (8 for f32 output, 16 for bf16, 32 for 1-byte);
      * as large as max_tile allows (amortizes the ~0.35 us per-grid-step
        pipeline overhead);
      * at least 2 grid steps (prefer an even count) so "parallel" grid
        sharding keeps both v7x TensorCores busy and balanced;
      * a multiple of _SUB_ROWS for big tiles so the in-kernel sub-chunk loop
        divides evenly.
    No dividing requirement: partial final blocks are handled by Pallas.
    """
    max_tile = max(granule, max_tile - max_tile % granule)
    if n_rows <= 2 * granule:
        return _round_up(max(n_rows, 1), granule)

    cap_two_steps = _round_up(_cdiv(n_rows, 2), granule)
    tile = min(max_tile, cap_two_steps)
    if tile >= 2 * _SUB_ROWS:
        tile -= tile % _SUB_ROWS

    steps = _cdiv(n_rows, tile)
    if steps % 2 == 1 and steps > 1:
        t2 = _round_up(_cdiv(n_rows, steps + 1), granule)
        if t2 >= 2 * _SUB_ROWS:
            t2 -= t2 % _SUB_ROWS
        if t2 >= granule and _cdiv(n_rows, t2) % 2 == 0:
            tile = t2
    return max(tile, granule)


def static_peak_encoder(
    x,
    params,
    *,
    max_row_tile: int = 4096,
    out_dtype=jnp.float32,
    vmem_limit_bytes=None,
    use_partial_blocks: bool = True,
):
    """x: (n_spectra, n_peaks, 2) float32 -> (n_spectra, n_peaks, d_model).

    `params` is the (3, d_model) table from build_static_peak_encoder_params.

    The row tile is sized from a VMEM budget derived from `vmem_limit_bytes`
    (or the conservative ~16 MiB v5e default scoped-VMEM limit; v6e/v7x
    default to ~32 MiB scoped).  `out_dtype=jnp.bfloat16` halves writeback
    bytes (worth ~1.2-1.4x on v5e's HBM) but changes downstream numerics, so
    float32 stays the default.  `use_partial_blocks=False` re-enables the
    older pad + slice path as a fallback.
    """
    n_spectra, n_peaks, two = x.shape
    assert two == 2
    three, d_model = params.shape
    assert three == 3

    n_rows = n_spectra * n_peaks
    x2d = x.reshape(n_rows, 2).astype(jnp.float32)

    out_itemsize = np.dtype(out_dtype).itemsize
    granule = {4: 8, 2: 16, 1: 32}.get(out_itemsize, 8)

    # Double-buffered working set per block row: the output block plus the
    # (row_tile, 2) input block, which is lane-padded 2 -> 128 in VMEM.
    bytes_per_row = 2 * _round_up(d_model, 128) * out_itemsize + 2 * 128 * 4
    vmem_budget = ((vmem_limit_bytes or (16 << 20)) * 3) // 4   # keep headroom
    vmem_cap_rows = max(granule, (vmem_budget // bytes_per_row) // granule * granule)

    row_tile = _choose_row_tile(n_rows, min(max_row_tile, vmem_cap_rows), granule)
    sub_rows = (
        _SUB_ROWS if (row_tile > _SUB_ROWS and row_tile % _SUB_ROWS == 0) else row_tile
    )

    n_rows_call = n_rows
    if not use_partial_blocks:
        # Fallback: pad to a whole number of blocks and slice afterwards
        # (costs an extra HBM round trip of the output).
        n_rows_call = _round_up(n_rows, row_tile)
        if n_rows_call != n_rows:
            x2d = jnp.pad(x2d, ((0, n_rows_call - n_rows), (0, 0)))

    grid = (_cdiv(n_rows_call, row_tile),)

    cost = pl.CostEstimate(
        flops=4 * n_rows * d_model,                   # 2 mul + 2 add per element
        transcendentals=n_rows * d_model,             # one sin per element
        bytes_accessed=(n_rows * 2 * 4                # x read
                        + 3 * d_model * 4             # params
                        + n_rows * d_model * out_itemsize),  # output write
    )

    kernel = functools.partial(_peak_encoder_kernel, sub_rows=sub_rows)

    out2d = pl.pallas_call(
        kernel,
        out_shape=jax.ShapeDtypeStruct((n_rows_call, d_model), out_dtype),
        grid_spec=pltpu.PrefetchScalarGridSpec(
            num_scalar_prefetch=0,
            grid=grid,
            in_specs=[
                pl.BlockSpec((row_tile, 2), lambda i: (i, 0)),
                pl.BlockSpec((3, d_model), lambda i: (0, 0)),
            ],
            out_specs=pl.BlockSpec((row_tile, d_model), lambda i: (i, 0)),
        ),
        compiler_params=pltpu.CompilerParams(
            dimension_semantics=("parallel",),   # rows shard across v7x's 2 TCs
            vmem_limit_bytes=vmem_limit_bytes,
        ),
        cost_estimate=cost,
    )(x2d, params)

    if n_rows_call != n_rows:
        out2d = out2d[:n_rows]
    # Reshape of a contiguous (unsliced) array: metadata only on the fast path.
    return out2d.reshape(n_spectra, n_peaks, d_model)


# -----------------------------------------------------------------------------
# Pure-JAX faithful mirror of the PyTorch forward (for the correctness check).
# -----------------------------------------------------------------------------
def _dc_float_encode_ref(values, d_model, min_wavelength, max_wavelength):
    """Mirror of depthcharge FloatEncoder.forward: cat([sin(x/sin_t), cos(x/cos_t)])."""
    sin_term, cos_term, _, _ = _float_encoder_terms(d_model, min_wavelength, max_wavelength)
    sin_term = jnp.asarray(sin_term.astype(np.float32))
    cos_term = jnp.asarray(cos_term.astype(np.float32))
    return jnp.concatenate(
        [jnp.sin(values[..., None] / sin_term),
         jnp.cos(values[..., None] / cos_term)],
        axis=-1,
    )


def reference_static_peak_encoder(
    X,
    d_model,
    min_mz_wavelength=0.001,
    max_mz_wavelength=10000.0,
    min_intensity_wavelength=1e-06,
    max_intensity_wavelength=1.0,
    mz_to_int_ratio=2.0 / 3.0,
):
    d_mz = math.ceil(mz_to_int_ratio * d_model)
    d_int = d_model - d_mz
    return jnp.concatenate(
        [
            _dc_float_encode_ref(X[..., 0], d_mz, min_mz_wavelength, max_mz_wavelength),
            _dc_float_encode_ref(X[..., 1], d_int, min_intensity_wavelength, max_intensity_wavelength),
        ],
        axis=-1,
    )


if __name__ == "__main__":
    d_model = 128                 # multiple of 128 -> lane-dense, unmasked stores
    params = build_static_peak_encoder_params(d_model)

    key = jax.random.PRNGKey(0)
    k_mz, k_int = jax.random.split(key)

    # Case 1: realistic magnitudes. 8 x 256 peaks = 2048 rows -> two balanced
    # 1024-row grid steps (both v7x TensorCores busy), 256-row in-kernel chunks.
    n_spectra, n_peaks = 8, 256
    mz = jax.random.uniform(k_mz, (n_spectra, n_peaks), minval=50.0, maxval=2000.0)
    inten = jax.random.uniform(k_int, (n_spectra, n_peaks), minval=0.0, maxval=1.0)
    x = jnp.stack([mz, inten], axis=-1).astype(jnp.float32)
    x = x.at[:, -8:, :].set(0.0)  # zero padding, as the module expects

    out = jax.block_until_ready(static_peak_encoder(x, params))
    assert out.shape == (n_spectra, n_peaks, d_model)
    out_np = np.asarray(out)
    assert np.isfinite(out_np).all()
    assert np.abs(out_np).max() <= 1.0 + 1e-3

    # Optional bf16 writeback path (mainly a v5e bandwidth win); shape / range
    # check only -- downstream numerics change, so it is not the default.
    out_bf16 = jax.block_until_ready(
        static_peak_encoder(x, params, out_dtype=jnp.bfloat16)
    )
    assert out_bf16.shape == (n_spectra, n_peaks, d_model)
    out_bf16_np = np.asarray(out_bf16, dtype=np.float32)
    assert np.isfinite(out_bf16_np).all()
    assert np.abs(out_bf16_np).max() <= 1.0 + 1e-2

    # Case 2: numeric parity against a faithful mirror of the PyTorch forward.
    # sin/cos of f32 angles ~1e7 (realistic m/z times the 0.001-wavelength
    # column) is ill-conditioned (ulp(angle) ~ 1), so exact comparison is done
    # at small input magnitudes where the reciprocal-multiply and
    # cos = sin(x + pi/2) rewrites are numerically indistinguishable.
    # n_rows = 300 is NOT a multiple of the row tile -> exercises the partial
    # final block (out-of-bounds writes dropped by Pallas).
    ns2, np2 = 3, 100
    x_small = jax.random.uniform(
        jax.random.PRNGKey(1), (ns2, np2, 2), minval=0.0, maxval=1e-4
    ).astype(jnp.float32)
    out_small = jax.block_until_ready(static_peak_encoder(x_small, params))
    ref_small = reference_static_peak_encoder(x_small, d_model)
    np.testing.assert_allclose(
        np.asarray(out_small), np.asarray(ref_small), rtol=0.0, atol=2e-3
    )

    # Case 3: padded fallback path still works and matches.
    out_pad = jax.block_until_ready(
        static_peak_encoder(x_small, params, use_partial_blocks=False)
    )
    np.testing.assert_allclose(
        np.asarray(out_pad), np.asarray(ref_small), rtol=0.0, atol=2e-3
    )

    print("KERNEL_OK")
</pallas_src>

<mosaic_0001>
module attributes {stable_mosaic.version = 11 : i64} {
  func.func @_peak_encoder_kernel(%arg0: i32, %arg1: memref<1024x2xf32, #tpu.memory_space<vmem>>, %arg2: memref<3x128xf32, #tpu.memory_space<vmem>>, %arg3: memref<1024x128xf32, #tpu.memory_space<vmem>>) attributes {dimension_semantics = [#tpu.dimension_semantics<parallel>], iteration_bounds = array<i64: 2>, scalar_prefetch = 0 : i64, scratch_operands = 0 : i64, tpu.core_type = #tpu.core_type<tc>, window_params = [{transform_indices = @transform_0, window_bounds = array<i64: 1024, 2>}, {pipeline_mode = #tpu.pipeline_mode<synchronous>, transform_indices = @transform_1, window_bounds = array<i64: 3, 128>}, {transform_indices = @transform_2, window_bounds = array<i64: 1024, 128>}]} {
    %c0 = arith.constant 0 : index
    %c0_0 = arith.constant 0 : index
    %0 = vector.load %arg2[%c0, %c0_0] : memref<3x128xf32, #tpu.memory_space<vmem>>, vector<3x128xf32>
    %1 = vector.extract_strided_slice %0 {offsets = [0, 0], sizes = [1, 128], strides = [1, 1]} : vector<3x128xf32> to vector<1x128xf32>
    %2 = vector.extract_strided_slice %0 {offsets = [1, 0], sizes = [1, 128], strides = [1, 1]} : vector<3x128xf32> to vector<1x128xf32>
    %3 = vector.extract_strided_slice %0 {offsets = [2, 0], sizes = [1, 128], strides = [1, 1]} : vector<3x128xf32> to vector<1x128xf32>
    %c0_i32 = arith.constant 0 : i32
    %c4_i32 = arith.constant 4 : i32
    %4 = arith.addi %c0_i32, %c4_i32 : i32
    %c1_i32 = arith.constant 1 : i32
    scf.for %arg4 = %c0_i32 to %4 step %c1_i32  : i32 {
      %c256_i32 = arith.constant 256 : i32
      %5 = arith.muli %arg4, %c256_i32 : i32
      %6 = tpu.assume_multiple %5, 256 : i32
      %7 = arith.index_cast %6 : i32 to index
      %c0_2 = arith.constant 0 : index
      %8 = vector.load %arg1[%7, %c0_2] : memref<1024x2xf32, #tpu.memory_space<vmem>>, vector<256x2xf32>
      %9 = vector.extract_strided_slice %8 {offsets = [0, 0], sizes = [256, 1], strides = [1, 1]} : vector<256x2xf32> to vector<256x1xf32>
      %10 = vector.broadcast %9 : vector<256x1xf32> to vector<256x128xf32>
      %11 = vector.broadcast %1 : vector<1x128xf32> to vector<256x128xf32>
      %12 = arith.mulf %10, %11 : vector<256x128xf32>
      %13 = vector.extract_strided_slice %8 {offsets = [0, 1], sizes = [256, 1], strides = [1, 1]} : vector<256x2xf32> to vector<256x1xf32>
      %14 = vector.broadcast %13 : vector<256x1xf32> to vector<256x128xf32>
      %15 = vector.broadcast %2 : vector<1x128xf32> to vector<256x128xf32>
      %16 = arith.mulf %14, %15 : vector<256x128xf32>
      %17 = arith.addf %12, %16 : vector<256x128xf32>
      %18 = vector.broadcast %3 : vector<1x128xf32> to vector<256x128xf32>
      %19 = arith.addf %17, %18 : vector<256x128xf32>
      %20 = math.sin %19 : vector<256x128xf32>
      %21 = arith.index_cast %6 : i32 to index
      %c0_3 = arith.constant 0 : index
      %22 = vector.load %arg3[%21, %c0_3] : memref<1024x128xf32, #tpu.memory_space<vmem>>, vector<256x128xf32>
      tpu.vector_store %arg3[%21, %c0_3], %20 {strides = array<i32>} : memref<1024x128xf32, #tpu.memory_space<vmem>>, vector<256x128xf32>,
    }
    %c4_i32_1 = arith.constant 4 : i32
    return
  }
  func.func @transform_0(%arg0: i32) -> (i32, i32) {
    %c0_i32 = arith.constant 0 : i32
    %c0_i32_0 = arith.constant 0 : i32
    return %arg0, %c0_i32 : i32, i32
  }
  func.func @transform_1(%arg0: i32) -> (i32, i32) {
    %c0_i32 = arith.constant 0 : i32
    %c0_i32_0 = arith.constant 0 : i32
    %c0_i32_1 = arith.constant 0 : i32
    return %c0_i32, %c0_i32_0 : i32, i32
  }
  func.func @transform_2(%arg0: i32) -> (i32, i32) {
    %c0_i32 = arith.constant 0 : i32
    %c0_i32_0 = arith.constant 0 : i32
    return %arg0, %c0_i32 : i32, i32
  }
}

</mosaic_0001>

<llo_original>
// kernel: tpu_custom_call.1
$region0: #{tpu_custom_call.1}
  #allocation0 [shape = 'u32[]', space=smem, size = 0x4, offset = 0x4, fixed_abs, tag = 'smem constant byte address 0x4 - core index']
  #allocation1 [shape = 'u32[72,128]{1,0:T(1,128)}', space=vmem, size = 0x9000, scoped, tag = 'internal scratch']
  %s0 = inlined_call_operand.vmem [shape: f32[2048,2], index: 0, kind: input, shape index: {}]
  %s1 = inlined_call_operand.vmem [shape: f32[3,128], index: 1, kind: input, shape index: {}]
  %s2 = inlined_call_operand.hbm [shape: f32[2048,128], index: 2, kind: output, shape index: {}]
  %s3 = sld [smem:[#allocation0]]
  $region48: #{tpu_custom_call.1} parent=0
    _
  %s5 = ssub.s32 1, %s3
  %s6 = scalar_select 0, %s5, %s3
  $region1: #{tpu_custom_call.1} parent=0
    #allocation2 [shape = 'u8[1048576]{0}', space=vmem, size = 0x100000, scoped, tag = 'output window, operand 0']
    #allocation3 [shape = 's32[2]{0}', space=sflag, size = 0x8, scoped, tag = 'scoped memory for tpu_custom_call.1']
    %7 = vsyncpa [#allocation3], 0
    %s8 = scalar_lea.sflag [#allocation3], 1
    %9 = vsyncpa %s8, 0
    loop: start=0, step=1, limit=4
    $region2: #{tpu_custom_call.1} parent=1 // loop_pre_header
      _
    $region3: #{tpu_custom_call.1} parent=1 // loop_header
      %s11 = sphi 0, %s15
      %p12 = scmp.ge.s32.totalorder %s11, 4
      %s21 = sphi 0, %s23
      %s24 = sphi 0, %s21
      %s25 = sphi 0, %s24
      %s41 = sphi 0, %s25
      %s45 = sphi 0, %s45
      %s47 = sphi 0, %s45
      %s48 = sphi 0, %s47
      %s62 = sphi 0, %s48
      %s68 = sphi 0, %s70
      %s71 = sphi 0, %s68
      %s72 = sphi 0, %s71
      %s88 = sphi 0, %s72
    $region4: #{tpu_custom_call.1} parent=1 // loop_header_branch
      %14 = sbr.rel (%p12) target = $region8
    $region5: #{tpu_custom_call.1} parent=1 // loop_body
      %s16 = ssub.s32 %s11, 1
      %s17 = ssub.s32 %s11, 2
      %s18 = sadd.s32 %s11, 1
      %s19 = ssub.s32 %s11, %s18
      %p20 = scmp.eq.s32.totalorder %s19, 0
      %s22 = sadd.s32 %s21, 1
      %s23 = scalar_select %p20, %s21, %s22
      %p26 = pneg %p20
      %p27 = scmp.eq.s32.totalorder %s11, 1
      %p28 = por %p26, %p27
      %p29 = scmp.ne.s32.totalorder %s21, %s24
      %p30 = scmp.eq.s32.totalorder %s11, 0
      %p31 = por %p29, %p30
      %p32 = scmp.ne.s32.totalorder %s21, %s24
      %p33 = scmp.eq.s32.totalorder %s16, 1
      %p34 = por %p32, %p33
      %p35 = scmp.ne.s32.totalorder %s24, %s25
      %p36 = scmp.eq.s32.totalorder %s16, 0
      %p37 = por %p35, %p36
      %p38 = scmp.ne.s32.totalorder %s24, %s25
      %p39 = scmp.eq.s32.totalorder %s17, 1
      %p40 = por %p38, %p39
      %p42 = scmp.ne.s32.totalorder %s25, %s41
      %p43 = scmp.eq.s32.totalorder %s17, 0
      %p44 = por %p42, %p43
      %s46 = sadd.s32 %s45, 1
      %p49 = scmp.eq.s32.totalorder %s11, 1
      %p50 = scmp.ne.s32.totalorder %s45, %s47
      %p51 = scmp.eq.s32.totalorder %s11, 0
      %p52 = por %p50, %p51
      %p53 = scmp.ne.s32.totalorder %s45, %s47
      %p54 = scmp.eq.s32.totalorder %s16, 1
      %p55 = por %p53, %p54
      %p56 = scmp.ne.s32.totalorder %s47, %s48
      %p57 = scmp.eq.s32.totalorder %s16, 0
      %p58 = por %p56, %p57
      %p59 = scmp.ne.s32.totalorder %s47, %s48
      %p60 = scmp.eq.s32.totalorder %s17, 1
      %p61 = por %p59, %p60
      %p63 = scmp.ne.s32.totalorder %s48, %s62
      %p64 = scmp.eq.s32.totalorder %s17, 0
      %p65 = por %p63, %p64
      %s66 = ssub.s32 %s11, %s18
      %p67 = scmp.eq.s32.totalorder %s66, 0
      %s69 = sadd.s32 %s68, 1
      %s70 = scalar_select %p67, %s68, %s69
      %p73 = pneg %p67
      %p74 = scmp.eq.s32.totalorder %s11, 1
      %p75 = por %p73, %p74
      %p76 = scmp.ne.s32.totalorder %s68, %s71
      %p77 = scmp.eq.s32.totalorder %s11, 0
      %p78 = por %p76, %p77
      %p79 = scmp.ne.s32.totalorder %s68, %s71
      %p80 = scmp.eq.s32.totalorder %s16, 1
      %p81 = por %p79, %p80
      %p82 = scmp.ne.s32.totalorder %s71, %s72
      %p83 = scmp.eq.s32.totalorder %s16, 0
      %p84 = por %p82, %p83
      %p85 = scmp.ne.s32.totalorder %s71, %s72
      %p86 = scmp.eq.s32.totalorder %s17, 1
      %p87 = por %p85, %p86
      %p89 = scmp.ne.s32.totalorder %s72, %s88
      %p90 = scmp.eq.s32.totalorder %s17, 0
      %p91 = por %p89, %p90
      %p92 = scmp.le.s32.totalorder 1, %s11
      %p93 = scmp.lt.s32.totalorder %s11, 3
      %p94 = pnand %p92, %p93
      %p95 = pneg %p94
      // Predicated region
      $region9: #{tpu_custom_call.1} parent=5 // pred_check
        _
      $region10: #{tpu_custom_call.1} parent=5 // pred_check_branch
        %97 = sbr.rel (%p94) target = $region12
      $region11: #{tpu_custom_call.1} parent=5 // pred_region
        %s98 = ssub.s32 %s11, 1
        // Predicated region
        $region13: #{tpu_custom_call.1} parent=11 // pred_check
          %p99 = pneg %p58
        $region14: #{tpu_custom_call.1} parent=11 // pred_check_branch
          %101 = sbr.rel (%p99) target = $region16
        $region15: #{tpu_custom_call.1} parent=11 // pred_region
          _
        $region16: #{tpu_custom_call.1} parent=11 // pred_fallthru
          _
      $region12: #{tpu_custom_call.1} parent=5 // pred_fallthru
        _
      %p102 = scmp.lt.s32.totalorder %s11, 2
      // Predicated region
      $region17: #{tpu_custom_call.1} parent=5 // pred_check
        %p103 = pneg %p102
      $region18: #{tpu_custom_call.1} parent=5 // pred_check_branch
        %105 = sbr.rel (%p103) target = $region20
      $region19: #{tpu_custom_call.1} parent=5 // pred_region
        // Predicated region
        $region21: #{tpu_custom_call.1} parent=19 // pred_check
          %p106 = pneg %p31
        $region22: #{tpu_custom_call.1} parent=19 // pred_check_branch
          %108 = sbr.rel (%p106) target = $region24
        $region23: #{tpu_custom_call.1} parent=19 // pred_region
          %s109 = smul.u32 128, %s11
          %p110 = scmp.lt.s32.totalorder %s109, 255
          %s111 = scalar_select %p110, %s109, 255
          %s112 = smul.addr %s111, 8
          %s113 = scalar_lea.vmem %s0, %s112
          %s114 = smul.u32 128, %s11
        $region24: #{tpu_custom_call.1} parent=19 // pred_fallthru
          _
      $region20: #{tpu_custom_call.1} parent=5 // pred_fallthru
        _
      %p115 = scmp.le.s32.totalorder 1, %s11
      %p116 = scmp.lt.s32.totalorder %s11, 3
      %p117 = pnand %p115, %p116
      %p118 = pneg %p117
      // Predicated region
      $region25: #{tpu_custom_call.1} parent=5 // pred_check
        _
      $region26: #{tpu_custom_call.1} parent=5 // pred_check_branch
        %120 = sbr.rel (%p117) target = $region28
      $region27: #{tpu_custom_call.1} parent=5 // pred_region
        %s121 = ssub.s32 %s11, 1
        %s122 = smul.u32 128, %s16
        %p123 = scmp.lt.s32.totalorder %s122, 255
        %s124 = scalar_select %p123, %s122, 255
        %s125 = smul.addr %s124, 8
        %s126 = scalar_lea.vmem %s0, %s125
        %p127 = pneg %p37
        %p128 = pneg %p34
        %p129 = pneg %p58
        %p130 = pneg %p55
        %p131 = pneg %p84
        %p132 = pneg %p81
        %s133 = sand.u32 %s71, 1
        %s134 = scalar_lea.sflag [#allocation3], %s133
        %s135 = sand.u32 %s71, 1
        %s136 = smul.addr %s135, 1024
        %s137 = scalar_lea.vmem [#allocation2], %s136
        %s138 = smul.u32 128, %s16
        %p139 = scmp.lt.s32.totalorder %s138, 255
        %s140 = scalar_select %p139, %s138, 255
        %s141 = smul.addr %s140, 8
        %s142 = scalar_lea.vmem %s0, %s141
        %s143 = smul.u32 128, %s16
        %s144 = smul.u32 128, %s16
        %v145 = vld [vmem:[%s1] sm:$0x7]
        loop: start=0, step=1, limit=4
        $region29: #{tpu_custom_call.1} parent=27 // loop_pre_header
          _
        $region30: #{tpu_custom_call.1} parent=27 // loop_header
          %s147 = sphi 0, %s151
          %p148 = scmp.ge.s32.totalorder %s147, 4
        $region31: #{tpu_custom_call.1} parent=27 // loop_header_branch
          %150 = sbr.rel (%p148) target = $region35
        $region32: #{tpu_custom_call.1} parent=27 // loop_body
          %s152 = smul.u32 %s147, 256
          %s153 = scalar_lea.vmem %s142, %s152
          %v154 = vld [vmem:[%s153] sm:$0xff]
          %v155 = vld [vmem:[%s153 + $0x8] sm:$0xff]
          %v156 = vld [vmem:[%s153 + $0x10] sm:$0xff]
          %v157 = vld [vmem:[%s153 + $0x18] sm:$0xff]
          %v158 = vld [vmem:[%s153 + $0x20] sm:$0xff]
          %v159 = vld [vmem:[%s153 + $0x28] sm:$0xff]
          %v160 = vld [vmem:[%s153 + $0x30] sm:$0xff]
          %v161 = vld [vmem:[%s153 + $0x38] sm:$0xff]
          %v162 = vld [vmem:[%s153 + $0x40] sm:$0xff]
          %v163 = vld [vmem:[%s153 + $0x48] sm:$0xff]
          %v164 = vld [vmem:[%s153 + $0x50] sm:$0xff]
          %v165 = vld [vmem:[%s153 + $0x58] sm:$0xff]
          %v166 = vld [vmem:[%s153 + $0x60] sm:$0xff]
          %v167 = vld [vmem:[%s153 + $0x68] sm:$0xff]
          %v168 = vld [vmem:[%s153 + $0x70] sm:$0xff]
          %v169 = vld [vmem:[%s153 + $0x78] sm:$0xff]
          %v170 = vld [vmem:[%s153 + $0x80] sm:$0xff]
          %v171 = vld [vmem:[%s153 + $0x88] sm:$0xff]
          %v172 = vld [vmem:[%s153 + $0x90] sm:$0xff]
          %v173 = vld [vmem:[%s153 + $0x98] sm:$0xff]
          %v174 = vld [vmem:[%s153 + $0xa0] sm:$0xff]
          %v175 = vld [vmem:[%s153 + $0xa8] sm:$0xff]
          %v176 = vld [vmem:[%s153 + $0xb0] sm:$0xff]
          %v177 = vld [vmem:[%s153 + $0xb8] sm:$0xff]
          %v178 = vld [vmem:[%s153 + $0xc0] sm:$0xff]
          %v179 = vld [vmem:[%s153 + $0xc8] sm:$0xff]
          %v180 = vld [vmem:[%s153 + $0xd0] sm:$0xff]
          %v181 = vld [vmem:[%s153 + $0xd8] sm:$0xff]
          %v182 = vld [vmem:[%s153 + $0xe0] sm:$0xff]
          %v183 = vld [vmem:[%s153 + $0xe8] sm:$0xff]
          %v184 = vld [vmem:[%s153 + $0xf0] sm:$0xff]
          %v185 = vld [vmem:[%s153 + $0xf8] sm:$0xff]
          %187 = vset.pattern.permute.xlu0 0
          %188 = vperm.xlu0 %187, %v154
          %v189 = vpop.permute.xlu0 %188
          %192 = vset.pattern.permute.xlu0 0
          %193 = vperm.xlu0 %192, %v155
          %v194 = vpop.permute.xlu0 %193
          %197 = vset.pattern.permute.xlu0 0
          %198 = vperm.xlu0 %197, %v156
          %v199 = vpop.permute.xlu0 %198
          %202 = vset.pattern.permute.xlu0 0
          %203 = vperm.xlu0 %202, %v157
          %v204 = vpop.permute.xlu0 %203
          %207 = vset.pattern.permute.xlu0 0
          %208 = vperm.xlu0 %207, %v158
          %v209 = vpop.permute.xlu0 %208
          %212 = vset.pattern.permute.xlu0 0
          %213 = vperm.xlu0 %212, %v159
          %v214 = vpop.permute.xlu0 %213
          %217 = vset.pattern.permute.xlu0 0
          %218 = vperm.xlu0 %217, %v160
          %v219 = vpop.permute.xlu0 %218
          %222 = vset.pattern.permute.xlu0 0
          %223 = vperm.xlu0 %222, %v161
          %v224 = vpop.permute.xlu0 %223
          %227 = vset.pattern.permute.xlu0 0
          %228 = vperm.xlu0 %227, %v162
          %v229 = vpop.permute.xlu0 %228
          %232 = vset.pattern.permute.xlu0 0
          %233 = vperm.xlu0 %232, %v163
          %v234 = vpop.permute.xlu0 %233
          %237 = vset.pattern.permute.xlu0 0
          %238 = vperm.xlu0 %237, %v164
          %v239 = vpop.permute.xlu0 %238
          %242 = vset.pattern.permute.xlu0 0
          %243 = vperm.xlu0 %242, %v165
          %v244 = vpop.permute.xlu0 %243
          %247 = vset.pattern.permute.xlu0 0
          %248 = vperm.xlu0 %247, %v166
          %v249 = vpop.permute.xlu0 %248
          %252 = vset.pattern.permute.xlu0 0
          %253 = vperm.xlu0 %252, %v167
          %v254 = vpop.permute.xlu0 %253
          %257 = vset.pattern.permute.xlu0 0
          %258 = vperm.xlu0 %257, %v168
          %v259 = vpop.permute.xlu0 %258
          %262 = vset.pattern.permute.xlu0 0
          %263 = vperm.xlu0 %262, %v169
          %v264 = vpop.permute.xlu0 %263
          %267 = vset.pattern.permute.xlu0 0
          %268 = vperm.xlu0 %267, %v170
          %v269 = vpop.permute.xlu0 %268
          %272 = vset.pattern.permute.xlu0 0
          %273 = vperm.xlu0 %272, %v171
          %v274 = vpop.permute.xlu0 %273
          %277 = vset.pattern.permute.xlu0 0
          %278 = vperm.xlu0 %277, %v172
          %v279 = vpop.permute.xlu0 %278
          %282 = vset.pattern.permute.xlu0 0
          %283 = vperm.xlu0 %282, %v173
          %v284 = vpop.permute.xlu0 %283
          %287 = vset.pattern.permute.xlu0 0
          %288 = vperm.xlu0 %287, %v174
          %v289 = vpop.permute.xlu0 %288
          %292 = vset.pattern.permute.xlu0 0
          %293 = vperm.xlu0 %292, %v175
          %v294 = vpop.permute.xlu0 %293
          %297 = vset.pattern.permute.xlu0 0
          %298 = vperm.xlu0 %297, %v176
          %v299 = vpop.permute.xlu0 %298
          %302 = vset.pattern.permute.xlu0 0
          %303 = vperm.xlu0 %302, %v177
          %v304 = vpop.permute.xlu0 %303
          %307 = vset.pattern.permute.xlu0 0
          %308 = vperm.xlu0 %307, %v178
          %v309 = vpop.permute.xlu0 %308
          %312 = vset.pattern.permute.xlu0 0
          %313 = vperm.xlu0 %312, %v179
          %v314 = vpop.permute.xlu0 %313
          %317 = vset.pattern.permute.xlu0 0
          %318 = vperm.xlu0 %317, %v180
          %v319 = vpop.permute.xlu0 %318
          %322 = vset.pattern.permute.xlu0 0
          %323 = vperm.xlu0 %322, %v181
          %v324 = vpop.permute.xlu0 %323
          %327 = vset.pattern.permute.xlu0 0
          %328 = vperm.xlu0 %327, %v182
          %v329 = vpop.permute.xlu0 %328
          %332 = vset.pattern.permute.xlu0 0
          %333 = vperm.xlu0 %332, %v183
          %v334 = vpop.permute.xlu0 %333
          %337 = vset.pattern.permute.xlu0 0
          %338 = vperm.xlu0 %337, %v184
          %v339 = vpop.permute.xlu0 %338
          %342 = vset.pattern.permute.xlu0 0
          %343 = vperm.xlu0 %342, %v185
          %v344 = vpop.permute.xlu0 %343
          %v346 = vperm.slane %v145, 0
          %v347 = vmul.f32 %v189, %v346
          %v348 = vmul.f32 %v194, %v346
          %v349 = vmul.f32 %v199, %v346
          %v350 = vmul.f32 %v204, %v346
          %v351 = vmul.f32 %v209, %v346
          %v352 = vmul.f32 %v214, %v346
          %v353 = vmul.f32 %v219, %v346
          %v354 = vmul.f32 %v224, %v346
          %v355 = vmul.f32 %v229, %v346
          %v356 = vmul.f32 %v234, %v346
          %v357 = vmul.f32 %v239, %v346
          %v358 = vmul.f32 %v244, %v346
          %v359 = vmul.f32 %v249, %v346
          %v360 = vmul.f32 %v254, %v346
          %v361 = vmul.f32 %v259, %v346
          %v362 = vmul.f32 %v264, %v346
          %v363 = vmul.f32 %v269, %v346
          %v364 = vmul.f32 %v274, %v346
          %v365 = vmul.f32 %v279, %v346
          %v366 = vmul.f32 %v284, %v346
          %v367 = vmul.f32 %v289, %v346
          %v368 = vmul.f32 %v294, %v346
          %v369 = vmul.f32 %v299, %v346
          %v370 = vmul.f32 %v304, %v346
          %v371 = vmul.f32 %v309, %v346
          %v372 = vmul.f32 %v314, %v346
          %v373 = vmul.f32 %v319, %v346
          %v374 = vmul.f32 %v324, %v346
          %v375 = vmul.f32 %v329, %v346
          %v376 = vmul.f32 %v334, %v346
          %v377 = vmul.f32 %v339, %v346
          %v378 = vmul.f32 %v344, %v346
          %379 = vset.pattern.permute.xlu0 1
          %380 = vperm.xlu0 %379, %v154
          %v381 = vpop.permute.xlu0 %380
          %383 = vset.pattern.permute.xlu0 1
          %384 = vperm.xlu0 %383, %v155
          %v385 = vpop.permute.xlu0 %384
          %387 = vset.pattern.permute.xlu0 1
          %388 = vperm.xlu0 %387, %v156
          %v389 = vpop.permute.xlu0 %388
          %391 = vset.pattern.permute.xlu0 1
          %392 = vperm.xlu0 %391, %v157
          %v393 = vpop.permute.xlu0 %392
          %395 = vset.pattern.permute.xlu0 1
          %396 = vperm.xlu0 %395, %v158
          %v397 = vpop.permute.xlu0 %396
          %399 = vset.pattern.permute.xlu0 1
          %400 = vperm.xlu0 %399, %v159
          %v401 = vpop.permute.xlu0 %400
          %403 = vset.pattern.permute.xlu0 1
          %404 = vperm.xlu0 %403, %v160
          %v405 = vpop.permute.xlu0 %404
          %407 = vset.pattern.permute.xlu0 1
          %408 = vperm.xlu0 %407, %v161
          %v409 = vpop.permute.xlu0 %408
          %411 = vset.pattern.permute.xlu0 1
          %412 = vperm.xlu0 %411, %v162
          %v413 = vpop.permute.xlu0 %412
          %415 = vset.pattern.permute.xlu0 1
          %416 = vperm.xlu0 %415, %v163
          %v417 = vpop.permute.xlu0 %416
          %419 = vset.pattern.permute.xlu0 1
          %420 = vperm.xlu0 %419, %v164
          %v421 = vpop.permute.xlu0 %420
          %423 = vset.pattern.permute.xlu0 1
          %424 = vperm.xlu0 %423, %v165
          %v425 = vpop.permute.xlu0 %424
          %427 = vset.pattern.permute.xlu0 1
          %428 = vperm.xlu0 %427, %v166
          %v429 = vpop.permute.xlu0 %428
          %431 = vset.pattern.permute.xlu0 1
          %432 = vperm.xlu0 %431, %v167
          %v433 = vpop.permute.xlu0 %432
          %435 = vset.pattern.permute.xlu0 1
          %436 = vperm.xlu0 %435, %v168
          %v437 = vpop.permute.xlu0 %436
          %439 = vset.pattern.permute.xlu0 1
          %440 = vperm.xlu0 %439, %v169
          %v441 = vpop.permute.xlu0 %440
          %443 = vset.pattern.permute.xlu0 1
          %444 = vperm.xlu0 %443, %v170
          %v445 = vpop.permute.xlu0 %444
          %447 = vset.pattern.permute.xlu0 1
          %448 = vperm.xlu0 %447, %v171
          %v449 = vpop.permute.xlu0 %448
          %451 = vset.pattern.permute.xlu0 1
          %452 = vperm.xlu0 %451, %v172
          %v453 = vpop.permute.xlu0 %452
          %455 = vset.pattern.permute.xlu0 1
          %456 = vperm.xlu0 %455, %v173
          %v457 = vpop.permute.xlu0 %456
          %459 = vset.pattern.permute.xlu0 1
          %460 = vperm.xlu0 %459, %v174
          %v461 = vpop.permute.xlu0 %460
          %463 = vset.pattern.permute.xlu0 1
          %464 = vperm.xlu0 %463, %v175
          %v465 = vpop.permute.xlu0 %464
          %467 = vset.pattern.permute.xlu0 1
          %468 = vperm.xlu0 %467, %v176
          %v469 = vpop.permute.xlu0 %468
          %471 = vset.pattern.permute.xlu0 1
          %472 = vperm.xlu0 %471, %v177
          %v473 = vpop.permute.xlu0 %472
          %475 = vset.pattern.permute.xlu0 1
          %476 = vperm.xlu0 %475, %v178
          %v477 = vpop.permute.xlu0 %476
          %479 = vset.pattern.permute.xlu0 1
          %480 = vperm.xlu0 %479, %v179
          %v481 = vpop.permute.xlu0 %480
          %483 = vset.pattern.permute.xlu0 1
          %484 = vperm.xlu0 %483, %v180
          %v485 = vpop.permute.xlu0 %484
          %487 = vset.pattern.permute.xlu0 1
          %488 = vperm.xlu0 %487, %v181
          %v489 = vpop.permute.xlu0 %488
          %491 = vset.pattern.permute.xlu0 1
          %492 = vperm.xlu0 %491, %v182
          %v493 = vpop.permute.xlu0 %492
          %495 = vset.pattern.permute.xlu0 1
          %496 = vperm.xlu0 %495, %v183
          %v497 = vpop.permute.xlu0 %496
          %499 = vset.pattern.permute.xlu0 1
          %500 = vperm.xlu0 %499, %v184
          %v501 = vpop.permute.xlu0 %500
          %503 = vset.pattern.permute.xlu0 1
          %504 = vperm.xlu0 %503, %v185
          %v505 = vpop.permute.xlu0 %504
          %v507 = vperm.slane %v145, 1
          %v508 = vmul.f32 %v381, %v507
          %v509 = vmul.f32 %v385, %v507
          %v510 = vmul.f32 %v389, %v507
          %v511 = vmul.f32 %v393, %v507
          %v512 = vmul.f32 %v397, %v507
          %v513 = vmul.f32 %v401, %v507
          %v514 = vmul.f32 %v405, %v507
          %v515 = vmul.f32 %v409, %v507
          %v516 = vmul.f32 %v413, %v507
          %v517 = vmul.f32 %v417, %v507
          %v518 = vmul.f32 %v421, %v507
          %v519 = vmul.f32 %v425, %v507
          %v520 = vmul.f32 %v429, %v507
          %v521 = vmul.f32 %v433, %v507
          %v522 = vmul.f32 %v437, %v507
          %v523 = vmul.f32 %v441, %v507
          %v524 = vmul.f32 %v445, %v507
          %v525 = vmul.f32 %v449, %v507
          %v526 = vmul.f32 %v453, %v507
          %v527 = vmul.f32 %v457, %v507
          %v528 = vmul.f32 %v461, %v507
          %v529 = vmul.f32 %v465, %v507
          %v530 = vmul.f32 %v469, %v507
          %v531 = vmul.f32 %v473, %v507
          %v532 = vmul.f32 %v477, %v507
          %v533 = vmul.f32 %v481, %v507
          %v534 = vmul.f32 %v485, %v507
          %v535 = vmul.f32 %v489, %v507
          %v536 = vmul.f32 %v493, %v507
          %v537 = vmul.f32 %v497, %v507
          %v538 = vmul.f32 %v501, %v507
          %v539 = vmul.f32 %v505, %v507
          %v540 = vadd.f32 %v347, %v508
          %v541 = vadd.f32 %v348, %v509
          %v542 = vadd.f32 %v349, %v510
          %v543 = vadd.f32 %v350, %v511
          %v544 = vadd.f32 %v351, %v512
          %v545 = vadd.f32 %v352, %v513
          %v546 = vadd.f32 %v353, %v514
          %v547 = vadd.f32 %v354, %v515
          %v548 = vadd.f32 %v355, %v516
          %v549 = vadd.f32 %v356, %v517
          %v550 = vadd.f32 %v357, %v518
          %v551 = vadd.f32 %v358, %v519
          %v552 = vadd.f32 %v359, %v520
          %v553 = vadd.f32 %v360, %v521
          %v554 = vadd.f32 %v361, %v522
          %v555 = vadd.f32 %v362, %v523
          %v556 = vadd.f32 %v363, %v524
          %v557 = vadd.f32 %v364, %v525
          %v558 = vadd.f32 %v365, %v526
          %v559 = vadd.f32 %v366, %v527
          %v560 = vadd.f32 %v367, %v528
          %v561 = vadd.f32 %v368, %v529
          %v562 = vadd.f32 %v369, %v530
          %v563 = vadd.f32 %v370, %v531
          %v564 = vadd.f32 %v371, %v532
          %v565 = vadd.f32 %v372, %v533
          %v566 = vadd.f32 %v373, %v534
          %v567 = vadd.f32 %v374, %v535
          %v568 = vadd.f32 %v375, %v536
          %v569 = vadd.f32 %v376, %v537
          %v570 = vadd.f32 %v377, %v538
          %v571 = vadd.f32 %v378, %v539
          %v572 = vperm.slane %v145, 2
          %v573 = vadd.f32 %v540, %v572
          %v574 = vadd.f32 %v541, %v572
          %v575 = vadd.f32 %v542, %v572
          %v576 = vadd.f32 %v543, %v572
          %v577 = vadd.f32 %v544, %v572
          %v578 = vadd.f32 %v545, %v572
          %v579 = vadd.f32 %v546, %v572
          %v580 = vadd.f32 %v547, %v572
          %v581 = vadd.f32 %v548, %v572
          %v582 = vadd.f32 %v549, %v572
          %v583 = vadd.f32 %v550, %v572
          %v584 = vadd.f32 %v551, %v572
          %v585 = vadd.f32 %v552, %v572
          %v586 = vadd.f32 %v553, %v572
          %v587 = vadd.f32 %v554, %v572
          %v588 = vadd.f32 %v555, %v572
          %v589 = vadd.f32 %v556, %v572
          %v590 = vadd.f32 %v557, %v572
          %v591 = vadd.f32 %v558, %v572
          %v592 = vadd.f32 %v559, %v572
          %v593 = vadd.f32 %v560, %v572
          %v594 = vadd.f32 %v561, %v572
          %v595 = vadd.f32 %v562, %v572
          %v596 = vadd.f32 %v563, %v572
          %v597 = vadd.f32 %v564, %v572
          %v598 = vadd.f32 %v565, %v572
          %v599 = vadd.f32 %v566, %v572
          %v600 = vadd.f32 %v567, %v572
          %v601 = vadd.f32 %v568, %v572
          %v602 = vadd.f32 %v569, %v572
          %v603 = vadd.f32 %v570, %v572
          %v604 = vadd.f32 %v571, %v572
          %v605 = vand.u32 2147483647, %v573
          %vm606 = vcmp.le.f32.partialorder %v605, 0.7853982
          %vm607 = vcmp.lt.s32.totalorder %v573, 0
          %v608 = vand.u32 %v573, 2139095040
          %v609 = vshrl.u32 %v608, 23
          %v610 = vsub.s32 %v609, 127
          %v611 = vand.u32 2147483647, %v573
          %v612 = vand.u32 %v611, 8388607
          %v613 = vor.u32 %v612, 8388608
          %v614 = vsub.s32 0, %v613
          %v615 = vadd.s32 %v610, 1
          %vm616 = vcmp.gt.s32.totalorder %v615, 0
          %v617 = vsel %vm616, %v615, 0
          %v618 = vshrl.u32 %v617, 5
          %v619 = vand.u32 %v617, 31
          %v620 = vsub.s32 32, %v619
          %v621 = vshrl.u32 683565275, %v620
          %v622 = vshll.u32 683565275, %v619
          %v623 = vshrl.u32 2475754826, %v620
          %v624 = vor.u32 %v622, %v623
          %v625 = vshll.u32 2475754826, %v619
          %v626 = vshrl.u32 2131351028, %v620
          %v627 = vor.u32 %v625, %v626
          %v628 = vshll.u32 2131351028, %v619
          %v629 = vshrl.u32 2102212464, %v620
          %v630 = vor.u32 %v628, %v629
          %v631 = vshll.u32 2102212464, %v619
          %v632 = vshrl.u32 920167782, %v620
          %v633 = vor.u32 %v631, %v632
          %v634 = vshll.u32 920167782, %v619
          %v635 = vshrl.u32 1326507024, %v620
          %v636 = vor.u32 %v634, %v635
          %vm637 = vcmp.lt.s32.totalorder %v618, 1
          %vm638 = vcmp.lt.s32.totalorder %v618, 2
          %vm639 = vcmp.lt.s32.totalorder %v618, 3
          %vm640 = vcmp.lt.s32.totalorder %v618, 4
          %v641 = vsel %vm637, %v621, %v624
          %v642 = vsel %vm640, %v630, 2102212464
          %v643 = vsel %vm639, %v627, %v642
          %v644 = vsel %vm638, %v641, %v643
          %v645 = vsel %vm637, %v624, %v627
          %v646 = vsel %vm640, %v633, 920167782
          %v647 = vsel %vm639, %v630, %v646
          %v648 = vsel %vm638, %v645, %v647
          %v649 = vsel %vm637, %v627, %v630
          %v650 = vsel %vm640, %v636, 1326507024
          %v651 = vsel %vm639, %v633, %v650
          %v652 = vsel %vm638, %v649, %v651
          %v653 = vshll.u32 %v613, 8
          %v654 = vand.u32 %v653, 65535
          %v655 = vshrl.u32 %v653, 16
          %v656 = vand.u32 %v652, 65535
          %v657 = vshrl.u32 %v652, 16
          %v658 = vmul.u32 %v654, %v656
          %v659 = vmul.u32 %v654, %v657
          %v660 = vmul.u32 %v655, %v656
          %v661 = vmul.u32 %v655, %v657
          %v662 = vshll.u32 %v659, 16
          %v663 = vshrl.u32 %v659, 16
          %v664 = vshll.u32 %v660, 16
          %v665 = vshrl.u32 %v660, 16
          %vm666 = vc.u32 %v658, %v662
          %v667 = vsel %vm666, 1, 0
          %v668 = vadd.s32 %v658, %v662
          %v669 = vadd.s32 %v661, %v667
          %vm670 = vc.u32 %v668, %v664
          %v671 = vsel %vm670, 1, 0
          %v672 = vadd.s32 %v668, %v664
          %v673 = vadd.s32 %v669, %v671
          %v674 = vadd.s32 %v673, %v663
          %v675 = vadd.s32 %v674, %v665
          %v676 = vand.u32 %v653, 65535
          %v677 = vshrl.u32 %v653, 16
          %v678 = vand.u32 %v648, 65535
          %v679 = vshrl.u32 %v648, 16
          %v680 = vmul.u32 %v676, %v678
          %v681 = vmul.u32 %v676, %v679
          %v682 = vmul.u32 %v677, %v678
          %v683 = vmul.u32 %v677, %v679
          %v684 = vshll.u32 %v681, 16
          %v685 = vshrl.u32 %v681, 16
          %v686 = vshll.u32 %v682, 16
          %v687 = vshrl.u32 %v682, 16
          %vm688 = vc.u32 %v680, %v684
          %v689 = vsel %vm688, 1, 0
          %v690 = vadd.s32 %v680, %v684
          %v691 = vadd.s32 %v683, %v689
          %vm692 = vc.u32 %v690, %v686
          %v693 = vsel %vm692, 1, 0
          %v694 = vadd.s32 %v690, %v686
          %v695 = vadd.s32 %v691, %v693
          %v696 = vadd.s32 %v695, %v685
          %v697 = vadd.s32 %v696, %v687
          %v698 = vmul.u32 %v653, %v644
          %v699 = vadd.s32 %v675, %v694
          %vm700 = vc.u32 %v675, %v694
          %v701 = vadd.s32 %v697, 1
          %v702 = vsel %vm700, %v701, %v697
          %v703 = vadd.s32 %v698, %v702
          %v704 = vadd.s32 %v703, 536870912
          %v705 = vshrl.u32 %v704, 30
          %v706 = vshll.u32 %v705, 30
          %v707 = vsub.s32 %v703, %v706
          %vm708 = vcmp.lt.s32.totalorder %v707, 0
          %v709 = vsub.s32 0, %v707
          %v710 = vsel %vm708, %v709, %v707
          %v711 = vclz %v710
          %v712 = vsub.s32 %v711, 2
          %vm713 = vcmp.gt.s32.totalorder 0, %v712
          %v714 = vsel %vm713, 0, %v712
          %v715 = vsub.s32 32, %v714
          %v716 = vshll.u32 %v707, %v714
          %v717 = vshrl.u32 %v699, %v715
          %v718 = vor.u32 %v716, %v717
          %v719 = vsub.s32 4294967266, %v714
          %v720 = vadd.s32 %v719, 127
          %v721 = vshll.u32 %v720, 23
          %v722 = vor.u32 4788187, %v721
          %v723 = vand.u32 2147483647, %v722
          %v725 = vcvt.s32.f32 %v718
          %v726 = vmul.f32 %v725, %v723
          %v727 = vxor.u32 %v726, 2147483648
          %v728 = vsel %vm607, %v727, %v726
          %v729 = vsub.s32 4, %v705
          %v730 = vsel %vm607, %v729, %v705
          %v731 = vsel %vm606, %v573, %v728
          %v732 = vsel %vm606, 0, %v730
          %v733 = vmul.f32 %v731, %v731
          %v734 = vmul.f32 %v733, -0.001358992
          %v735 = vadd.f32 %v734, 0.041655596
          %v736 = vmul.f32 %v733, %v735
          %v737 = vadd.f32 %v736, -0.4999988
          %v738 = vmul.f32 %v733, %v737
          %v739 = vadd.f32 1.0, %v738
          %v740 = vmul.f32 %v731, %v731
          %v741 = vmul.f32 %v740, -0.00019511016
          %v742 = vadd.f32 %v741, 0.008332121
          %v743 = vmul.f32 %v740, %v742
          %v744 = vadd.f32 %v743, -0.16666654
          %v745 = vmul.f32 %v740, %v744
          %v746 = vadd.f32 %v745, 1.0
          %v747 = vmul.f32 %v746, %v731
          %vm748 = vweird.f32 %v573
          %v749 = vadd.s32 %v732, 3
          %v750 = vand.u32 %v749, 3
          %vm751 = vcmp.lt.s32.totalorder %v750, 2
          %vm752 = vcmp.eq.s32.totalorder %v750, 0
          %v753 = vxor.u32 %v747, 2147483648
          %v754 = vsel %vm752, %v739, %v753
          %vm755 = vcmp.eq.s32.totalorder %v750, 2
          %v756 = vxor.u32 %v739, 2147483648
          %v757 = vsel %vm755, %v756, %v747
          %v758 = vsel %vm751, %v754, %v757
          %v759 = vsel %vm748, nan, %v758
          %v760 = vand.u32 2147483647, %v574
          %vm761 = vcmp.le.f32.partialorder %v760, 0.7853982
          %vm762 = vcmp.lt.s32.totalorder %v574, 0
          %v763 = vand.u32 %v574, 2139095040
          %v764 = vshrl.u32 %v763, 23
          %v765 = vsub.s32 %v764, 127
          %v766 = vand.u32 2147483647, %v574
          %v767 = vand.u32 %v766, 8388607
          %v768 = vor.u32 %v767, 8388608
          %v769 = vsub.s32 0, %v768
          %v770 = vadd.s32 %v765, 1
          %vm771 = vcmp.gt.s32.totalorder %v770, 0
          %v772 = vsel %vm771, %v770, 0
          %v773 = vshrl.u32 %v772, 5
          %v774 = vand.u32 %v772, 31
          %v775 = vsub.s32 32, %v774
          %v776 = vshrl.u32 683565275, %v775
          %v777 = vshll.u32 683565275, %v774
          %v778 = vshrl.u32 2475754826, %v775
          %v779 = vor.u32 %v777, %v778
          %v780 = vshll.u32 2475754826, %v774
          %v781 = vshrl.u32 2131351028, %v775
          %v782 = vor.u32 %v780, %v781
          %v783 = vshll.u32 2131351028, %v774
          %v784 = vshrl.u32 2102212464, %v775
          %v785 = vor.u32 %v783, %v784
          %v786 = vshll.u32 2102212464, %v774
          %v787 = vshrl.u32 920167782, %v775
          %v788 = vor.u32 %v786, %v787
          %v789 = vshll.u32 920167782, %v774
          %v790 = vshrl.u32 1326507024, %v775
          %v791 = vor.u32 %v789, %v790
          %vm792 = vcmp.lt.s32.totalorder %v773, 1
          %vm793 = vcmp.lt.s32.totalorder %v773, 2
          %vm794 = vcmp.lt.s32.totalorder %v773, 3
          %vm795 = vcmp.lt.s32.totalorder %v773, 4
          %v796 = vsel %vm792, %v776, %v779
          %v797 = vsel %vm795, %v785, 2102212464
          %v798 = vsel %vm794, %v782, %v797
          %v799 = vsel %vm793, %v796, %v798
          %v800 = vsel %vm792, %v779, %v782
          %v801 = vsel %vm795, %v788, 920167782
          %v802 = vsel %vm794, %v785, %v801
          %v803 = vsel %vm793, %v800, %v802
          %v804 = vsel %vm792, %v782, %v785
          %v805 = vsel %vm795, %v791, 1326507024
          %v806 = vsel %vm794, %v788, %v805
          %v807 = vsel %vm793, %v804, %v806
          %v808 = vshll.u32 %v768, 8
          %v809 = vand.u32 %v808, 65535
          %v810 = vshrl.u32 %v808, 16
          %v811 = vand.u32 %v807, 65535
          %v812 = vshrl.u32 %v807, 16
          %v813 = vmul.u32 %v809, %v811
          %v814 = vmul.u32 %v809, %v812
          %v815 = vmul.u32 %v810, %v811
          %v816 = vmul.u32 %v810, %v812
          %v817 = vshll.u32 %v814, 16
          %v818 = vshrl.u32 %v814, 16
          %v819 = vshll.u32 %v815, 16
          %v820 = vshrl.u32 %v815, 16
          %vm821 = vc.u32 %v813, %v817
          %v822 = vsel %vm821, 1, 0
          %v823 = vadd.s32 %v813, %v817
          %v824 = vadd.s32 %v816, %v822
          %vm825 = vc.u32 %v823, %v819
          %v826 = vsel %vm825, 1, 0
          %v827 = vadd.s32 %v823, %v819
          %v828 = vadd.s32 %v824, %v826
          %v829 = vadd.s32 %v828, %v818
          %v830 = vadd.s32 %v829, %v820
          %v831 = vand.u32 %v808, 65535
          %v832 = vshrl.u32 %v808, 16
          %v833 = vand.u32 %v803, 65535
          %v834 = vshrl.u32 %v803, 16
          %v835 = vmul.u32 %v831, %v833
          %v836 = vmul.u32 %v831, %v834
          %v837 = vmul.u32 %v832, %v833
          %v838 = vmul.u32 %v832, %v834
          %v839 = vshll.u32 %v836, 16
          %v840 = vshrl.u32 %v836, 16
          %v841 = vshll.u32 %v837, 16
          %v842 = vshrl.u32 %v837, 16
          %vm843 = vc.u32 %v835, %v839
          %v844 = vsel %vm843, 1, 0
          %v845 = vadd.s32 %v835, %v839
          %v846 = vadd.s32 %v838, %v844
          %vm847 = vc.u32 %v845, %v841
          %v848 = vsel %vm847, 1, 0
          %v849 = vadd.s32 %v845, %v841
          %v850 = vadd.s32 %v846, %v848
          %v851 = vadd.s32 %v850, %v840
          %v852 = vadd.s32 %v851, %v842
          %v853 = vmul.u32 %v808, %v799
          %v854 = vadd.s32 %v830, %v849
          %vm855 = vc.u32 %v830, %v849
          %v856 = vadd.s32 %v852, 1
          %v857 = vsel %vm855, %v856, %v852
          %v858 = vadd.s32 %v853, %v857
          %v859 = vadd.s32 %v858, 536870912
          %v860 = vshrl.u32 %v859, 30
          %v861 = vshll.u32 %v860, 30
          %v862 = vsub.s32 %v858, %v861
          %vm863 = vcmp.lt.s32.totalorder %v862, 0
          %v864 = vsub.s32 0, %v862
          %v865 = vsel %vm863, %v864, %v862
          %v866 = vclz %v865
          %v867 = vsub.s32 %v866, 2
          %vm868 = vcmp.gt.s32.totalorder 0, %v867
          %v869 = vsel %vm868, 0, %v867
          %v870 = vsub.s32 32, %v869
          %v871 = vshll.u32 %v862, %v869
          %v872 = vshrl.u32 %v854, %v870
          %v873 = vor.u32 %v871, %v872
          %v874 = vsub.s32 4294967266, %v869
          %v875 = vadd.s32 %v874, 127
          %v876 = vshll.u32 %v875, 23
          %v877 = vor.u32 4788187, %v876
          %v878 = vand.u32 2147483647, %v877
          %v880 = vcvt.s32.f32 %v873
          %v881 = vmul.f32 %v880, %v878
          %v882 = vxor.u32 %v881, 2147483648
          %v883 = vsel %vm762, %v882, %v881
          %v884 = vsub.s32 4, %v860
          %v885 = vsel %vm762, %v884, %v860
          %v886 = vsel %vm761, %v574, %v883
          %v887 = vsel %vm761, 0, %v885
          %v888 = vmul.f32 %v886, %v886
          %v889 = vmul.f32 %v888, -0.001358992
          %v890 = vadd.f32 %v889, 0.041655596
          %v891 = vmul.f32 %v888, %v890
          %v892 = vadd.f32 %v891, -0.4999988
          %v893 = vmul.f32 %v888, %v892
          %v894 = vadd.f32 1.0, %v893
          %v895 = vmul.f32 %v886, %v886
          %v896 = vmul.f32 %v895, -0.00019511016
          %v897 = vadd.f32 %v896, 0.008332121
          %v898 = vmul.f32 %v895, %v897
          %v899 = vadd.f32 %v898, -0.16666654
          %v900 = vmul.f32 %v895, %v899
          %v901 = vadd.f32 %v900, 1.0
          %v902 = vmul.f32 %v901, %v886
          %vm903 = vweird.f32 %v574
          %v904 = vadd.s32 %v887, 3
          %v905 = vand.u32 %v904, 3
          %vm906 = vcmp.lt.s32.totalorder %v905, 2
          %vm907 = vcmp.eq.s32.totalorder %v905, 0
          %v908 = vxor.u32 %v902, 2147483648
          %v909 = vsel %vm907, %v894, %v908
          %vm910 = vcmp.eq.s32.totalorder %v905, 2
          %v911 = vxor.u32 %v894, 2147483648
          %v912 = vsel %vm910, %v911, %v902
          %v913 = vsel %vm906, %v909, %v912
          %v914 = vsel %vm903, nan, %v913
          %v915 = vand.u32 2147483647, %v575
          %vm916 = vcmp.le.f32.partialorder %v915, 0.7853982
          %vm917 = vcmp.lt.s32.totalorder %v575, 0
          %v918 = vand.u32 %v575, 2139095040
          %v919 = vshrl.u32 %v918, 23
          %v920 = vsub.s32 %v919, 127
          %v921 = vand.u32 2147483647, %v575
          %v922 = vand.u32 %v921, 8388607
          %v923 = vor.u32 %v922, 8388608
          %v924 = vsub.s32 0, %v923
          %v925 = vadd.s32 %v920, 1
          %vm926 = vcmp.gt.s32.totalorder %v925, 0
          %v927 = vsel %vm926, %v925, 0
          %v928 = vshrl.u32 %v927, 5
          %v929 = vand.u32 %v927, 31
          %v930 = vsub.s32 32, %v929
          %v931 = vshrl.u32 683565275, %v930
          %v932 = vshll.u32 683565275, %v929
          %v933 = vshrl.u32 2475754826, %v930
          %v934 = vor.u32 %v932, %v933
          %v935 = vshll.u32 2475754826, %v929
          %v936 = vshrl.u32 2131351028, %v930
          %v937 = vor.u32 %v935, %v936
          %v938 = vshll.u32 2131351028, %v929
          %v939 = vshrl.u32 2102212464, %v930
          %v940 = vor.u32 %v938, %v939
          %v941 = vshll.u32 2102212464, %v929
          %v942 = vshrl.u32 920167782, %v930
          %v943 = vor.u32 %v941, %v942
          %v944 = vshll.u32 920167782, %v929
          %v945 = vshrl.u32 1326507024, %v930
          %v946 = vor.u32 %v944, %v945
          %vm947 = vcmp.lt.s32.totalorder %v928, 1
          %vm948 = vcmp.lt.s32.totalorder %v928, 2
          %vm949 = vcmp.lt.s32.totalorder %v928, 3
          %vm950 = vcmp.lt.s32.totalorder %v928, 4
          %v951 = vsel %vm947, %v931, %v934
          %v952 = vsel %vm950, %v940, 2102212464
          %v953 = vsel %vm949, %v937, %v952
          %v954 = vsel %vm948, %v951, %v953
          %v955 = vsel %vm947, %v934, %v937
          %v956 = vsel %vm950, %v943, 920167782
          %v957 = vsel %vm949, %v940, %v956
          %v958 = vsel %vm948, %v955, %v957
          %v959 = vsel %vm947, %v937, %v940
          %v960 = vsel %vm950, %v946, 1326507024
          %v961 = vsel %vm949, %v943, %v960
          %v962 = vsel %vm948, %v959, %v961
          %v963 = vshll.u32 %v923, 8
          %v964 = vand.u32 %v963, 65535
          %v965 = vshrl.u32 %v963, 16
          %v966 = vand.u32 %v962, 65535
          %v967 = vshrl.u32 %v962, 16
          %v968 = vmul.u32 %v964, %v966
          %v969 = vmul.u32 %v964, %v967
          %v970 = vmul.u32 %v965, %v966
          %v971 = vmul.u32 %v965, %v967
          %v972 = vshll.u32 %v969, 16
          %v973 = vshrl.u32 %v969, 16
          %v974 = vshll.u32 %v970, 16
          %v975 = vshrl.u32 %v970, 16
          %vm976 = vc.u32 %v968, %v972
          %v977 = vsel %vm976, 1, 0
          %v978 = vadd.s32 %v968, %v972
          %v979 = vadd.s32 %v971, %v977
          %vm980 = vc.u32 %v978, %v974
          %v981 = vsel %vm980, 1, 0
          %v982 = vadd.s32 %v978, %v974
          %v983 = vadd.s32 %v979, %v981
          %v984 = vadd.s32 %v983, %v973
          %v985 = vadd.s32 %v984, %v975
          %v986 = vand.u32 %v963, 65535
          %v987 = vshrl.u32 %v963, 16
          %v988 = vand.u32 %v958, 65535
          %v989 = vshrl.u32 %v958, 16
          %v990 = vmul.u32 %v986, %v988
          %v991 = vmul.u32 %v986, %v989
          %v992 = vmul.u32 %v987, %v988
          %v993 = vmul.u32 %v987, %v989
          %v994 = vshll.u32 %v991, 16
          %v995 = vshrl.u32 %v991, 16
          %v996 = vshll.u32 %v992, 16
          %v997 = vshrl.u32 %v992, 16
          %vm998 = vc.u32 %v990, %v994
          %v999 = vsel %vm998, 1, 0
          %v1000 = vadd.s32 %v990, %v994
          %v1001 = vadd.s32 %v993, %v999
          %vm1002 = vc.u32 %v1000, %v996
          %v1003 = vsel %vm1002, 1, 0
          %v1004 = vadd.s32 %v1000, %v996
          %v1005 = vadd.s32 %v1001, %v1003
          %v1006 = vadd.s32 %v1005, %v995
          %v1007 = vadd.s32 %v1006, %v997
          %v1008 = vmul.u32 %v963, %v954
          %v1009 = vadd.s32 %v985, %v1004
          %vm1010 = vc.u32 %v985, %v1004
          %v1011 = vadd.s32 %v1007, 1
          %v1012 = vsel %vm1010, %v1011, %v1007
          %v1013 = vadd.s32 %v1008, %v1012
          %v1014 = vadd.s32 %v1013, 536870912
          %v1015 = vshrl.u32 %v1014, 30
          %v1016 = vshll.u32 %v1015, 30
          %v1017 = vsub.s32 %v1013, %v1016
          %vm1018 = vcmp.lt.s32.totalorder %v1017, 0
          %v1019 = vsub.s32 0, %v1017
          %v1020 = vsel %vm1018, %v1019, %v1017
          %v1021 = vclz %v1020
          %v1022 = vsub.s32 %v1021, 2
          %vm1023 = vcmp.gt.s32.totalorder 0, %v1022
          %v1024 = vsel %vm1023, 0, %v1022
          %v1025 = vsub.s32 32, %v1024
          %v1026 = vshll.u32 %v1017, %v1024
          %v1027 = vshrl.u32 %v1009, %v1025
          %v1028 = vor.u32 %v1026, %v1027
          %v1029 = vsub.s32 4294967266, %v1024
          %v1030 = vadd.s32 %v1029, 127
          %v1031 = vshll.u32 %v1030, 23
          %v1032 = vor.u32 4788187, %v1031
          %v1033 = vand.u32 2147483647, %v1032
          %v1035 = vcvt.s32.f32 %v1028
          %v1036 = vmul.f32 %v1035, %v1033
          %v1037 = vxor.u32 %v1036, 2147483648
          %v1038 = vsel %vm917, %v1037, %v1036
          %v1039 = vsub.s32 4, %v1015
          %v1040 = vsel %vm917, %v1039, %v1015
          %v1041 = vsel %vm916, %v575, %v1038
          %v1042 = vsel %vm916, 0, %v1040
          %v1043 = vmul.f32 %v1041, %v1041
          %v1044 = vmul.f32 %v1043, -0.001358992
          %v1045 = vadd.f32 %v1044, 0.041655596
          %v1046 = vmul.f32 %v1043, %v1045
          %v1047 = vadd.f32 %v1046, -0.4999988
          %v1048 = vmul.f32 %v1043, %v1047
          %v1049 = vadd.f32 1.0, %v1048
          %v1050 = vmul.f32 %v1041, %v1041
          %v1051 = vmul.f32 %v1050, -0.00019511016
          %v1052 = vadd.f32 %v1051, 0.008332121
          %v1053 = vmul.f32 %v1050, %v1052
          %v1054 = vadd.f32 %v1053, -0.16666654
          %v1055 = vmul.f32 %v1050, %v1054
          %v1056 = vadd.f32 %v1055, 1.0
          %v1057 = vmul.f32 %v1056, %v1041
          %vm1058 = vweird.f32 %v575
          %v1059 = vadd.s32 %v1042, 3
          %v1060 = vand.u32 %v1059, 3
          %vm1061 = vcmp.lt.s32.totalorder %v1060, 2
          %vm1062 = vcmp.eq.s32.totalorder %v1060, 0
          %v1063 = vxor.u32 %v1057, 2147483648
          %v1064 = vsel %vm1062, %v1049, %v1063
          %vm1065 = vcmp.eq.s32.totalorder %v1060, 2
          %v1066 = vxor.u32 %v1049, 2147483648
          %v1067 = vsel %vm1065, %v1066, %v1057
          %v1068 = vsel %vm1061, %v1064, %v1067
          %v1069 = vsel %vm1058, nan, %v1068
          %v1070 = vand.u32 2147483647, %v576
          %vm1071 = vcmp.le.f32.partialorder %v1070, 0.7853982
          %vm1072 = vcmp.lt.s32.totalorder %v576, 0
          %v1073 = vand.u32 %v576, 2139095040
          %v1074 = vshrl.u32 %v1073, 23
          %v1075 = vsub.s32 %v1074, 127
          %v1076 = vand.u32 2147483647, %v576
          %v1077 = vand.u32 %v1076, 8388607
          %v1078 = vor.u32 %v1077, 8388608
          %v1079 = vsub.s32 0, %v1078
          %v1080 = vadd.s32 %v1075, 1
          %vm1081 = vcmp.gt.s32.totalorder %v1080, 0
          %v1082 = vsel %vm1081, %v1080, 0
          %v1083 = vshrl.u32 %v1082, 5
          %v1084 = vand.u32 %v1082, 31
          %v1085 = vsub.s32 32, %v1084
          %v1086 = vshrl.u32 683565275, %v1085
          %v1087 = vshll.u32 683565275, %v1084
          %v1088 = vshrl.u32 2475754826, %v1085
          %v1089 = vor.u32 %v1087, %v1088
          %v1090 = vshll.u32 2475754826, %v1084
          %v1091 = vshrl.u32 2131351028, %v1085
          %v1092 = vor.u32 %v1090, %v1091
          %v1093 = vshll.u32 2131351028, %v1084
          %v1094 = vshrl.u32 2102212464, %v1085
          %v1095 = vor.u32 %v1093, %v1094
          %v1096 = vshll.u32 2102212464, %v1084
          %v1097 = vshrl.u32 920167782, %v1085
          %v1098 = vor.u32 %v1096, %v1097
          %v1099 = vshll.u32 920167782, %v1084
          %v1100 = vshrl.u32 1326507024, %v1085
          %v1101 = vor.u32 %v1099, %v1100
          %vm1102 = vcmp.lt.s32.totalorder %v1083, 1
          %vm1103 = vcmp.lt.s32.totalorder %v1083, 2
          %vm1104 = vcmp.lt.s32.totalorder %v1083, 3
          %vm1105 = vcmp.lt.s32.totalorder %v1083, 4
          %v1106 = vsel %vm1102, %v1086, %v1089
          %v1107 = vsel %vm1105, %v1095, 2102212464
          %v1108 = vsel %vm1104, %v1092, %v1107
          %v1109 = vsel %vm1103, %v1106, %v1108
          %v1110 = vsel %vm1102, %v1089, %v1092
          %v1111 = vsel %vm1105, %v1098, 920167782
          %v1112 = vsel %vm1104, %v1095, %v1111
          %v1113 = vsel %vm1103, %v1110, %v1112
          %v1114 = vsel %vm1102, %v1092, %v1095
          %v1115 = vsel %vm1105, %v1101, 1326507024
          %v1116 = vsel %vm1104, %v1098, %v1115
          %v1117 = vsel %vm1103, %v1114, %v1116
          %v1118 = vshll.u32 %v1078, 8
          %v1119 = vand.u32 %v1118, 65535
          %v1120 = vshrl.u32 %v1118, 16
          %v1121 = vand.u32 %v1117, 65535
          %v1122 = vshrl.u32 %v1117, 16
          %v1123 = vmul.u32 %v1119, %v1121
          %v1124 = vmul.u32 %v1119, %v1122
          %v1125 = vmul.u32 %v1120, %v1121
          %v1126 = vmul.u32 %v1120, %v1122
          %v1127 = vshll.u32 %v1124, 16
          %v1128 = vshrl.u32 %v1124, 16
          %v1129 = vshll.u32 %v1125, 16
          %v1130 = vshrl.u32 %v1125, 16
          %vm1131 = vc.u32 %v1123, %v1127
          %v1132 = vsel %vm1131, 1, 0
          %v1133 = vadd.s32 %v1123, %v1127
          %v1134 = vadd.s32 %v1126, %v1132
          %vm1135 = vc.u32 %v1133, %v1129
          %v1136 = vsel %vm1135, 1, 0
          %v1137 = vadd.s32 %v1133, %v1129
          %v1138 = vadd.s32 %v1134, %v1136
          %v1139 = vadd.s32 %v1138, %v1128
          %v1140 = vadd.s32 %v1139, %v1130
          %v1141 = vand.u32 %v1118, 65535
          %v1142 = vshrl.u32 %v1118, 16
          %v1143 = vand.u32 %v1113, 65535
          %v1144 = vshrl.u32 %v1113, 16
          %v1145 = vmul.u32 %v1141, %v1143
          %v1146 = vmul.u32 %v1141, %v1144
          %v1147 = vmul.u32 %v1142, %v1143
          %v1148 = vmul.u32 %v1142, %v1144
          %v1149 = vshll.u32 %v1146, 16
          %v1150 = vshrl.u32 %v1146, 16
          %v1151 = vshll.u32 %v1147, 16
          %v1152 = vshrl.u32 %v1147, 16
          %vm1153 = vc.u32 %v1145, %v1149
          %v1154 = vsel %vm1153, 1, 0
          %v1155 = vadd.s32 %v1145, %v1149
          %v1156 = vadd.s32 %v1148, %v1154
          %vm1157 = vc.u32 %v1155, %v1151
          %v1158 = vsel %vm1157, 1, 0
          %v1159 = vadd.s32 %v1155, %v1151
          %v1160 = vadd.s32 %v1156, %v1158
          %v1161 = vadd.s32 %v1160, %v1150
          %v1162 = vadd.s32 %v1161, %v1152
          %v1163 = vmul.u32 %v1118, %v1109
          %v1164 = vadd.s32 %v1140, %v1159
          %vm1165 = vc.u32 %v1140, %v1159
          %v1166 = vadd.s32 %v1162, 1
          %v1167 = vsel %vm1165, %v1166, %v1162
          %v1168 = vadd.s32 %v1163, %v1167
          %v1169 = vadd.s32 %v1168, 536870912
          %v1170 = vshrl.u32 %v1169, 30
          %v1171 = vshll.u32 %v1170, 30
          %v1172 = vsub.s32 %v1168, %v1171
          %vm1173 = vcmp.lt.s32.totalorder %v1172, 0
          %v1174 = vsub.s32 0, %v1172
          %v1175 = vsel %vm1173, %v1174, %v1172
          %v1176 = vclz %v1175
          %v1177 = vsub.s32 %v1176, 2
          %vm1178 = vcmp.gt.s32.totalorder 0, %v1177
          %v1179 = vsel %vm1178, 0, %v1177
          %v1180 = vsub.s32 32, %v1179
          %v1181 = vshll.u32 %v1172, %v1179
          %v1182 = vshrl.u32 %v1164, %v1180
          %v1183 = vor.u32 %v1181, %v1182
          %v1184 = vsub.s32 4294967266, %v1179
          %v1185 = vadd.s32 %v1184, 127
          %v1186 = vshll.u32 %v1185, 23
          %v1187 = vor.u32 4788187, %v1186
          %v1188 = vand.u32 2147483647, %v1187
          %v1190 = vcvt.s32.f32 %v1183
          %v1191 = vmul.f32 %v1190, %v1188
          %v1192 = vxor.u32 %v1191, 2147483648
          %v1193 = vsel %vm1072, %v1192, %v1191
          %v1194 = vsub.s32 4, %v1170
          %v1195 = vsel %vm1072, %v1194, %v1170
          %v1196 = vsel %vm1071, %v576, %v1193
          %v1197 = vsel %vm1071, 0, %v1195
          %v1198 = vmul.f32 %v1196, %v1196
          %v1199 = vmul.f32 %v1198, -0.001358992
          %v1200 = vadd.f32 %v1199, 0.041655596
          %v1201 = vmul.f32 %v1198, %v1200
          %v1202 = vadd.f32 %v1201, -0.4999988
          %v1203 = vmul.f32 %v1198, %v1202
          %v1204 = vadd.f32 1.0, %v1203
          %v1205 = vmul.f32 %v1196, %v1196
          %v1206 = vmul.f32 %v1205, -0.00019511016
          %v1207 = vadd.f32 %v1206, 0.008332121
          %v1208 = vmul.f32 %v1205, %v1207
          %v1209 = vadd.f32 %v1208, -0.16666654
          %v1210 = vmul.f32 %v1205, %v1209
          %v1211 = vadd.f32 %v1210, 1.0
          %v1212 = vmul.f32 %v1211, %v1196
          %vm1213 = vweird.f32 %v576
          %v1214 = vadd.s32 %v1197, 3
          %v1215 = vand.u32 %v1214, 3
          %vm1216 = vcmp.lt.s32.totalorder %v1215, 2
          %vm1217 = vcmp.eq.s32.totalorder %v1215, 0
          %v1218 = vxor.u32 %v1212, 2147483648
          %v1219 = vsel %vm1217, %v1204, %v1218
          %vm1220 = vcmp.eq.s32.totalorder %v1215, 2
          %v1221 = vxor.u32 %v1204, 2147483648
          %v1222 = vsel %vm1220, %v1221, %v1212
          %v1223 = vsel %vm1216, %v1219, %v1222
          %v1224 = vsel %vm1213, nan, %v1223
          %v1225 = vand.u32 2147483647, %v577
          %vm1226 = vcmp.le.f32.partialorder %v1225, 0.7853982
          %vm1227 = vcmp.lt.s32.totalorder %v577, 0
          %v1228 = vand.u32 %v577, 2139095040
          %v1229 = vshrl.u32 %v1228, 23
          %v1230 = vsub.s32 %v1229, 127
          %v1231 = vand.u32 2147483647, %v577
          %v1232 = vand.u32 %v1231, 8388607
          %v1233 = vor.u32 %v1232, 8388608
          %v1234 = vsub.s32 0, %v1233
          %v1235 = vadd.s32 %v1230, 1
          %vm1236 = vcmp.gt.s32.totalorder %v1235, 0
          %v1237 = vsel %vm1236, %v1235, 0
          %v1238 = vshrl.u32 %v1237, 5
          %v1239 = vand.u32 %v1237, 31
          %v1240 = vsub.s32 32, %v1239
          %v1241 = vshrl.u32 683565275, %v1240
          %v1242 = vshll.u32 683565275, %v1239
          %v1243 = vshrl.u32 2475754826, %v1240
          %v1244 = vor.u32 %v1242, %v1243
          %v1245 = vshll.u32 2475754826, %v1239
          %v1246 = vshrl.u32 2131351028, %v1240
          %v1247 = vor.u32 %v1245, %v1246
          %v1248 = vshll.u32 2131351028, %v1239
          %v1249 = vshrl.u32 2102212464, %v1240
          %v1250 = vor.u32 %v1248, %v1249
          %v1251 = vshll.u32 2102212464, %v1239
          %v1252 = vshrl.u32 920167782, %v1240
          %v1253 = vor.u32 %v1251, %v1252
          %v1254 = vshll.u32 920167782, %v1239
          %v1255 = vshrl.u32 1326507024, %v1240
          %v1256 = vor.u32 %v1254, %v1255
          %vm1257 = vcmp.lt.s32.totalorder %v1238, 1
          %vm1258 = vcmp.lt.s32.totalorder %v1238, 2
          %vm1259 = vcmp.lt.s32.totalorder %v1238, 3
          %vm1260 = vcmp.lt.s32.totalorder %v1238, 4
          %v1261 = vsel %vm1257, %v1241, %v1244
          %v1262 = vsel %vm1260, %v1250, 2102212464
          %v1263 = vsel %vm1259, %v1247, %v1262
          %v1264 = vsel %vm1258, %v1261, %v1263
          %v1265 = vsel %vm1257, %v1244, %v1247
          %v1266 = vsel %vm1260, %v1253, 920167782
          %v1267 = vsel %vm1259, %v1250, %v1266
          %v1268 = vsel %vm1258, %v1265, %v1267
          %v1269 = vsel %vm1257, %v1247, %v1250
          %v1270 = vsel %vm1260, %v1256, 1326507024
          %v1271 = vsel %vm1259, %v1253, %v1270
          %v1272 = vsel %vm1258, %v1269, %v1271
          %v1273 = vshll.u32 %v1233, 8
          %v1274 = vand.u32 %v1273, 65535
          %v1275 = vshrl.u32 %v1273, 16
          %v1276 = vand.u32 %v1272, 65535
          %v1277 = vshrl.u32 %v1272, 16
          %v1278 = vmul.u32 %v1274, %v1276
          %v1279 = vmul.u32 %v1274, %v1277
          %v1280 = vmul.u32 %v1275, %v1276
          %v1281 = vmul.u32 %v1275, %v1277
          %v1282 = vshll.u32 %v1279, 16
          %v1283 = vshrl.u32 %v1279, 16
          %v1284 = vshll.u32 %v1280, 16
          %v1285 = vshrl.u32 %v1280, 16
          %vm1286 = vc.u32 %v1278, %v1282
          %v1287 = vsel %vm1286, 1, 0
          %v1288 = vadd.s32 %v1278, %v1282
          %v1289 = vadd.s32 %v1281, %v1287
          %vm1290 = vc.u32 %v1288, %v1284
          %v1291 = vsel %vm1290, 1, 0
          %v1292 = vadd.s32 %v1288, %v1284
          %v1293 = vadd.s32 %v1289, %v1291
          %v1294 = vadd.s32 %v1293, %v1283
          %v1295 = vadd.s32 %v1294, %v1285
          %v1296 = vand.u32 %v1273, 65535
          %v1297 = vshrl.u32 %v1273, 16
          %v1298 = vand.u32 %v1268, 65535
          %v1299 = vshrl.u32 %v1268, 16
          %v1300 = vmul.u32 %v1296, %v1298
          %v1301 = vmul.u32 %v1296, %v1299
          %v1302 = vmul.u32 %v1297, %v1298
          %v1303 = vmul.u32 %v1297, %v1299
          %v1304 = vshll.u32 %v1301, 16
          %v1305 = vshrl.u32 %v1301, 16
          %v1306 = vshll.u32 %v1302, 16
          %v1307 = vshrl.u32 %v1302, 16
          %vm1308 = vc.u32 %v1300, %v1304
          %v1309 = vsel %vm1308, 1, 0
          %v1310 = vadd.s32 %v1300, %v1304
          %v1311 = vadd.s32 %v1303, %v1309
          %vm1312 = vc.u32 %v1310, %v1306
          %v1313 = vsel %vm1312, 1, 0
          %v1314 = vadd.s32 %v1310, %v1306
          %v1315 = vadd.s32 %v1311, %v1313
          %v1316 = vadd.s32 %v1315, %v1305
          %v1317 = vadd.s32 %v1316, %v1307
          %v1318 = vmul.u32 %v1273, %v1264
          %v1319 = vadd.s32 %v1295, %v1314
          %vm1320 = vc.u32 %v1295, %v1314
          %v1321 = vadd.s32 %v1317, 1
          %v1322 = vsel %vm1320, %v1321, %v1317
          %v1323 = vadd.s32 %v1318, %v1322
          %v1324 = vadd.s32 %v1323, 536870912
          %v1325 = vshrl.u32 %v1324, 30
          %v1326 = vshll.u32 %v1325, 30
          %v1327 = vsub.s32 %v1323, %v1326
          %vm1328 = vcmp.lt.s32.totalorder %v1327, 0
          %v1329 = vsub.s32 0, %v1327
          %v1330 = vsel %vm1328, %v1329, %v1327
          %v1331 = vclz %v1330
          %v1332 = vsub.s32 %v1331, 2
          %vm1333 = vcmp.gt.s32.totalorder 0, %v1332
          %v1334 = vsel %vm1333, 0, %v1332
          %v1335 = vsub.s32 32, %v1334
          %v1336 = vshll.u32 %v1327, %v1334
          %v1337 = vshrl.u32 %v1319, %v1335
          %v1338 = vor.u32 %v1336, %v1337
          %v1339 = vsub.s32 4294967266, %v1334
          %v1340 = vadd.s32 %v1339, 127
          %v1341 = vshll.u32 %v1340, 23
          %v1342 = vor.u32 4788187, %v1341
          %v1343 = vand.u32 2147483647, %v1342
          %v1345 = vcvt.s32.f32 %v1338
          %v1346 = vmul.f32 %v1345, %v1343
          %v1347 = vxor.u32 %v1346, 2147483648
          %v1348 = vsel %vm1227, %v1347, %v1346
          %v1349 = vsub.s32 4, %v1325
          %v1350 = vsel %vm1227, %v1349, %v1325
          %v1351 = vsel %vm1226, %v577, %v1348
          %v1352 = vsel %vm1226, 0, %v1350
          %v1353 = vmul.f32 %v1351, %v1351
          %v1354 = vmul.f32 %v1353, -0.001358992
          %v1355 = vadd.f32 %v1354, 0.041655596
          %v1356 = vmul.f32 %v1353, %v1355
          %v1357 = vadd.f32 %v1356, -0.4999988
          %v1358 = vmul.f32 %v1353, %v1357
          %v1359 = vadd.f32 1.0, %v1358
          %v1360 = vmul.f32 %v1351, %v1351
          %v1361 = vmul.f32 %v1360, -0.00019511016
          %v1362 = vadd.f32 %v1361, 0.008332121
          %v1363 = vmul.f32 %v1360, %v1362
          %v1364 = vadd.f32 %v1363, -0.16666654
          %v1365 = vmul.f32 %v1360, %v1364
          %v1366 = vadd.f32 %v1365, 1.0
          %v1367 = vmul.f32 %v1366, %v1351
          %vm1368 = vweird.f32 %v577
          %v1369 = vadd.s32 %v1352, 3
          %v1370 = vand.u32 %v1369, 3
          %vm1371 = vcmp.lt.s32.totalorder %v1370, 2
          %vm1372 = vcmp.eq.s32.totalorder %v1370, 0
          %v1373 = vxor.u32 %v1367, 2147483648
          %v1374 = vsel %vm1372, %v1359, %v1373
          %vm1375 = vcmp.eq.s32.totalorder %v1370, 2
          %v1376 = vxor.u32 %v1359, 2147483648
          %v1377 = vsel %vm1375, %v1376, %v1367
          %v1378 = vsel %vm1371, %v1374, %v1377
          %v1379 = vsel %vm1368, nan, %v1378
          %v1380 = vand.u32 2147483647, %v578
          %vm1381 = vcmp.le.f32.partialorder %v1380, 0.7853982
          %vm1382 = vcmp.lt.s32.totalorder %v578, 0
          %v1383 = vand.u32 %v578, 2139095040
          %v1384 = vshrl.u32 %v1383, 23
          %v1385 = vsub.s32 %v1384, 127
          %v1386 = vand.u32 2147483647, %v578
          %v1387 = vand.u32 %v1386, 8388607
          %v1388 = vor.u32 %v1387, 8388608
          %v1389 = vsub.s32 0, %v1388
          %v1390 = vadd.s32 %v1385, 1
          %vm1391 = vcmp.gt.s32.totalorder %v1390, 0
          %v1392 = vsel %vm1391, %v1390, 0
          %v1393 = vshrl.u32 %v1392, 5
          %v1394 = vand.u32 %v1392, 31
          %v1395 = vsub.s32 32, %v1394
          %v1396 = vshrl.u32 683565275, %v1395
          %v1397 = vshll.u32 683565275, %v1394
          %v1398 = vshrl.u32 2475754826, %v1395
          %v1399 = vor.u32 %v1397, %v1398
          %v1400 = vshll.u32 2475754826, %v1394
          %v1401 = vshrl.u32 2131351028, %v1395
          %v1402 = vor.u32 %v1400, %v1401
          %v1403 = vshll.u32 2131351028, %v1394
          %v1404 = vshrl.u32 2102212464, %v1395
          %v1405 = vor.u32 %v1403, %v1404
          %v1406 = vshll.u32 2102212464, %v1394
          %v1407 = vshrl.u32 920167782, %v1395
          %v1408 = vor.u32 %v1406, %v1407
          %v1409 = vshll.u32 920167782, %v1394
          %v1410 = vshrl.u32 1326507024, %v1395
          %v1411 = vor.u32 %v1409, %v1410
          %vm1412 = vcmp.lt.s32.totalorder %v1393, 1
          %vm1413 = vcmp.lt.s32.totalorder %v1393, 2
          %vm1414 = vcmp.lt.s32.totalorder %v1393, 3
          %vm1415 = vcmp.lt.s32.totalorder %v1393, 4
          %v1416 = vsel %vm1412, %v1396, %v1399
          %v1417 = vsel %vm1415, %v1405, 2102212464
          %v1418 = vsel %vm1414, %v1402, %v1417
          %v1419 = vsel %vm1413, %v1416, %v1418
          %v1420 = vsel %vm1412, %v1399, %v1402
          %v1421 = vsel %vm1415, %v1408, 920167782
          %v1422 = vsel %vm1414, %v1405, %v1421
          %v1423 = vsel %vm1413, %v1420, %v1422
          %v1424 = vsel %vm1412, %v1402, %v1405
          %v1425 = vsel %vm1415, %v1411, 1326507024
          %v1426 = vsel %vm1414, %v1408, %v1425
          %v1427 = vsel %vm1413, %v1424, %v1426
          %v1428 = vshll.u32 %v1388, 8
          %v1429 = vand.u32 %v1428, 65535
          %v1430 = vshrl.u32 %v1428, 16
          %v1431 = vand.u32 %v1427, 65535
          %v1432 = vshrl.u32 %v1427, 16
          %v1433 = vmul.u32 %v1429, %v1431
          %v1434 = vmul.u32 %v1429, %v1432
          %v1435 = vmul.u32 %v1430, %v1431
          %v1436 = vmul.u32 %v1430, %v1432
          %v1437 = vshll.u32 %v1434, 16
          %v1438 = vshrl.u32 %v1434, 16
          %v1439 = vshll.u32 %v1435, 16
          %v1440 = vshrl.u32 %v1435, 16
          %vm1441 = vc.u32 %v1433, %v1437
          %v1442 = vsel %vm1441, 1, 0
          %v1443 = vadd.s32 %v1433, %v1437
          %v1444 = vadd.s32 %v1436, %v1442
          %vm1445 = vc.u32 %v1443, %v1439
          %v1446 = vsel %vm1445, 1, 0
          %v1447 = vadd.s32 %v1443, %v1439
          %v1448 = vadd.s32 %v1444, %v1446
          %v1449 = vadd.s32 %v1448, %v1438
          %v1450 = vadd.s32 %v1449, %v1440
          %v1451 = vand.u32 %v1428, 65535
          %v1452 = vshrl.u32 %v1428, 16
          %v1453 = vand.u32 %v1423, 65535
          %v1454 = vshrl.u32 %v1423, 16
          %v1455 = vmul.u32 %v1451, %v1453
          %v1456 = vmul.u32 %v1451, %v1454
          %v1457 = vmul.u32 %v1452, %v1453
          %v1458 = vmul.u32 %v1452, %v1454
          %v1459 = vshll.u32 %v1456, 16
          %v1460 = vshrl.u32 %v1456, 16
          %v1461 = vshll.u32 %v1457, 16
          %v1462 = vshrl.u32 %v1457, 16
          %vm1463 = vc.u32 %v1455, %v1459
          %v1464 = vsel %vm1463, 1, 0
          %v1465 = vadd.s32 %v1455, %v1459
          %v1466 = vadd.s32 %v1458, %v1464
          %vm1467 = vc.u32 %v1465, %v1461
          %v1468 = vsel %vm1467, 1, 0
          %v1469 = vadd.s32 %v1465, %v1461
          %v1470 = vadd.s32 %v1466, %v1468
          %v1471 = vadd.s32 %v1470, %v1460
          %v1472 = vadd.s32 %v1471, %v1462
          %v1473 = vmul.u32 %v1428, %v1419
          %v1474 = vadd.s32 %v1450, %v1469
          %vm1475 = vc.u32 %v1450, %v1469
          %v1476 = vadd.s32 %v1472, 1
          %v1477 = vsel %vm1475, %v1476, %v1472
          %v1478 = vadd.s32 %v1473, %v1477
          %v1479 = vadd.s32 %v1478, 536870912
          %v1480 = vshrl.u32 %v1479, 30
          %v1481 = vshll.u32 %v1480, 30
          %v1482 = vsub.s32 %v1478, %v1481
          %vm1483 = vcmp.lt.s32.totalorder %v1482, 0
          %v1484 = vsub.s32 0, %v1482
          %v1485 = vsel %vm1483, %v1484, %v1482
          %v1486 = vclz %v1485
          %v1487 = vsub.s32 %v1486, 2
          %vm1488 = vcmp.gt.s32.totalorder 0, %v1487
          %v1489 = vsel %vm1488, 0, %v1487
          %v1490 = vsub.s32 32, %v1489
          %v1491 = vshll.u32 %v1482, %v1489
          %v1492 = vshrl.u32 %v1474, %v1490
          %v1493 = vor.u32 %v1491, %v1492
          %v1494 = vsub.s32 4294967266, %v1489
          %v1495 = vadd.s32 %v1494, 127
          %v1496 = vshll.u32 %v1495, 23
          %v1497 = vor.u32 4788187, %v1496
          %v1498 = vand.u32 2147483647, %v1497
          %v1500 = vcvt.s32.f32 %v1493
          %v1501 = vmul.f32 %v1500, %v1498
          %v1502 = vxor.u32 %v1501, 2147483648
          %v1503 = vsel %vm1382, %v1502, %v1501
          %v1504 = vsub.s32 4, %v1480
          %v1505 = vsel %vm1382, %v1504, %v1480
          %v1506 = vsel %vm1381, %v578, %v1503
          %v1507 = vsel %vm1381, 0, %v1505
          %v1508 = vmul.f32 %v1506, %v1506
          %v1509 = vmul.f32 %v1508, -0.001358992
          %v1510 = vadd.f32 %v1509, 0.041655596
          %v1511 = vmul.f32 %v1508, %v1510
          %v1512 = vadd.f32 %v1511, -0.4999988
          %v1513 = vmul.f32 %v1508, %v1512
          %v1514 = vadd.f32 1.0, %v1513
          %v1515 = vmul.f32 %v1506, %v1506
          %v1516 = vmul.f32 %v1515, -0.00019511016
          %v1517 = vadd.f32 %v1516, 0.008332121
          %v1518 = vmul.f32 %v1515, %v1517
          %v1519 = vadd.f32 %v1518, -0.16666654
          %v1520 = vmul.f32 %v1515, %v1519
          %v1521 = vadd.f32 %v1520, 1.0
          %v1522 = vmul.f32 %v1521, %v1506
          %vm1523 = vweird.f32 %v578
          %v1524 = vadd.s32 %v1507, 3
          %v1525 = vand.u32 %v1524, 3
          %vm1526 = vcmp.lt.s32.totalorder %v1525, 2
          %vm1527 = vcmp.eq.s32.totalorder %v1525, 0
          %v1528 = vxor.u32 %v1522, 2147483648
          %v1529 = vsel %vm1527, %v1514, %v1528
          %vm1530 = vcmp.eq.s32.totalorder %v1525, 2
          %v1531 = vxor.u32 %v1514, 2147483648
          %v1532 = vsel %vm1530, %v1531, %v1522
          %v1533 = vsel %vm1526, %v1529, %v1532
          %v1534 = vsel %vm1523, nan, %v1533
          %v1535 = vand.u32 2147483647, %v579
          %vm1536 = vcmp.le.f32.partialorder %v1535, 0.7853982
          %vm1537 = vcmp.lt.s32.totalorder %v579, 0
          %v1538 = vand.u32 %v579, 2139095040
          %v1539 = vshrl.u32 %v1538, 23
          %v1540 = vsub.s32 %v1539, 127
          %v1541 = vand.u32 2147483647, %v579
          %v1542 = vand.u32 %v1541, 8388607
          %v1543 = vor.u32 %v1542, 8388608
          %v1544 = vsub.s32 0, %v1543
          %v1545 = vadd.s32 %v1540, 1
          %vm1546 = vcmp.gt.s32.totalorder %v1545, 0
          %v1547 = vsel %vm1546, %v1545, 0
          %v1548 = vshrl.u32 %v1547, 5
          %v1549 = vand.u32 %v1547, 31
          %v1550 = vsub.s32 32, %v1549
          %v1551 = vshrl.u32 683565275, %v1550
          %v1552 = vshll.u32 683565275, %v1549
          %v1553 = vshrl.u32 2475754826, %v1550
          %v1554 = vor.u32 %v1552, %v1553
          %v1555 = vshll.u32 2475754826, %v1549
          %v1556 = vshrl.u32 2131351028, %v1550
          %v1557 = vor.u32 %v1555, %v1556
          %v1558 = vshll.u32 2131351028, %v1549
          %v1559 = vshrl.u32 2102212464, %v1550
          %v1560 = vor.u32 %v1558, %v1559
          %v1561 = vshll.u32 2102212464, %v1549
          %v1562 = vshrl.u32 920167782, %v1550
          %v1563 = vor.u32 %v1561, %v1562
          %v1564 = vshll.u32 920167782, %v1549
          %v1565 = vshrl.u32 1326507024, %v1550
          %v1566 = vor.u32 %v1564, %v1565
          %vm1567 = vcmp.lt.s32.totalorder %v1548, 1
          %vm1568 = vcmp.lt.s32.totalorder %v1548, 2
          %vm1569 = vcmp.lt.s32.totalorder %v1548, 3
          %vm1570 = vcmp.lt.s32.totalorder %v1548, 4
          %v1571 = vsel %vm1567, %v1551, %v1554
          %v1572 = vsel %vm1570, %v1560, 2102212464
          %v1573 = vsel %vm1569, %v1557, %v1572
          %v1574 = vsel %vm1568, %v1571, %v1573
          %v1575 = vsel %vm1567, %v1554, %v1557
          %v1576 = vsel %vm1570, %v1563, 920167782
          %v1577 = vsel %vm1569, %v1560, %v1576
          %v1578 = vsel %vm1568, %v1575, %v1577
          %v1579 = vsel %vm1567, %v1557, %v1560
          %v1580 = vsel %vm1570, %v1566, 1326507024
          %v1581 = vsel %vm1569, %v1563, %v1580
          %v1582 = vsel %vm1568, %v1579, %v1581
          %v1583 = vshll.u32 %v1543, 8
          %v1584 = vand.u32 %v1583, 65535
          %v1585 = vshrl.u32 %v1583, 16
          %v1586 = vand.u32 %v1582, 65535
          %v1587 = vshrl.u32 %v1582, 16
          %v1588 = vmul.u32 %v1584, %v1586
          %v1589 = vmul.u32 %v1584, %v1587
          %v1590 = vmul.u32 %v1585, %v1586
          %v1591 = vmul.u32 %v1585, %v1587
          %v1592 = vshll.u32 %v1589, 16
          %v1593 = vshrl.u32 %v1589, 16
          %v1594 = vshll.u32 %v1590, 16
          %v1595 = vshrl.u32 %v1590, 16
          %vm1596 = vc.u32 %v1588, %v1592
          %v1597 = vsel %vm1596, 1, 0
          %v1598 = vadd.s32 %v1588, %v1592
          %v1599 = vadd.s32 %v1591, %v1597
          %vm1600 = vc.u32 %v1598, %v1594
          %v1601 = vsel %vm1600, 1, 0
          %v1602 = vadd.s32 %v1598, %v1594
          %v1603 = vadd.s32 %v1599, %v1601
          %v1604 = vadd.s32 %v1603, %v1593
          %v1605 = vadd.s32 %v1604, %v1595
          %v1606 = vand.u32 %v1583, 65535
          %v1607 = vshrl.u32 %v1583, 16
          %v1608 = vand.u32 %v1578, 65535
          %v1609 = vshrl.u32 %v1578, 16
          %v1610 = vmul.u32 %v1606, %v1608
          %v1611 = vmul.u32 %v1606, %v1609
          %v1612 = vmul.u32 %v1607, %v1608
          %v1613 = vmul.u32 %v1607, %v1609
          %v1614 = vshll.u32 %v1611, 16
          %v1615 = vshrl.u32 %v1611, 16
          %v1616 = vshll.u32 %v1612, 16
          %v1617 = vshrl.u32 %v1612, 16
          %vm1618 = vc.u32 %v1610, %v1614
          %v1619 = vsel %vm1618, 1, 0
          %v1620 = vadd.s32 %v1610, %v1614
          %v1621 = vadd.s32 %v1613, %v1619
          %vm1622 = vc.u32 %v1620, %v1616
          %v1623 = vsel %vm1622, 1, 0
          %v1624 = vadd.s32 %v1620, %v1616
          %v1625 = vadd.s32 %v1621, %v1623
          %v1626 = vadd.s32 %v1625, %v1615
          %v1627 = vadd.s32 %v1626, %v1617
          %v1628 = vmul.u32 %v1583, %v1574
          %v1629 = vadd.s32 %v1605, %v1624
          %vm1630 = vc.u32 %v1605, %v1624
          %v1631 = vadd.s32 %v1627, 1
          %v1632 = vsel %vm1630, %v1631, %v1627
          %v1633 = vadd.s32 %v1628, %v1632
          %v1634 = vadd.s32 %v1633, 536870912
          %v1635 = vshrl.u32 %v1634, 30
          %v1636 = vshll.u32 %v1635, 30
          %v1637 = vsub.s32 %v1633, %v1636
          %vm1638 = vcmp.lt.s32.totalorder %v1637, 0
          %v1639 = vsub.s32 0, %v1637
          %v1640 = vsel %vm1638, %v1639, %v1637
          %v1641 = vclz %v1640
          %v1642 = vsub.s32 %v1641, 2
          %vm1643 = vcmp.gt.s32.totalorder 0, %v1642
          %v1644 = vsel %vm1643, 0, %v1642
          %v1645 = vsub.s32 32, %v1644
          %v1646 = vshll.u32 %v1637, %v1644
          %v1647 = vshrl.u32 %v1629, %v1645
          %v1648 = vor.u32 %v1646, %v1647
          %v1649 = vsub.s32 4294967266, %v1644
          %v1650 = vadd.s32 %v1649, 127
          %v1651 = vshll.u32 %v1650, 23
          %v1652 = vor.u32 4788187, %v1651
          %v1653 = vand.u32 2147483647, %v1652
          %v1655 = vcvt.s32.f32 %v1648
          %v1656 = vmul.f32 %v1655, %v1653
          %v1657 = vxor.u32 %v1656, 2147483648
          %v1658 = vsel %vm1537, %v1657, %v1656
          %v1659 = vsub.s32 4, %v1635
          %v1660 = vsel %vm1537, %v1659, %v1635
          %v1661 = vsel %vm1536, %v579, %v1658
          %v1662 = vsel %vm1536, 0, %v1660
          %v1663 = vmul.f32 %v1661, %v1661
          %v1664 = vmul.f32 %v1663, -0.001358992
          %v1665 = vadd.f32 %v1664, 0.041655596
          %v1666 = vmul.f32 %v1663, %v1665
          %v1667 = vadd.f32 %v1666, -0.4999988
          %v1668 = vmul.f32 %v1663, %v1667
          %v1669 = vadd.f32 1.0, %v1668
          %v1670 = vmul.f32 %v1661, %v1661
          %v1671 = vmul.f32 %v1670, -0.00019511016
          %v1672 = vadd.f32 %v1671, 0.008332121
          %v1673 = vmul.f32 %v1670, %v1672
          %v1674 = vadd.f32 %v1673, -0.16666654
          %v1675 = vmul.f32 %v1670, %v1674
          %v1676 = vadd.f32 %v1675, 1.0
          %v1677 = vmul.f32 %v1676, %v1661
          %vm1678 = vweird.f32 %v579
          %v1679 = vadd.s32 %v1662, 3
          %v1680 = vand.u32 %v1679, 3
          %vm1681 = vcmp.lt.s32.totalorder %v1680, 2
          %vm1682 = vcmp.eq.s32.totalorder %v1680, 0
          %v1683 = vxor.u32 %v1677, 2147483648
          %v1684 = vsel %vm1682, %v1669, %v1683
          %vm1685 = vcmp.eq.s32.totalorder %v1680, 2
          %v1686 = vxor.u32 %v1669, 2147483648
          %v1687 = vsel %vm1685, %v1686, %v1677
          %v1688 = vsel %vm1681, %v1684, %v1687
          %v1689 = vsel %vm1678, nan, %v1688
          %v1690 = vand.u32 2147483647, %v580
          %vm1691 = vcmp.le.f32.partialorder %v1690, 0.7853982
          %vm1692 = vcmp.lt.s32.totalorder %v580, 0
          %v1693 = vand.u32 %v580, 2139095040
          %v1694 = vshrl.u32 %v1693, 23
          %v1695 = vsub.s32 %v1694, 127
          %v1696 = vand.u32 2147483647, %v580
          %v1697 = vand.u32 %v1696, 8388607
          %v1698 = vor.u32 %v1697, 8388608
          %v1699 = vsub.s32 0, %v1698
          %v1700 = vadd.s32 %v1695, 1
          %vm1701 = vcmp.gt.s32.totalorder %v1700, 0
          %v1702 = vsel %vm1701, %v1700, 0
          %v1703 = vshrl.u32 %v1702, 5
          %v1704 = vand.u32 %v1702, 31
          %v1705 = vsub.s32 32, %v1704
          %v1706 = vshrl.u32 683565275, %v1705
          %v1707 = vshll.u32 683565275, %v1704
          %v1708 = vshrl.u32 2475754826, %v1705
          %v1709 = vor.u32 %v1707, %v1708
          %v1710 = vshll.u32 2475754826, %v1704
          %v1711 = vshrl.u32 2131351028, %v1705
          %v1712 = vor.u32 %v1710, %v1711
          %v1713 = vshll.u32 2131351028, %v1704
          %v1714 = vshrl.u32 2102212464, %v1705
          %v1715 = vor.u32 %v1713, %v1714
          %v1716 = vshll.u32 2102212464, %v1704
          %v1717 = vshrl.u32 920167782, %v1705
          %v1718 = vor.u32 %v1716, %v1717
          %v1719 = vshll.u32 920167782, %v1704
          %v1720 = vshrl.u32 1326507024, %v1705
          %v1721 = vor.u32 %v1719, %v1720
          %vm1722 = vcmp.lt.s32.totalorder %v1703, 1
          %vm1723 = vcmp.lt.s32.totalorder %v1703, 2
          %vm1724 = vcmp.lt.s32.totalorder %v1703, 3
          %vm1725 = vcmp.lt.s32.totalorder %v1703, 4
          %v1726 = vsel %vm1722, %v1706, %v1709
          %v1727 = vsel %vm1725, %v1715, 2102212464
          %v1728 = vsel %vm1724, %v1712, %v1727
          %v1729 = vsel %vm1723, %v1726, %v1728
          %v1730 = vsel %vm1722, %v1709, %v1712
          %v1731 = vsel %vm1725, %v1718, 920167782
          %v1732 = vsel %vm1724, %v1715, %v1731
          %v1733 = vsel %vm1723, %v1730, %v1732
          %v1734 = vsel %vm1722, %v1712, %v1715
          %v1735 = vsel %vm1725, %v1721, 1326507024
          %v1736 = vsel %vm1724, %v1718, %v1735
          %v1737 = vsel %vm1723, %v1734, %v1736
          %v1738 = vshll.u32 %v1698, 8
          %v1739 = vand.u32 %v1738, 65535
          %v1740 = vshrl.u32 %v1738, 16
          %v1741 = vand.u32 %v1737, 65535
          %v1742 = vshrl.u32 %v1737, 16
          %v1743 = vmul.u32 %v1739, %v1741
          %v1744 = vmul.u32 %v1739, %v1742
          %v1745 = vmul.u32 %v1740, %v1741
          %v1746 = vmul.u32 %v1740, %v1742
          %v1747 = vshll.u32 %v1744, 16
          %v1748 = vshrl.u32 %v1744, 16
          %v1749 = vshll.u32 %v1745, 16
          %v1750 = vshrl.u32 %v1745, 16
          %vm1751 = vc.u32 %v1743, %v1747
          %v1752 = vsel %vm1751, 1, 0
          %v1753 = vadd.s32 %v1743, %v1747
          %v1754 = vadd.s32 %v1746, %v1752
          %vm1755 = vc.u32 %v1753, %v1749
          %v1756 = vsel %vm1755, 1, 0
          %v1757 = vadd.s32 %v1753, %v1749
          %v1758 = vadd.s32 %v1754, %v1756
          %v1759 = vadd.s32 %v1758, %v1748
          %v1760 = vadd.s32 %v1759, %v1750
          %v1761 = vand.u32 %v1738, 65535
          %v1762 = vshrl.u32 %v1738, 16
          %v1763 = vand.u32 %v1733, 65535
          %v1764 = vshrl.u32 %v1733, 16
          %v1765 = vmul.u32 %v1761, %v1763
          %v1766 = vmul.u32 %v1761, %v1764
          %v1767 = vmul.u32 %v1762, %v1763
          %v1768 = vmul.u32 %v1762, %v1764
          %v1769 = vshll.u32 %v1766, 16
          %v1770 = vshrl.u32 %v1766, 16
          %v1771 = vshll.u32 %v1767, 16
          %v1772 = vshrl.u32 %v1767, 16
          %vm1773 = vc.u32 %v1765, %v1769
          %v1774 = vsel %vm1773, 1, 0
          %v1775 = vadd.s32 %v1765, %v1769
          %v1776 = vadd.s32 %v1768, %v1774
          %vm1777 = vc.u32 %v1775, %v1771
          %v1778 = vsel %vm1777, 1, 0
          %v1779 = vadd.s32 %v1775, %v1771
          %v1780 = vadd.s32 %v1776, %v1778
          %v1781 = vadd.s32 %v1780, %v1770
          %v1782 = vadd.s32 %v1781, %v1772
          %v1783 = vmul.u32 %v1738, %v1729
          %v1784 = vadd.s32 %v1760, %v1779
          %vm1785 = vc.u32 %v1760, %v1779
          %v1786 = vadd.s32 %v1782, 1
          %v1787 = vsel %vm1785, %v1786, %v1782
          %v1788 = vadd.s32 %v1783, %v1787
          %v1789 = vadd.s32 %v1788, 536870912
          %v1790 = vshrl.u32 %v1789, 30
          %v1791 = vshll.u32 %v1790, 30
          %v1792 = vsub.s32 %v1788, %v1791
          %vm1793 = vcmp.lt.s32.totalorder %v1792, 0
          %v1794 = vsub.s32 0, %v1792
          %v1795 = vsel %vm1793, %v1794, %v1792
          %v1796 = vclz %v1795
          %v1797 = vsub.s32 %v1796, 2
          %vm1798 = vcmp.gt.s32.totalorder 0, %v1797
          %v1799 = vsel %vm1798, 0, %v1797
          %v1800 = vsub.s32 32, %v1799
          %v1801 = vshll.u32 %v1792, %v1799
          %v1802 = vshrl.u32 %v1784, %v1800
          %v1803 = vor.u32 %v1801, %v1802
          %v1804 = vsub.s32 4294967266, %v1799
          %v1805 = vadd.s32 %v1804, 127
          %v1806 = vshll.u32 %v1805, 23
          %v1807 = vor.u32 4788187, %v1806
          %v1808 = vand.u32 2147483647, %v1807
          %v1810 = vcvt.s32.f32 %v1803
          %v1811 = vmul.f32 %v1810, %v1808
          %v1812 = vxor.u32 %v1811, 2147483648
          %v1813 = vsel %vm1692, %v1812, %v1811
          %v1814 = vsub.s32 4, %v1790
          %v1815 = vsel %vm1692, %v1814, %v1790
          %v1816 = vsel %vm1691, %v580, %v1813
          %v1817 = vsel %vm1691, 0, %v1815
          %v1818 = vmul.f32 %v1816, %v1816
          %v1819 = vmul.f32 %v1818, -0.001358992
          %v1820 = vadd.f32 %v1819, 0.041655596
          %v1821 = vmul.f32 %v1818, %v1820
          %v1822 = vadd.f32 %v1821, -0.4999988
          %v1823 = vmul.f32 %v1818, %v1822
          %v1824 = vadd.f32 1.0, %v1823
          %v1825 = vmul.f32 %v1816, %v1816
          %v1826 = vmul.f32 %v1825, -0.00019511016
          %v1827 = vadd.f32 %v1826, 0.008332121
          %v1828 = vmul.f32 %v1825, %v1827
          %v1829 = vadd.f32 %v1828, -0.16666654
          %v1830 = vmul.f32 %v1825, %v1829
          %v1831 = vadd.f32 %v1830, 1.0
          %v1832 = vmul.f32 %v1831, %v1816
          %vm1833 = vweird.f32 %v580
          %v1834 = vadd.s32 %v1817, 3
          %v1835 = vand.u32 %v1834, 3
          %vm1836 = vcmp.lt.s32.totalorder %v1835, 2
          %vm1837 = vcmp.eq.s32.totalorder %v1835, 0
          %v1838 = vxor.u32 %v1832, 2147483648
          %v1839 = vsel %vm1837, %v1824, %v1838
          %vm1840 = vcmp.eq.s32.totalorder %v1835, 2
          %v1841 = vxor.u32 %v1824, 2147483648
          %v1842 = vsel %vm1840, %v1841, %v1832
          %v1843 = vsel %vm1836, %v1839, %v1842
          %v1844 = vsel %vm1833, nan, %v1843
          %v1845 = vand.u32 2147483647, %v581
          %vm1846 = vcmp.le.f32.partialorder %v1845, 0.7853982
          %vm1847 = vcmp.lt.s32.totalorder %v581, 0
          %v1848 = vand.u32 %v581, 2139095040
          %v1849 = vshrl.u32 %v1848, 23
          %v1850 = vsub.s32 %v1849, 127
          %v1851 = vand.u32 2147483647, %v581
          %v1852 = vand.u32 %v1851, 8388607
          %v1853 = vor.u32 %v1852, 8388608
          %v1854 = vsub.s32 0, %v1853
          %v1855 = vadd.s32 %v1850, 1
          %vm1856 = vcmp.gt.s32.totalorder %v1855, 0
          %v1857 = vsel %vm1856, %v1855, 0
          %v1858 = vshrl.u32 %v1857, 5
          %v1859 = vand.u32 %v1857, 31
          %v1860 = vsub.s32 32, %v1859
          %v1861 = vshrl.u32 683565275, %v1860
          %v1862 = vshll.u32 683565275, %v1859
          %v1863 = vshrl.u32 2475754826, %v1860
          %v1864 = vor.u32 %v1862, %v1863
          %v1865 = vshll.u32 2475754826, %v1859
          %v1866 = vshrl.u32 2131351028, %v1860
          %v1867 = vor.u32 %v1865, %v1866
          %v1868 = vshll.u32 2131351028, %v1859
          %v1869 = vshrl.u32 2102212464, %v1860
          %v1870 = vor.u32 %v1868, %v1869
          %v1871 = vshll.u32 2102212464, %v1859
          %v1872 = vshrl.u32 920167782, %v1860
          %v1873 = vor.u32 %v1871, %v1872
          %v1874 = vshll.u32 920167782, %v1859
          %v1875 = vshrl.u32 1326507024, %v1860
          %v1876 = vor.u32 %v1874, %v1875
          %vm1877 = vcmp.lt.s32.totalorder %v1858, 1
          %vm1878 = vcmp.lt.s32.totalorder %v1858, 2
          %vm1879 = vcmp.lt.s32.totalorder %v1858, 3
          %vm1880 = vcmp.lt.s32.totalorder %v1858, 4
          %v1881 = vsel %vm1877, %v1861, %v1864
          %v1882 = vsel %vm1880, %v1870, 2102212464
          %v1883 = vsel %vm1879, %v1867, %v1882
          %v1884 = vsel %vm1878, %v1881, %v1883
          %v1885 = vsel %vm1877, %v1864, %v1867
          %v1886 = vsel %vm1880, %v1873, 920167782
          %v1887 = vsel %vm1879, %v1870, %v1886
          %v1888 = vsel %vm1878, %v1885, %v1887
          %v1889 = vsel %vm1877, %v1867, %v1870
          %v1890 = vsel %vm1880, %v1876, 1326507024
          %v1891 = vsel %vm1879, %v1873, %v1890
          %v1892 = vsel %vm1878, %v1889, %v1891
          %v1893 = vshll.u32 %v1853, 8
          %v1894 = vand.u32 %v1893, 65535
          %v1895 = vshrl.u32 %v1893, 16
          %v1896 = vand.u32 %v1892, 65535
          %v1897 = vshrl.u32 %v1892, 16
          %v1898 = vmul.u32 %v1894, %v1896
          %v1899 = vmul.u32 %v1894, %v1897
          %v1900 = vmul.u32 %v1895, %v1896
          %v1901 = vmul.u32 %v1895, %v1897
          %v1902 = vshll.u32 %v1899, 16
          %v1903 = vshrl.u32 %v1899, 16
          %v1904 = vshll.u32 %v1900, 16
          %v1905 = vshrl.u32 %v1900, 16
          %vm1906 = vc.u32 %v1898, %v1902
          %v1907 = vsel %vm1906, 1, 0
          %v1908 = vadd.s32 %v1898, %v1902
          %v1909 = vadd.s32 %v1901, %v1907
          %vm1910 = vc.u32 %v1908, %v1904
          %v1911 = vsel %vm1910, 1, 0
          %v1912 = vadd.s32 %v1908, %v1904
          %v1913 = vadd.s32 %v1909, %v1911
          %v1914 = vadd.s32 %v1913, %v1903
          %v1915 = vadd.s32 %v1914, %v1905
          %v1916 = vand.u32 %v1893, 65535
          %v1917 = vshrl.u32 %v1893, 16
          %v1918 = vand.u32 %v1888, 65535
          %v1919 = vshrl.u32 %v1888, 16
          %v1920 = vmul.u32 %v1916, %v1918
          %v1921 = vmul.u32 %v1916, %v1919
          %v1922 = vmul.u32 %v1917, %v1918
          %v1923 = vmul.u32 %v1917, %v1919
          %v1924 = vshll.u32 %v1921, 16
          %v1925 = vshrl.u32 %v1921, 16
          %v1926 = vshll.u32 %v1922, 16
          %v1927 = vshrl.u32 %v1922, 16
          %vm1928 = vc.u32 %v1920, %v1924
          %v1929 = vsel %vm1928, 1, 0
          %v1930 = vadd.s32 %v1920, %v1924
          %v1931 = vadd.s32 %v1923, %v1929
          %vm1932 = vc.u32 %v1930, %v1926
          %v1933 = vsel %vm1932, 1, 0
          %v1934 = vadd.s32 %v1930, %v1926
          %v1935 = vadd.s32 %v1931, %v1933
          %v1936 = vadd.s32 %v1935, %v1925
          %v1937 = vadd.s32 %v1936, %v1927
          %v1938 = vmul.u32 %v1893, %v1884
          %v1939 = vadd.s32 %v1915, %v1934
          %vm1940 = vc.u32 %v1915, %v1934
          %v1941 = vadd.s32 %v1937, 1
          %v1942 = vsel %vm1940, %v1941, %v1937
          %v1943 = vadd.s32 %v1938, %v1942
          %v1944 = vadd.s32 %v1943, 536870912
          %v1945 = vshrl.u32 %v1944, 30
          %v1946 = vshll.u32 %v1945, 30
          %v1947 = vsub.s32 %v1943, %v1946
          %vm1948 = vcmp.lt.s32.totalorder %v1947, 0
          %v1949 = vsub.s32 0, %v1947
          %v1950 = vsel %vm1948, %v1949, %v1947
          %v1951 = vclz %v1950
          %v1952 = vsub.s32 %v1951, 2
          %vm1953 = vcmp.gt.s32.totalorder 0, %v1952
          %v1954 = vsel %vm1953, 0, %v1952
          %v1955 = vsub.s32 32, %v1954
          %v1956 = vshll.u32 %v1947, %v1954
          %v1957 = vshrl.u32 %v1939, %v1955
          %v1958 = vor.u32 %v1956, %v1957
          %v1959 = vsub.s32 4294967266, %v1954
          %v1960 = vadd.s32 %v1959, 127
          %v1961 = vshll.u32 %v1960, 23
          %v1962 = vor.u32 4788187, %v1961
          %v1963 = vand.u32 2147483647, %v1962
          %v1965 = vcvt.s32.f32 %v1958
          %v1966 = vmul.f32 %v1965, %v1963
          %v1967 = vxor.u32 %v1966, 2147483648
          %v1968 = vsel %vm1847, %v1967, %v1966
          %v1969 = vsub.s32 4, %v1945
          %v1970 = vsel %vm1847, %v1969, %v1945
          %v1971 = vsel %vm1846, %v581, %v1968
          %v1972 = vsel %vm1846, 0, %v1970
          %v1973 = vmul.f32 %v1971, %v1971
          %v1974 = vmul.f32 %v1973, -0.001358992
          %v1975 = vadd.f32 %v1974, 0.041655596
          %v1976 = vmul.f32 %v1973, %v1975
          %v1977 = vadd.f32 %v1976, -0.4999988
          %v1978 = vmul.f32 %v1973, %v1977
          %v1979 = vadd.f32 1.0, %v1978
          %v1980 = vmul.f32 %v1971, %v1971
          %v1981 = vmul.f32 %v1980, -0.00019511016
          %v1982 = vadd.f32 %v1981, 0.008332121
          %v1983 = vmul.f32 %v1980, %v1982
          %v1984 = vadd.f32 %v1983, -0.16666654
          %v1985 = vmul.f32 %v1980, %v1984
          %v1986 = vadd.f32 %v1985, 1.0
          %v1987 = vmul.f32 %v1986, %v1971
          %vm1988 = vweird.f32 %v581
          %v1989 = vadd.s32 %v1972, 3
          %v1990 = vand.u32 %v1989, 3
          %vm1991 = vcmp.lt.s32.totalorder %v1990, 2
          %vm1992 = vcmp.eq.s32.totalorder %v1990, 0
          %v1993 = vxor.u32 %v1987, 2147483648
          %v1994 = vsel %vm1992, %v1979, %v1993
          %vm1995 = vcmp.eq.s32.totalorder %v1990, 2
          %v1996 = vxor.u32 %v1979, 2147483648
          %v1997 = vsel %vm1995, %v1996, %v1987
          %v1998 = vsel %vm1991, %v1994, %v1997
          %v1999 = vsel %vm1988, nan, %v1998
          %v2000 = vand.u32 2147483647, %v582
          %vm2001 = vcmp.le.f32.partialorder %v2000, 0.7853982
          %vm2002 = vcmp.lt.s32.totalorder %v582, 0
          %v2003 = vand.u32 %v582, 2139095040
          %v2004 = vshrl.u32 %v2003, 23
          %v2005 = vsub.s32 %v2004, 127
          %v2006 = vand.u32 2147483647, %v582
          %v2007 = vand.u32 %v2006, 8388607
          %v2008 = vor.u32 %v2007, 8388608
          %v2009 = vsub.s32 0, %v2008
          %v2010 = vadd.s32 %v2005, 1
          %vm2011 = vcmp.gt.s32.totalorder %v2010, 0
          %v2012 = vsel %vm2011, %v2010, 0
          %v2013 = vshrl.u32 %v2012, 5
          %v2014 = vand.u32 %v2012, 31
          %v2015 = vsub.s32 32, %v2014
          %v2016 = vshrl.u32 683565275, %v2015
          %v2017 = vshll.u32 683565275, %v2014
          %v2018 = vshrl.u32 2475754826, %v2015
          %v2019 = vor.u32 %v2017, %v2018
          %v2020 = vshll.u32 2475754826, %v2014
          %v2021 = vshrl.u32 2131351028, %v2015
          %v2022 = vor.u32 %v2020, %v2021
          %v2023 = vshll.u32 2131351028, %v2014
          %v2024 = vshrl.u32 2102212464, %v2015
          %v2025 = vor.u32 %v2023, %v2024
          %v2026 = vshll.u32 2102212464, %v2014
          %v2027 = vshrl.u32 920167782, %v2015
          %v2028 = vor.u32 %v2026, %v2027
          %v2029 = vshll.u32 920167782, %v2014
          %v2030 = vshrl.u32 1326507024, %v2015
          %v2031 = vor.u32 %v2029, %v2030
          %vm2032 = vcmp.lt.s32.totalorder %v2013, 1
          %vm2033 = vcmp.lt.s32.totalorder %v2013, 2
          %vm2034 = vcmp.lt.s32.totalorder %v2013, 3
          %vm2035 = vcmp.lt.s32.totalorder %v2013, 4
          %v2036 = vsel %vm2032, %v2016, %v2019
          %v2037 = vsel %vm2035, %v2025, 2102212464
          %v2038 = vsel %vm2034, %v2022, %v2037
          %v2039 = vsel %vm2033, %v2036, %v2038
          %v2040 = vsel %vm2032, %v2019, %v2022
          %v2041 = vsel %vm2035, %v2028, 920167782
          %v2042 = vsel %vm2034, %v2025, %v2041
          %v2043 = vsel %vm2033, %v2040, %v2042
          %v2044 = vsel %vm2032, %v2022, %v2025
          %v2045 = vsel %vm2035, %v2031, 1326507024
          %v2046 = vsel %vm2034, %v2028, %v2045
          %v2047 = vsel %vm2033, %v2044, %v2046
          %v2048 = vshll.u32 %v2008, 8
          %v2049 = vand.u32 %v2048, 65535
          %v2050 = vshrl.u32 %v2048, 16
          %v2051 = vand.u32 %v2047, 65535
          %v2052 = vshrl.u32 %v2047, 16
          %v2053 = vmul.u32 %v2049, %v2051
          %v2054 = vmul.u32 %v2049, %v2052
          %v2055 = vmul.u32 %v2050, %v2051
          %v2056 = vmul.u32 %v2050, %v2052
          %v2057 = vshll.u32 %v2054, 16
          %v2058 = vshrl.u32 %v2054, 16
          %v2059 = vshll.u32 %v2055, 16
          %v2060 = vshrl.u32 %v2055, 16
          %vm2061 = vc.u32 %v2053, %v2057
          %v2062 = vsel %vm2061, 1, 0
          %v2063 = vadd.s32 %v2053, %v2057
          %v2064 = vadd.s32 %v2056, %v2062
          %vm2065 = vc.u32 %v2063, %v2059
          %v2066 = vsel %vm2065, 1, 0
          %v2067 = vadd.s32 %v2063, %v2059
          %v2068 = vadd.s32 %v2064, %v2066
          %v2069 = vadd.s32 %v2068, %v2058
          %v2070 = vadd.s32 %v2069, %v2060
          %v2071 = vand.u32 %v2048, 65535
          %v2072 = vshrl.u32 %v2048, 16
          %v2073 = vand.u32 %v2043, 65535
          %v2074 = vshrl.u32 %v2043, 16
          %v2075 = vmul.u32 %v2071, %v2073
          %v2076 = vmul.u32 %v2071, %v2074
          %v2077 = vmul.u32 %v2072, %v2073
          %v2078 = vmul.u32 %v2072, %v2074
          %v2079 = vshll.u32 %v2076, 16
          %v2080 = vshrl.u32 %v2076, 16
          %v2081 = vshll.u32 %v2077, 16
          %v2082 = vshrl.u32 %v2077, 16
          %vm2083 = vc.u32 %v2075, %v2079
          %v2084 = vsel %vm2083, 1, 0
          %v2085 = vadd.s32 %v2075, %v2079
          %v2086 = vadd.s32 %v2078, %v2084
          %vm2087 = vc.u32 %v2085, %v2081
          %v2088 = vsel %vm2087, 1, 0
          %v2089 = vadd.s32 %v2085, %v2081
          %v2090 = vadd.s32 %v2086, %v2088
          %v2091 = vadd.s32 %v2090, %v2080
          %v2092 = vadd.s32 %v2091, %v2082
          %v2093 = vmul.u32 %v2048, %v2039
          %v2094 = vadd.s32 %v2070, %v2089
          %vm2095 = vc.u32 %v2070, %v2089
          %v2096 = vadd.s32 %v2092, 1
          %v2097 = vsel %vm2095, %v2096, %v2092
          %v2098 = vadd.s32 %v2093, %v2097
          %v2099 = vadd.s32 %v2098, 536870912
          %v2100 = vshrl.u32 %v2099, 30
          %v2101 = vshll.u32 %v2100, 30
          %v2102 = vsub.s32 %v2098, %v2101
          %vm2103 = vcmp.lt.s32.totalorder %v2102, 0
          %v2104 = vsub.s32 0, %v2102
          %v2105 = vsel %vm2103, %v2104, %v2102
          %v2106 = vclz %v2105
          %v2107 = vsub.s32 %v2106, 2
          %vm2108 = vcmp.gt.s32.totalorder 0, %v2107
          %v2109 = vsel %vm2108, 0, %v2107
          %v2110 = vsub.s32 32, %v2109
          %v2111 = vshll.u32 %v2102, %v2109
          %v2112 = vshrl.u32 %v2094, %v2110
          %v2113 = vor.u32 %v2111, %v2112
          %v2114 = vsub.s32 4294967266, %v2109
          %v2115 = vadd.s32 %v2114, 127
          %v2116 = vshll.u32 %v2115, 23
          %v2117 = vor.u32 4788187, %v2116
          %v2118 = vand.u32 2147483647, %v2117
          %v2120 = vcvt.s32.f32 %v2113
          %v2121 = vmul.f32 %v2120, %v2118
          %v2122 = vxor.u32 %v2121, 2147483648
          %v2123 = vsel %vm2002, %v2122, %v2121
          %v2124 = vsub.s32 4, %v2100
          %v2125 = vsel %vm2002, %v2124, %v2100
          %v2126 = vsel %vm2001, %v582, %v2123
          %v2127 = vsel %vm2001, 0, %v2125
          %v2128 = vmul.f32 %v2126, %v2126
          %v2129 = vmul.f32 %v2128, -0.001358992
          %v2130 = vadd.f32 %v2129, 0.041655596
          %v2131 = vmul.f32 %v2128, %v2130
          %v2132 = vadd.f32 %v2131, -0.4999988
          %v2133 = vmul.f32 %v2128, %v2132
          %v2134 = vadd.f32 1.0, %v2133
          %v2135 = vmul.f32 %v2126, %v2126
          %v2136 = vmul.f32 %v2135, -0.00019511016
          %v2137 = vadd.f32 %v2136, 0.008332121
          %v2138 = vmul.f32 %v2135, %v2137
          %v2139 = vadd.f32 %v2138, -0.16666654
          %v2140 = vmul.f32 %v2135, %v2139
          %v2141 = vadd.f32 %v2140, 1.0
          %v2142 = vmul.f32 %v2141, %v2126
          %vm2143 = vweird.f32 %v582
          %v2144 = vadd.s32 %v2127, 3
          %v2145 = vand.u32 %v2144, 3
          %vm2146 = vcmp.lt.s32.totalorder %v2145, 2
          %vm2147 = vcmp.eq.s32.totalorder %v2145, 0
          %v2148 = vxor.u32 %v2142, 2147483648
          %v2149 = vsel %vm2147, %v2134, %v2148
          %vm2150 = vcmp.eq.s32.totalorder %v2145, 2
          %v2151 = vxor.u32 %v2134, 2147483648
          %v2152 = vsel %vm2150, %v2151, %v2142
          %v2153 = vsel %vm2146, %v2149, %v2152
          %v2154 = vsel %vm2143, nan, %v2153
          %v2155 = vand.u32 2147483647, %v583
          %vm2156 = vcmp.le.f32.partialorder %v2155, 0.7853982
          %vm2157 = vcmp.lt.s32.totalorder %v583, 0
          %v2158 = vand.u32 %v583, 2139095040
          %v2159 = vshrl.u32 %v2158, 23
          %v2160 = vsub.s32 %v2159, 127
          %v2161 = vand.u32 2147483647, %v583
          %v2162 = vand.u32 %v2161, 8388607
          %v2163 = vor.u32 %v2162, 8388608
          %v2164 = vsub.s32 0, %v2163
          %v2165 = vadd.s32 %v2160, 1
          %vm2166 = vcmp.gt.s32.totalorder %v2165, 0
          %v2167 = vsel %vm2166, %v2165, 0
          %v2168 = vshrl.u32 %v2167, 5
          %v2169 = vand.u32 %v2167, 31
          %v2170 = vsub.s32 32, %v2169
          %v2171 = vshrl.u32 683565275, %v2170
          %v2172 = vshll.u32 683565275, %v2169
          %v2173 = vshrl.u32 2475754826, %v2170
          %v2174 = vor.u32 %v2172, %v2173
          %v2175 = vshll.u32 2475754826, %v2169
          %v2176 = vshrl.u32 2131351028, %v2170
          %v2177 = vor.u32 %v2175, %v2176
          %v2178 = vshll.u32 2131351028, %v2169
          %v2179 = vshrl.u32 2102212464, %v2170
          %v2180 = vor.u32 %v2178, %v2179
          %v2181 = vshll.u32 2102212464, %v2169
          %v2182 = vshrl.u32 920167782, %v2170
          %v2183 = vor.u32 %v2181, %v2182
          %v2184 = vshll.u32 920167782, %v2169
          %v2185 = vshrl.u32 1326507024, %v2170
          %v2186 = vor.u32 %v2184, %v2185
          %vm2187 = vcmp.lt.s32.totalorder %v2168, 1
          %vm2188 = vcmp.lt.s32.totalorder %v2168, 2
          %vm2189 = vcmp.lt.s32.totalorder %v2168, 3
          %vm2190 = vcmp.lt.s32.totalorder %v2168, 4
          %v2191 = vsel %vm2187, %v2171, %v2174
          %v2192 = vsel %vm2190, %v2180, 2102212464
          %v2193 = vsel %vm2189, %v2177, %v2192
          %v2194 = vsel %vm2188, %v2191, %v2193
          %v2195 = vsel %vm2187, %v2174, %v2177
          %v2196 = vsel %vm2190, %v2183, 920167782
          %v2197 = vsel %vm2189, %v2180, %v2196
          %v2198 = vsel %vm2188, %v2195, %v2197
          %v2199 = vsel %vm2187, %v2177, %v2180
          %v2200 = vsel %vm2190, %v2186, 1326507024
          %v2201 = vsel %vm2189, %v2183, %v2200
          %v2202 = vsel %vm2188, %v2199, %v2201
          %v2203 = vshll.u32 %v2163, 8
          %v2204 = vand.u32 %v2203, 65535
          %v2205 = vshrl.u32 %v2203, 16
          %v2206 = vand.u32 %v2202, 65535
          %v2207 = vshrl.u32 %v2202, 16
          %v2208 = vmul.u32 %v2204, %v2206
          %v2209 = vmul.u32 %v2204, %v2207
          %v2210 = vmul.u32 %v2205, %v2206
          %v2211 = vmul.u32 %v2205, %v2207
          %v2212 = vshll.u32 %v2209, 16
          %v2213 = vshrl.u32 %v2209, 16
          %v2214 = vshll.u32 %v2210, 16
          %v2215 = vshrl.u32 %v2210, 16
          %vm2216 = vc.u32 %v2208, %v2212
          %v2217 = vsel %vm2216, 1, 0
          %v2218 = vadd.s32 %v2208, %v2212
          %v2219 = vadd.s32 %v2211, %v2217
          %vm2220 = vc.u32 %v2218, %v2214
          %v2221 = vsel %vm2220, 1, 0
          %v2222 = vadd.s32 %v2218, %v2214
          %v2223 = vadd.s32 %v2219, %v2221
          %v2224 = vadd.s32 %v2223, %v2213
          %v2225 = vadd.s32 %v2224, %v2215
          %v2226 = vand.u32 %v2203, 65535
          %v2227 = vshrl.u32 %v2203, 16
          %v2228 = vand.u32 %v2198, 65535
          %v2229 = vshrl.u32 %v2198, 16
          %v2230 = vmul.u32 %v2226, %v2228
          %v2231 = vmul.u32 %v2226, %v2229
          %v2232 = vmul.u32 %v2227, %v2228
          %v2233 = vmul.u32 %v2227, %v2229
          %v2234 = vshll.u32 %v2231, 16
          %v2235 = vshrl.u32 %v2231, 16
          %v2236 = vshll.u32 %v2232, 16
          %v2237 = vshrl.u32 %v2232, 16
          %vm2238 = vc.u32 %v2230, %v2234
          %v2239 = vsel %vm2238, 1, 0
          %v2240 = vadd.s32 %v2230, %v2234
          %v2241 = vadd.s32 %v2233, %v2239
          %vm2242 = vc.u32 %v2240, %v2236
          %v2243 = vsel %vm2242, 1, 0
          %v2244 = vadd.s32 %v2240, %v2236
          %v2245 = vadd.s32 %v2241, %v2243
          %v2246 = vadd.s32 %v2245, %v2235
          %v2247 = vadd.s32 %v2246, %v2237
          %v2248 = vmul.u32 %v2203, %v2194
          %v2249 = vadd.s32 %v2225, %v2244
          %vm2250 = vc.u32 %v2225, %v2244
          %v2251 = vadd.s32 %v2247, 1
          %v2252 = vsel %vm2250, %v2251, %v2247
          %v2253 = vadd.s32 %v2248, %v2252
          %v2254 = vadd.s32 %v2253, 536870912
          %v2255 = vshrl.u32 %v2254, 30
          %v2256 = vshll.u32 %v2255, 30
          %v2257 = vsub.s32 %v2253, %v2256
          %vm2258 = vcmp.lt.s32.totalorder %v2257, 0
          %v2259 = vsub.s32 0, %v2257
          %v2260 = vsel %vm2258, %v2259, %v2257
          %v2261 = vclz %v2260
          %v2262 = vsub.s32 %v2261, 2
          %vm2263 = vcmp.gt.s32.totalorder 0, %v2262
          %v2264 = vsel %vm2263, 0, %v2262
          %v2265 = vsub.s32 32, %v2264
          %v2266 = vshll.u32 %v2257, %v2264
          %v2267 = vshrl.u32 %v2249, %v2265
          %v2268 = vor.u32 %v2266, %v2267
          %v2269 = vsub.s32 4294967266, %v2264
          %v2270 = vadd.s32 %v2269, 127
          %v2271 = vshll.u32 %v2270, 23
          %v2272 = vor.u32 4788187, %v2271
          %v2273 = vand.u32 2147483647, %v2272
          %v2275 = vcvt.s32.f32 %v2268
          %v2276 = vmul.f32 %v2275, %v2273
          %v2277 = vxor.u32 %v2276, 2147483648
          %v2278 = vsel %vm2157, %v2277, %v2276
          %v2279 = vsub.s32 4, %v2255
          %v2280 = vsel %vm2157, %v2279, %v2255
          %v2281 = vsel %vm2156, %v583, %v2278
          %v2282 = vsel %vm2156, 0, %v2280
          %v2283 = vmul.f32 %v2281, %v2281
          %v2284 = vmul.f32 %v2283, -0.001358992
          %v2285 = vadd.f32 %v2284, 0.041655596
          %v2286 = vmul.f32 %v2283, %v2285
          %v2287 = vadd.f32 %v2286, -0.4999988
          %v2288 = vmul.f32 %v2283, %v2287
          %v2289 = vadd.f32 1.0, %v2288
          %v2290 = vmul.f32 %v2281, %v2281
          %v2291 = vmul.f32 %v2290, -0.00019511016
          %v2292 = vadd.f32 %v2291, 0.008332121
          %v2293 = vmul.f32 %v2290, %v2292
          %v2294 = vadd.f32 %v2293, -0.16666654
          %v2295 = vmul.f32 %v2290, %v2294
          %v2296 = vadd.f32 %v2295, 1.0
          %v2297 = vmul.f32 %v2296, %v2281
          %vm2298 = vweird.f32 %v583
          %v2299 = vadd.s32 %v2282, 3
          %v2300 = vand.u32 %v2299, 3
          %vm2301 = vcmp.lt.s32.totalorder %v2300, 2
          %vm2302 = vcmp.eq.s32.totalorder %v2300, 0
          %v2303 = vxor.u32 %v2297, 2147483648
          %v2304 = vsel %vm2302, %v2289, %v2303
          %vm2305 = vcmp.eq.s32.totalorder %v2300, 2
          %v2306 = vxor.u32 %v2289, 2147483648
          %v2307 = vsel %vm2305, %v2306, %v2297
          %v2308 = vsel %vm2301, %v2304, %v2307
          %v2309 = vsel %vm2298, nan, %v2308
          %v2310 = vand.u32 2147483647, %v584
          %vm2311 = vcmp.le.f32.partialorder %v2310, 0.7853982
          %vm2312 = vcmp.lt.s32.totalorder %v584, 0
          %v2313 = vand.u32 %v584, 2139095040
          %v2314 = vshrl.u32 %v2313, 23
          %v2315 = vsub.s32 %v2314, 127
          %v2316 = vand.u32 2147483647, %v584
          %v2317 = vand.u32 %v2316, 8388607
          %v2318 = vor.u32 %v2317, 8388608
          %v2319 = vsub.s32 0, %v2318
          %v2320 = vadd.s32 %v2315, 1
          %vm2321 = vcmp.gt.s32.totalorder %v2320, 0
          %v2322 = vsel %vm2321, %v2320, 0
          %v2323 = vshrl.u32 %v2322, 5
          %v2324 = vand.u32 %v2322, 31
          %v2325 = vsub.s32 32, %v2324
          %v2326 = vshrl.u32 683565275, %v2325
          %v2327 = vshll.u32 683565275, %v2324
          %v2328 = vshrl.u32 2475754826, %v2325
          %v2329 = vor.u32 %v2327, %v2328
          %v2330 = vshll.u32 2475754826, %v2324
          %v2331 = vshrl.u32 2131351028, %v2325
          %v2332 = vor.u32 %v2330, %v2331
          %v2333 = vshll.u32 2131351028, %v2324
          %v2334 = vshrl.u32 2102212464, %v2325
          %v2335 = vor.u32 %v2333, %v2334
          %v2336 = vshll.u32 2102212464, %v2324
          %v2337 = vshrl.u32 920167782, %v2325
          %v2338 = vor.u32 %v2336, %v2337
          %v2339 = vshll.u32 920167782, %v2324
          %v2340 = vshrl.u32 1326507024, %v2325
          %v2341 = vor.u32 %v2339, %v2340
          %vm2342 = vcmp.lt.s32.totalorder %v2323, 1
          %vm2343 = vcmp.lt.s32.totalorder %v2323, 2
          %vm2344 = vcmp.lt.s32.totalorder %v2323, 3
          %vm2345 = vcmp.lt.s32.totalorder %v2323, 4
          %v2346 = vsel %vm2342, %v2326, %v2329
          %v2347 = vsel %vm2345, %v2335, 2102212464
          %v2348 = vsel %vm2344, %v2332, %v2347
          %v2349 = vsel %vm2343, %v2346, %v2348
          %v2350 = vsel %vm2342, %v2329, %v2332
          %v2351 = vsel %vm2345, %v2338, 920167782
          %v2352 = vsel %vm2344, %v2335, %v2351
          %v2353 = vsel %vm2343, %v2350, %v2352
          %v2354 = vsel %vm2342, %v2332, %v2335
          %v2355 = vsel %vm2345, %v2341, 1326507024
          %v2356 = vsel %vm2344, %v2338, %v2355
          %v2357 = vsel %vm2343, %v2354, %v2356
          %v2358 = vshll.u32 %v2318, 8
          %v2359 = vand.u32 %v2358, 65535
          %v2360 = vshrl.u32 %v2358, 16
          %v2361 = vand.u32 %v2357, 65535
          %v2362 = vshrl.u32 %v2357, 16
          %v2363 = vmul.u32 %v2359, %v2361
          %v2364 = vmul.u32 %v2359, %v2362
          %v2365 = vmul.u32 %v2360, %v2361
          %v2366 = vmul.u32 %v2360, %v2362
          %v2367 = vshll.u32 %v2364, 16
          %v2368 = vshrl.u32 %v2364, 16
          %v2369 = vshll.u32 %v2365, 16
          %v2370 = vshrl.u32 %v2365, 16
          %vm2371 = vc.u32 %v2363, %v2367
          %v2372 = vsel %vm2371, 1, 0
          %v2373 = vadd.s32 %v2363, %v2367
          %v2374 = vadd.s32 %v2366, %v2372
          %vm2375 = vc.u32 %v2373, %v2369
          %v2376 = vsel %vm2375, 1, 0
          %v2377 = vadd.s32 %v2373, %v2369
          %v2378 = vadd.s32 %v2374, %v2376
          %v2379 = vadd.s32 %v2378, %v2368
          %v2380 = vadd.s32 %v2379, %v2370
          %v2381 = vand.u32 %v2358, 65535
          %v2382 = vshrl.u32 %v2358, 16
          %v2383 = vand.u32 %v2353, 65535
          %v2384 = vshrl.u32 %v2353, 16
          %v2385 = vmul.u32 %v2381, %v2383
          %v2386 = vmul.u32 %v2381, %v2384
          %v2387 = vmul.u32 %v2382, %v2383
          %v2388 = vmul.u32 %v2382, %v2384
          %v2389 = vshll.u32 %v2386, 16
          %v2390 = vshrl.u32 %v2386, 16
          %v2391 = vshll.u32 %v2387, 16
          %v2392 = vshrl.u32 %v2387, 16
          %vm2393 = vc.u32 %v2385, %v2389
          %v2394 = vsel %vm2393, 1, 0
          %v2395 = vadd.s32 %v2385, %v2389
          %v2396 = vadd.s32 %v2388, %v2394
          %vm2397 = vc.u32 %v2395, %v2391
          %v2398 = vsel %vm2397, 1, 0
          %v2399 = vadd.s32 %v2395, %v2391
          %v2400 = vadd.s32 %v2396, %v2398
          %v2401 = vadd.s32 %v2400, %v2390
          %v2402 = vadd.s32 %v2401, %v2392
          %v2403 = vmul.u32 %v2358, %v2349
          %v2404 = vadd.s32 %v2380, %v2399
          %vm2405 = vc.u32 %v2380, %v2399
          %v2406 = vadd.s32 %v2402, 1
          %v2407 = vsel %vm2405, %v2406, %v2402
          %v2408 = vadd.s32 %v2403, %v2407
          %v2409 = vadd.s32 %v2408, 536870912
          %v2410 = vshrl.u32 %v2409, 30
          %v2411 = vshll.u32 %v2410, 30
          %v2412 = vsub.s32 %v2408, %v2411
          %vm2413 = vcmp.lt.s32.totalorder %v2412, 0
          %v2414 = vsub.s32 0, %v2412
          %v2415 = vsel %vm2413, %v2414, %v2412
          %v2416 = vclz %v2415
          %v2417 = vsub.s32 %v2416, 2
          %vm2418 = vcmp.gt.s32.totalorder 0, %v2417
          %v2419 = vsel %vm2418, 0, %v2417
          %v2420 = vsub.s32 32, %v2419
          %v2421 = vshll.u32 %v2412, %v2419
          %v2422 = vshrl.u32 %v2404, %v2420
          %v2423 = vor.u32 %v2421, %v2422
          %v2424 = vsub.s32 4294967266, %v2419
          %v2425 = vadd.s32 %v2424, 127
          %v2426 = vshll.u32 %v2425, 23
          %v2427 = vor.u32 4788187, %v2426
          %v2428 = vand.u32 2147483647, %v2427
          %v2430 = vcvt.s32.f32 %v2423
          %v2431 = vmul.f32 %v2430, %v2428
          %v2432 = vxor.u32 %v2431, 2147483648
          %v2433 = vsel %vm2312, %v2432, %v2431
          %v2434 = vsub.s32 4, %v2410
          %v2435 = vsel %vm2312, %v2434, %v2410
          %v2436 = vsel %vm2311, %v584, %v2433
          %v2437 = vsel %vm2311, 0, %v2435
          %v2438 = vmul.f32 %v2436, %v2436
          %v2439 = vmul.f32 %v2438, -0.001358992
          %v2440 = vadd.f32 %v2439, 0.041655596
          %v2441 = vmul.f32 %v2438, %v2440
          %v2442 = vadd.f32 %v2441, -0.4999988
          %v2443 = vmul.f32 %v2438, %v2442
          %v2444 = vadd.f32 1.0, %v2443
          %v2445 = vmul.f32 %v2436, %v2436
          %v2446 = vmul.f32 %v2445, -0.00019511016
          %v2447 = vadd.f32 %v2446, 0.008332121
          %v2448 = vmul.f32 %v2445, %v2447
          %v2449 = vadd.f32 %v2448, -0.16666654
          %v2450 = vmul.f32 %v2445, %v2449
          %v2451 = vadd.f32 %v2450, 1.0
          %v2452 = vmul.f32 %v2451, %v2436
          %vm2453 = vweird.f32 %v584
          %v2454 = vadd.s32 %v2437, 3
          %v2455 = vand.u32 %v2454, 3
          %vm2456 = vcmp.lt.s32.totalorder %v2455, 2
          %vm2457 = vcmp.eq.s32.totalorder %v2455, 0
          %v2458 = vxor.u32 %v2452, 2147483648
          %v2459 = vsel %vm2457, %v2444, %v2458
          %vm2460 = vcmp.eq.s32.totalorder %v2455, 2
          %v2461 = vxor.u32 %v2444, 2147483648
          %v2462 = vsel %vm2460, %v2461, %v2452
          %v2463 = vsel %vm2456, %v2459, %v2462
          %v2464 = vsel %vm2453, nan, %v2463
          %v2465 = vand.u32 2147483647, %v585
          %vm2466 = vcmp.le.f32.partialorder %v2465, 0.7853982
          %vm2467 = vcmp.lt.s32.totalorder %v585, 0
          %v2468 = vand.u32 %v585, 2139095040
          %v2469 = vshrl.u32 %v2468, 23
          %v2470 = vsub.s32 %v2469, 127
          %v2471 = vand.u32 2147483647, %v585
          %v2472 = vand.u32 %v2471, 8388607
          %v2473 = vor.u32 %v2472, 8388608
          %v2474 = vsub.s32 0, %v2473
          %v2475 = vadd.s32 %v2470, 1
          %vm2476 = vcmp.gt.s32.totalorder %v2475, 0
          %v2477 = vsel %vm2476, %v2475, 0
          %v2478 = vshrl.u32 %v2477, 5
          %v2479 = vand.u32 %v2477, 31
          %v2480 = vsub.s32 32, %v2479
          %v2481 = vshrl.u32 683565275, %v2480
          %v2482 = vshll.u32 683565275, %v2479
          %v2483 = vshrl.u32 2475754826, %v2480
          %v2484 = vor.u32 %v2482, %v2483
          %v2485 = vshll.u32 2475754826, %v2479
          %v2486 = vshrl.u32 2131351028, %v2480
          %v2487 = vor.u32 %v2485, %v2486
          %v2488 = vshll.u32 2131351028, %v2479
          %v2489 = vshrl.u32 2102212464, %v2480
          %v2490 = vor.u32 %v2488, %v2489
          %v2491 = vshll.u32 2102212464, %v2479
          %v2492 = vshrl.u32 920167782, %v2480
          %v2493 = vor.u32 %v2491, %v2492
          %v2494 = vshll.u32 920167782, %v2479
          %v2495 = vshrl.u32 1326507024, %v2480
          %v2496 = vor.u32 %v2494, %v2495
          %vm2497 = vcmp.lt.s32.totalorder %v2478, 1
          %vm2498 = vcmp.lt.s32.totalorder %v2478, 2
          %vm2499 = vcmp.lt.s32.totalorder %v2478, 3
          %vm2500 = vcmp.lt.s32.totalorder %v2478, 4
          %v2501 = vsel %vm2497, %v2481, %v2484
          %v2502 = vsel %vm2500, %v2490, 2102212464
          %v2503 = vsel %vm2499, %v2487, %v2502
          %v2504 = vsel %vm2498, %v2501, %v2503
          %v2505 = vsel %vm2497, %v2484, %v2487
          %v2506 = vsel %vm2500, %v2493, 920167782
          %v2507 = vsel %vm2499, %v2490, %v2506
          %v2508 = vsel %vm2498, %v2505, %v2507
          %v2509 = vsel %vm2497, %v2487, %v2490
          %v2510 = vsel %vm2500, %v2496, 1326507024
          %v2511 = vsel %vm2499, %v2493, %v2510
          %v2512 = vsel %vm2498, %v2509, %v2511
          %v2513 = vshll.u32 %v2473, 8
          %v2514 = vand.u32 %v2513, 65535
          %v2515 = vshrl.u32 %v2513, 16
          %v2516 = vand.u32 %v2512, 65535
          %v2517 = vshrl.u32 %v2512, 16
          %v2518 = vmul.u32 %v2514, %v2516
          %v2519 = vmul.u32 %v2514, %v2517
          %v2520 = vmul.u32 %v2515, %v2516
          %v2521 = vmul.u32 %v2515, %v2517
          %v2522 = vshll.u32 %v2519, 16
          %v2523 = vshrl.u32 %v2519, 16
          %v2524 = vshll.u32 %v2520, 16
          %v2525 = vshrl.u32 %v2520, 16
          %vm2526 = vc.u32 %v2518, %v2522
          %v2527 = vsel %vm2526, 1, 0
          %v2528 = vadd.s32 %v2518, %v2522
          %v2529 = vadd.s32 %v2521, %v2527
          %vm2530 = vc.u32 %v2528, %v2524
          %v2531 = vsel %vm2530, 1, 0
          %v2532 = vadd.s32 %v2528, %v2524
          %v2533 = vadd.s32 %v2529, %v2531
          %v2534 = vadd.s32 %v2533, %v2523
          %v2535 = vadd.s32 %v2534, %v2525
          %v2536 = vand.u32 %v2513, 65535
          %v2537 = vshrl.u32 %v2513, 16
          %v2538 = vand.u32 %v2508, 65535
          %v2539 = vshrl.u32 %v2508, 16
          %v2540 = vmul.u32 %v2536, %v2538
          %v2541 = vmul.u32 %v2536, %v2539
          %v2542 = vmul.u32 %v2537, %v2538
          %v2543 = vmul.u32 %v2537, %v2539
          %v2544 = vshll.u32 %v2541, 16
          %v2545 = vshrl.u32 %v2541, 16
          %v2546 = vshll.u32 %v2542, 16
          %v2547 = vshrl.u32 %v2542, 16
          %vm2548 = vc.u32 %v2540, %v2544
          %v2549 = vsel %vm2548, 1, 0
          %v2550 = vadd.s32 %v2540, %v2544
          %v2551 = vadd.s32 %v2543, %v2549
          %vm2552 = vc.u32 %v2550, %v2546
          %v2553 = vsel %vm2552, 1, 0
          %v2554 = vadd.s32 %v2550, %v2546
          %v2555 = vadd.s32 %v2551, %v2553
          %v2556 = vadd.s32 %v2555, %v2545
          %v2557 = vadd.s32 %v2556, %v2547
          %v2558 = vmul.u32 %v2513, %v2504
          %v2559 = vadd.s32 %v2535, %v2554
          %vm2560 = vc.u32 %v2535, %v2554
          %v2561 = vadd.s32 %v2557, 1
          %v2562 = vsel %vm2560, %v2561, %v2557
          %v2563 = vadd.s32 %v2558, %v2562
          %v2564 = vadd.s32 %v2563, 536870912
          %v2565 = vshrl.u32 %v2564, 30
          %v2566 = vshll.u32 %v2565, 30
          %v2567 = vsub.s32 %v2563, %v2566
          %vm2568 = vcmp.lt.s32.totalorder %v2567, 0
          %v2569 = vsub.s32 0, %v2567
          %v2570 = vsel %vm2568, %v2569, %v2567
          %v2571 = vclz %v2570
          %v2572 = vsub.s32 %v2571, 2
          %vm2573 = vcmp.gt.s32.totalorder 0, %v2572
          %v2574 = vsel %vm2573, 0, %v2572
          %v2575 = vsub.s32 32, %v2574
          %v2576 = vshll.u32 %v2567, %v2574
          %v2577 = vshrl.u32 %v2559, %v2575
          %v2578 = vor.u32 %v2576, %v2577
          %v2579 = vsub.s32 4294967266, %v2574
          %v2580 = vadd.s32 %v2579, 127
          %v2581 = vshll.u32 %v2580, 23
          %v2582 = vor.u32 4788187, %v2581
          %v2583 = vand.u32 2147483647, %v2582
          %v2585 = vcvt.s32.f32 %v2578
          %v2586 = vmul.f32 %v2585, %v2583
          %v2587 = vxor.u32 %v2586, 2147483648
          %v2588 = vsel %vm2467, %v2587, %v2586
          %v2589 = vsub.s32 4, %v2565
          %v2590 = vsel %vm2467, %v2589, %v2565
          %v2591 = vsel %vm2466, %v585, %v2588
          %v2592 = vsel %vm2466, 0, %v2590
          %v2593 = vmul.f32 %v2591, %v2591
          %v2594 = vmul.f32 %v2593, -0.001358992
          %v2595 = vadd.f32 %v2594, 0.041655596
          %v2596 = vmul.f32 %v2593, %v2595
          %v2597 = vadd.f32 %v2596, -0.4999988
          %v2598 = vmul.f32 %v2593, %v2597
          %v2599 = vadd.f32 1.0, %v2598
          %v2600 = vmul.f32 %v2591, %v2591
          %v2601 = vmul.f32 %v2600, -0.00019511016
          %v2602 = vadd.f32 %v2601, 0.008332121
          %v2603 = vmul.f32 %v2600, %v2602
          %v2604 = vadd.f32 %v2603, -0.16666654
          %v2605 = vmul.f32 %v2600, %v2604
          %v2606 = vadd.f32 %v2605, 1.0
          %v2607 = vmul.f32 %v2606, %v2591
          %vm2608 = vweird.f32 %v585
          %v2609 = vadd.s32 %v2592, 3
          %v2610 = vand.u32 %v2609, 3
          %vm2611 = vcmp.lt.s32.totalorder %v2610, 2
          %vm2612 = vcmp.eq.s32.totalorder %v2610, 0
          %v2613 = vxor.u32 %v2607, 2147483648
          %v2614 = vsel %vm2612, %v2599, %v2613
          %vm2615 = vcmp.eq.s32.totalorder %v2610, 2
          %v2616 = vxor.u32 %v2599, 2147483648
          %v2617 = vsel %vm2615, %v2616, %v2607
          %v2618 = vsel %vm2611, %v2614, %v2617
          %v2619 = vsel %vm2608, nan, %v2618
          %v2620 = vand.u32 2147483647, %v586
          %vm2621 = vcmp.le.f32.partialorder %v2620, 0.7853982
          %vm2622 = vcmp.lt.s32.totalorder %v586, 0
          %v2623 = vand.u32 %v586, 2139095040
          %v2624 = vshrl.u32 %v2623, 23
          %v2625 = vsub.s32 %v2624, 127
          %v2626 = vand.u32 2147483647, %v586
          %v2627 = vand.u32 %v2626, 8388607
          %v2628 = vor.u32 %v2627, 8388608
          %v2629 = vsub.s32 0, %v2628
          %v2630 = vadd.s32 %v2625, 1
          %vm2631 = vcmp.gt.s32.totalorder %v2630, 0
          %v2632 = vsel %vm2631, %v2630, 0
          %v2633 = vshrl.u32 %v2632, 5
          %v2634 = vand.u32 %v2632, 31
          %v2635 = vsub.s32 32, %v2634
          %v2636 = vshrl.u32 683565275, %v2635
          %v2637 = vshll.u32 683565275, %v2634
          %v2638 = vshrl.u32 2475754826, %v2635
          %v2639 = vor.u32 %v2637, %v2638
          %v2640 = vshll.u32 2475754826, %v2634
          %v2641 = vshrl.u32 2131351028, %v2635
          %v2642 = vor.u32 %v2640, %v2641
          %v2643 = vshll.u32 2131351028, %v2634
          %v2644 = vshrl.u32 2102212464, %v2635
          %v2645 = vor.u32 %v2643, %v2644
          %v2646 = vshll.u32 2102212464, %v2634
          %v2647 = vshrl.u32 920167782, %v2635
          %v2648 = vor.u32 %v2646, %v2647
          %v2649 = vshll.u32 920167782, %v2634
          %v2650 = vshrl.u32 1326507024, %v2635
          %v2651 = vor.u32 %v2649, %v2650
          %vm2652 = vcmp.lt.s32.totalorder %v2633, 1
          %vm2653 = vcmp.lt.s32.totalorder %v2633, 2
          %vm2654 = vcmp.lt.s32.totalorder %v2633, 3
          %vm2655 = vcmp.lt.s32.totalorder %v2633, 4
          %v2656 = vsel %vm2652, %v2636, %v2639
          %v2657 = vsel %vm2655, %v2645, 2102212464
          %v2658 = vsel %vm2654, %v2642, %v2657
          %v2659 = vsel %vm2653, %v2656, %v2658
          %v2660 = vsel %vm2652, %v2639, %v2642
          %v2661 = vsel %vm2655, %v2648, 920167782
          %v2662 = vsel %vm2654, %v2645, %v2661
          %v2663 = vsel %vm2653, %v2660, %v2662
          %v2664 = vsel %vm2652, %v2642, %v2645
          %v2665 = vsel %vm2655, %v2651, 1326507024
          %v2666 = vsel %vm2654, %v2648, %v2665
          %v2667 = vsel %vm2653, %v2664, %v2666
          %v2668 = vshll.u32 %v2628, 8
          %v2669 = vand.u32 %v2668, 65535
          %v2670 = vshrl.u32 %v2668, 16
          %v2671 = vand.u32 %v2667, 65535
          %v2672 = vshrl.u32 %v2667, 16
          %v2673 = vmul.u32 %v2669, %v2671
          %v2674 = vmul.u32 %v2669, %v2672
          %v2675 = vmul.u32 %v2670, %v2671
          %v2676 = vmul.u32 %v2670, %v2672
          %v2677 = vshll.u32 %v2674, 16
          %v2678 = vshrl.u32 %v2674, 16
          %v2679 = vshll.u32 %v2675, 16
          %v2680 = vshrl.u32 %v2675, 16
          %vm2681 = vc.u32 %v2673, %v2677
          %v2682 = vsel %vm2681, 1, 0
          %v2683 = vadd.s32 %v2673, %v2677
          %v2684 = vadd.s32 %v2676, %v2682
          %vm2685 = vc.u32 %v2683, %v2679
          %v2686 = vsel %vm2685, 1, 0
          %v2687 = vadd.s32 %v2683, %v2679
          %v2688 = vadd.s32 %v2684, %v2686
          %v2689 = vadd.s32 %v2688, %v2678
          %v2690 = vadd.s32 %v2689, %v2680
          %v2691 = vand.u32 %v2668, 65535
          %v2692 = vshrl.u32 %v2668, 16
          %v2693 = vand.u32 %v2663, 65535
          %v2694 = vshrl.u32 %v2663, 16
          %v2695 = vmul.u32 %v2691, %v2693
          %v2696 = vmul.u32 %v2691, %v2694
          %v2697 = vmul.u32 %v2692, %v2693
          %v2698 = vmul.u32 %v2692, %v2694
          %v2699 = vshll.u32 %v2696, 16
          %v2700 = vshrl.u32 %v2696, 16
          %v2701 = vshll.u32 %v2697, 16
          %v2702 = vshrl.u32 %v2697, 16
          %vm2703 = vc.u32 %v2695, %v2699
          %v2704 = vsel %vm2703, 1, 0
          %v2705 = vadd.s32 %v2695, %v2699
          %v2706 = vadd.s32 %v2698, %v2704
          %vm2707 = vc.u32 %v2705, %v2701
          %v2708 = vsel %vm2707, 1, 0
          %v2709 = vadd.s32 %v2705, %v2701
          %v2710 = vadd.s32 %v2706, %v2708
          %v2711 = vadd.s32 %v2710, %v2700
          %v2712 = vadd.s32 %v2711, %v2702
          %v2713 = vmul.u32 %v2668, %v2659
          %v2714 = vadd.s32 %v2690, %v2709
          %vm2715 = vc.u32 %v2690, %v2709
          %v2716 = vadd.s32 %v2712, 1
          %v2717 = vsel %vm2715, %v2716, %v2712
          %v2718 = vadd.s32 %v2713, %v2717
          %v2719 = vadd.s32 %v2718, 536870912
          %v2720 = vshrl.u32 %v2719, 30
          %v2721 = vshll.u32 %v2720, 30
          %v2722 = vsub.s32 %v2718, %v2721
          %vm2723 = vcmp.lt.s32.totalorder %v2722, 0
          %v2724 = vsub.s32 0, %v2722
          %v2725 = vsel %vm2723, %v2724, %v2722
          %v2726 = vclz %v2725
          %v2727 = vsub.s32 %v2726, 2
          %vm2728 = vcmp.gt.s32.totalorder 0, %v2727
          %v2729 = vsel %vm2728, 0, %v2727
          %v2730 = vsub.s32 32, %v2729
          %v2731 = vshll.u32 %v2722, %v2729
          %v2732 = vshrl.u32 %v2714, %v2730
          %v2733 = vor.u32 %v2731, %v2732
          %v2734 = vsub.s32 4294967266, %v2729
          %v2735 = vadd.s32 %v2734, 127
          %v2736 = vshll.u32 %v2735, 23
          %v2737 = vor.u32 4788187, %v2736
          %v2738 = vand.u32 2147483647, %v2737
          %v2740 = vcvt.s32.f32 %v2733
          %v2741 = vmul.f32 %v2740, %v2738
          %v2742 = vxor.u32 %v2741, 2147483648
          %v2743 = vsel %vm2622, %v2742, %v2741
          %v2744 = vsub.s32 4, %v2720
          %v2745 = vsel %vm2622, %v2744, %v2720
          %v2746 = vsel %vm2621, %v586, %v2743
          %v2747 = vsel %vm2621, 0, %v2745
          %v2748 = vmul.f32 %v2746, %v2746
          %v2749 = vmul.f32 %v2748, -0.001358992
          %v2750 = vadd.f32 %v2749, 0.041655596
          %v2751 = vmul.f32 %v2748, %v2750
          %v2752 = vadd.f32 %v2751, -0.4999988
          %v2753 = vmul.f32 %v2748, %v2752
          %v2754 = vadd.f32 1.0, %v2753
          %v2755 = vmul.f32 %v2746, %v2746
          %v2756 = vmul.f32 %v2755, -0.00019511016
          %v2757 = vadd.f32 %v2756, 0.008332121
          %v2758 = vmul.f32 %v2755, %v2757
          %v2759 = vadd.f32 %v2758, -0.16666654
          %v2760 = vmul.f32 %v2755, %v2759
          %v2761 = vadd.f32 %v2760, 1.0
          %v2762 = vmul.f32 %v2761, %v2746
          %vm2763 = vweird.f32 %v586
          %v2764 = vadd.s32 %v2747, 3
          %v2765 = vand.u32 %v2764, 3
          %vm2766 = vcmp.lt.s32.totalorder %v2765, 2
          %vm2767 = vcmp.eq.s32.totalorder %v2765, 0
          %v2768 = vxor.u32 %v2762, 2147483648
          %v2769 = vsel %vm2767, %v2754, %v2768
          %vm2770 = vcmp.eq.s32.totalorder %v2765, 2
          %v2771 = vxor.u32 %v2754, 2147483648
          %v2772 = vsel %vm2770, %v2771, %v2762
          %v2773 = vsel %vm2766, %v2769, %v2772
          %v2774 = vsel %vm2763, nan, %v2773
          %v2775 = vand.u32 2147483647, %v587
          %vm2776 = vcmp.le.f32.partialorder %v2775, 0.7853982
          %vm2777 = vcmp.lt.s32.totalorder %v587, 0
          %v2778 = vand.u32 %v587, 2139095040
          %v2779 = vshrl.u32 %v2778, 23
          %v2780 = vsub.s32 %v2779, 127
          %v2781 = vand.u32 2147483647, %v587
          %v2782 = vand.u32 %v2781, 8388607
          %v2783 = vor.u32 %v2782, 8388608
          %v2784 = vsub.s32 0, %v2783
          %v2785 = vadd.s32 %v2780, 1
          %vm2786 = vcmp.gt.s32.totalorder %v2785, 0
          %v2787 = vsel %vm2786, %v2785, 0
          %v2788 = vshrl.u32 %v2787, 5
          %v2789 = vand.u32 %v2787, 31
          %v2790 = vsub.s32 32, %v2789
          %v2791 = vshrl.u32 683565275, %v2790
          %v2792 = vshll.u32 683565275, %v2789
          %v2793 = vshrl.u32 2475754826, %v2790
          %v2794 = vor.u32 %v2792, %v2793
          %v2795 = vshll.u32 2475754826, %v2789
          %v2796 = vshrl.u32 2131351028, %v2790
          %v2797 = vor.u32 %v2795, %v2796
          %v2798 = vshll.u32 2131351028, %v2789
          %v2799 = vshrl.u32 2102212464, %v2790
          %v2800 = vor.u32 %v2798, %v2799
          %v2801 = vshll.u32 2102212464, %v2789
          %v2802 = vshrl.u32 920167782, %v2790
          %v2803 = vor.u32 %v2801, %v2802
          %v2804 = vshll.u32 920167782, %v2789
          %v2805 = vshrl.u32 1326507024, %v2790
          %v2806 = vor.u32 %v2804, %v2805
          %vm2807 = vcmp.lt.s32.totalorder %v2788, 1
          %vm2808 = vcmp.lt.s32.totalorder %v2788, 2
          %vm2809 = vcmp.lt.s32.totalorder %v2788, 3
          %vm2810 = vcmp.lt.s32.totalorder %v2788, 4
          %v2811 = vsel %vm2807, %v2791, %v2794
          %v2812 = vsel %vm2810, %v2800, 2102212464
          %v2813 = vsel %vm2809, %v2797, %v2812
          %v2814 = vsel %vm2808, %v2811, %v2813
          %v2815 = vsel %vm2807, %v2794, %v2797
          %v2816 = vsel %vm2810, %v2803, 920167782
          %v2817 = vsel %vm2809, %v2800, %v2816
          %v2818 = vsel %vm2808, %v2815, %v2817
          %v2819 = vsel %vm2807, %v2797, %v2800
          %v2820 = vsel %vm2810, %v2806, 1326507024
          %v2821 = vsel %vm2809, %v2803, %v2820
          %v2822 = vsel %vm2808, %v2819, %v2821
          %v2823 = vshll.u32 %v2783, 8
          %v2824 = vand.u32 %v2823, 65535
          %v2825 = vshrl.u32 %v2823, 16
          %v2826 = vand.u32 %v2822, 65535
          %v2827 = vshrl.u32 %v2822, 16
          %v2828 = vmul.u32 %v2824, %v2826
          %v2829 = vmul.u32 %v2824, %v2827
          %v2830 = vmul.u32 %v2825, %v2826
          %v2831 = vmul.u32 %v2825, %v2827
          %v2832 = vshll.u32 %v2829, 16
          %v2833 = vshrl.u32 %v2829, 16
          %v2834 = vshll.u32 %v2830, 16
          %v2835 = vshrl.u32 %v2830, 16
          %vm2836 = vc.u32 %v2828, %v2832
          %v2837 = vsel %vm2836, 1, 0
          %v2838 = vadd.s32 %v2828, %v2832
          %v2839 = vadd.s32 %v2831, %v2837
          %vm2840 = vc.u32 %v2838, %v2834
          %v2841 = vsel %vm2840, 1, 0
          %v2842 = vadd.s32 %v2838, %v2834
          %v2843 = vadd.s32 %v2839, %v2841
          %v2844 = vadd.s32 %v2843, %v2833
          %v2845 = vadd.s32 %v2844, %v2835
          %v2846 = vand.u32 %v2823, 65535
          %v2847 = vshrl.u32 %v2823, 16
          %v2848 = vand.u32 %v2818, 65535
          %v2849 = vshrl.u32 %v2818, 16
          %v2850 = vmul.u32 %v2846, %v2848
          %v2851 = vmul.u32 %v2846, %v2849
          %v2852 = vmul.u32 %v2847, %v2848
          %v2853 = vmul.u32 %v2847, %v2849
          %v2854 = vshll.u32 %v2851, 16
          %v2855 = vshrl.u32 %v2851, 16
          %v2856 = vshll.u32 %v2852, 16
          %v2857 = vshrl.u32 %v2852, 16
          %vm2858 = vc.u32 %v2850, %v2854
          %v2859 = vsel %vm2858, 1, 0
          %v2860 = vadd.s32 %v2850, %v2854
          %v2861 = vadd.s32 %v2853, %v2859
          %vm2862 = vc.u32 %v2860, %v2856
          %v2863 = vsel %vm2862, 1, 0
          %v2864 = vadd.s32 %v2860, %v2856
          %v2865 = vadd.s32 %v2861, %v2863
          %v2866 = vadd.s32 %v2865, %v2855
          %v2867 = vadd.s32 %v2866, %v2857
          %v2868 = vmul.u32 %v2823, %v2814
          %v2869 = vadd.s32 %v2845, %v2864
          %vm2870 = vc.u32 %v2845, %v2864
          %v2871 = vadd.s32 %v2867, 1
          %v2872 = vsel %vm2870, %v2871, %v2867
          %v2873 = vadd.s32 %v2868, %v2872
          %v2874 = vadd.s32 %v2873, 536870912
          %v2875 = vshrl.u32 %v2874, 30
          %v2876 = vshll.u32 %v2875, 30
          %v2877 = vsub.s32 %v2873, %v2876
          %vm2878 = vcmp.lt.s32.totalorder %v2877, 0
          %v2879 = vsub.s32 0, %v2877
          %v2880 = vsel %vm2878, %v2879, %v2877
          %v2881 = vclz %v2880
          %v2882 = vsub.s32 %v2881, 2
          %vm2883 = vcmp.gt.s32.totalorder 0, %v2882
          %v2884 = vsel %vm2883, 0, %v2882
          %v2885 = vsub.s32 32, %v2884
          %v2886 = vshll.u32 %v2877, %v2884
          %v2887 = vshrl.u32 %v2869, %v2885
          %v2888 = vor.u32 %v2886, %v2887
          %v2889 = vsub.s32 4294967266, %v2884
          %v2890 = vadd.s32 %v2889, 127
          %v2891 = vshll.u32 %v2890, 23
          %v2892 = vor.u32 4788187, %v2891
          %v2893 = vand.u32 2147483647, %v2892
          %v2895 = vcvt.s32.f32 %v2888
          %v2896 = vmul.f32 %v2895, %v2893
          %v2897 = vxor.u32 %v2896, 2147483648
          %v2898 = vsel %vm2777, %v2897, %v2896
          %v2899 = vsub.s32 4, %v2875
          %v2900 = vsel %vm2777, %v2899, %v2875
          %v2901 = vsel %vm2776, %v587, %v2898
          %v2902 = vsel %vm2776, 0, %v2900
          %v2903 = vmul.f32 %v2901, %v2901
          %v2904 = vmul.f32 %v2903, -0.001358992
          %v2905 = vadd.f32 %v2904, 0.041655596
          %v2906 = vmul.f32 %v2903, %v2905
          %v2907 = vadd.f32 %v2906, -0.4999988
          %v2908 = vmul.f32 %v2903, %v2907
          %v2909 = vadd.f32 1.0, %v2908
          %v2910 = vmul.f32 %v2901, %v2901
          %v2911 = vmul.f32 %v2910, -0.00019511016
          %v2912 = vadd.f32 %v2911, 0.008332121
          %v2913 = vmul.f32 %v2910, %v2912
          %v2914 = vadd.f32 %v2913, -0.16666654
          %v2915 = vmul.f32 %v2910, %v2914
          %v2916 = vadd.f32 %v2915, 1.0
          %v2917 = vmul.f32 %v2916, %v2901
          %vm2918 = vweird.f32 %v587
          %v2919 = vadd.s32 %v2902, 3
          %v2920 = vand.u32 %v2919, 3
          %vm2921 = vcmp.lt.s32.totalorder %v2920, 2
          %vm2922 = vcmp.eq.s32.totalorder %v2920, 0
          %v2923 = vxor.u32 %v2917, 2147483648
          %v2924 = vsel %vm2922, %v2909, %v2923
          %vm2925 = vcmp.eq.s32.totalorder %v2920, 2
          %v2926 = vxor.u32 %v2909, 2147483648
          %v2927 = vsel %vm2925, %v2926, %v2917
          %v2928 = vsel %vm2921, %v2924, %v2927
          %v2929 = vsel %vm2918, nan, %v2928
          %v2930 = vand.u32 2147483647, %v588
          %vm2931 = vcmp.le.f32.partialorder %v2930, 0.7853982
          %vm2932 = vcmp.lt.s32.totalorder %v588, 0
          %v2933 = vand.u32 %v588, 2139095040
          %v2934 = vshrl.u32 %v2933, 23
          %v2935 = vsub.s32 %v2934, 127
          %v2936 = vand.u32 2147483647, %v588
          %v2937 = vand.u32 %v2936, 8388607
          %v2938 = vor.u32 %v2937, 8388608
          %v2939 = vsub.s32 0, %v2938
          %v2940 = vadd.s32 %v2935, 1
          %vm2941 = vcmp.gt.s32.totalorder %v2940, 0
          %v2942 = vsel %vm2941, %v2940, 0
          %v2943 = vshrl.u32 %v2942, 5
          %v2944 = vand.u32 %v2942, 31
          %v2945 = vsub.s32 32, %v2944
          %v2946 = vshrl.u32 683565275, %v2945
          %v2947 = vshll.u32 683565275, %v2944
          %v2948 = vshrl.u32 2475754826, %v2945
          %v2949 = vor.u32 %v2947, %v2948
          %v2950 = vshll.u32 2475754826, %v2944
          %v2951 = vshrl.u32 2131351028, %v2945
          %v2952 = vor.u32 %v2950, %v2951
          %v2953 = vshll.u32 2131351028, %v2944
          %v2954 = vshrl.u32 2102212464, %v2945
          %v2955 = vor.u32 %v2953, %v2954
          %v2956 = vshll.u32 2102212464, %v2944
          %v2957 = vshrl.u32 920167782, %v2945
          %v2958 = vor.u32 %v2956, %v2957
          %v2959 = vshll.u32 920167782, %v2944
          %v2960 = vshrl.u32 1326507024, %v2945
          %v2961 = vor.u32 %v2959, %v2960
          %vm2962 = vcmp.lt.s32.totalorder %v2943, 1
          %vm2963 = vcmp.lt.s32.totalorder %v2943, 2
          %vm2964 = vcmp.lt.s32.totalorder %v2943, 3
          %vm2965 = vcmp.lt.s32.totalorder %v2943, 4
          %v2966 = vsel %vm2962, %v2946, %v2949
          %v2967 = vsel %vm2965, %v2955, 2102212464
          %v2968 = vsel %vm2964, %v2952, %v2967
          %v2969 = vsel %vm2963, %v2966, %v2968
          %v2970 = vsel %vm2962, %v2949, %v2952
          %v2971 = vsel %vm2965, %v2958, 920167782
          %v2972 = vsel %vm2964, %v2955, %v2971
          %v2973 = vsel %vm2963, %v2970, %v2972
          %v2974 = vsel %vm2962, %v2952, %v2955
          %v2975 = vsel %vm2965, %v2961, 1326507024
          %v2976 = vsel %vm2964, %v2958, %v2975
          %v2977 = vsel %vm2963, %v2974, %v2976
          %v2978 = vshll.u32 %v2938, 8
          %v2979 = vand.u32 %v2978, 65535
          %v2980 = vshrl.u32 %v2978, 16
          %v2981 = vand.u32 %v2977, 65535
          %v2982 = vshrl.u32 %v2977, 16
          %v2983 = vmul.u32 %v2979, %v2981
          %v2984 = vmul.u32 %v2979, %v2982
          %v2985 = vmul.u32 %v2980, %v2981
          %v2986 = vmul.u32 %v2980, %v2982
          %v2987 = vshll.u32 %v2984, 16
          %v2988 = vshrl.u32 %v2984, 16
          %v2989 = vshll.u32 %v2985, 16
          %v2990 = vshrl.u32 %v2985, 16
          %vm2991 = vc.u32 %v2983, %v2987
          %v2992 = vsel %vm2991, 1, 0
          %v2993 = vadd.s32 %v2983, %v2987
          %v2994 = vadd.s32 %v2986, %v2992
          %vm2995 = vc.u32 %v2993, %v2989
          %v2996 = vsel %vm2995, 1, 0
          %v2997 = vadd.s32 %v2993, %v2989
          %v2998 = vadd.s32 %v2994, %v2996
          %v2999 = vadd.s32 %v2998, %v2988
          %v3000 = vadd.s32 %v2999, %v2990
          %v3001 = vand.u32 %v2978, 65535
          %v3002 = vshrl.u32 %v2978, 16
          %v3003 = vand.u32 %v2973, 65535
          %v3004 = vshrl.u32 %v2973, 16
          %v3005 = vmul.u32 %v3001, %v3003
          %v3006 = vmul.u32 %v3001, %v3004
          %v3007 = vmul.u32 %v3002, %v3003
          %v3008 = vmul.u32 %v3002, %v3004
          %v3009 = vshll.u32 %v3006, 16
          %v3010 = vshrl.u32 %v3006, 16
          %v3011 = vshll.u32 %v3007, 16
          %v3012 = vshrl.u32 %v3007, 16
          %vm3013 = vc.u32 %v3005, %v3009
          %v3014 = vsel %vm3013, 1, 0
          %v3015 = vadd.s32 %v3005, %v3009
          %v3016 = vadd.s32 %v3008, %v3014
          %vm3017 = vc.u32 %v3015, %v3011
          %v3018 = vsel %vm3017, 1, 0
          %v3019 = vadd.s32 %v3015, %v3011
          %v3020 = vadd.s32 %v3016, %v3018
          %v3021 = vadd.s32 %v3020, %v3010
          %v3022 = vadd.s32 %v3021, %v3012
          %v3023 = vmul.u32 %v2978, %v2969
          %v3024 = vadd.s32 %v3000, %v3019
          %vm3025 = vc.u32 %v3000, %v3019
          %v3026 = vadd.s32 %v3022, 1
          %v3027 = vsel %vm3025, %v3026, %v3022
          %v3028 = vadd.s32 %v3023, %v3027
          %v3029 = vadd.s32 %v3028, 536870912
          %v3030 = vshrl.u32 %v3029, 30
          %v3031 = vshll.u32 %v3030, 30
          %v3032 = vsub.s32 %v3028, %v3031
          %vm3033 = vcmp.lt.s32.totalorder %v3032, 0
          %v3034 = vsub.s32 0, %v3032
          %v3035 = vsel %vm3033, %v3034, %v3032
          %v3036 = vclz %v3035
          %v3037 = vsub.s32 %v3036, 2
          %vm3038 = vcmp.gt.s32.totalorder 0, %v3037
          %v3039 = vsel %vm3038, 0, %v3037
          %v3040 = vsub.s32 32, %v3039
          %v3041 = vshll.u32 %v3032, %v3039
          %v3042 = vshrl.u32 %v3024, %v3040
          %v3043 = vor.u32 %v3041, %v3042
          %v3044 = vsub.s32 4294967266, %v3039
          %v3045 = vadd.s32 %v3044, 127
          %v3046 = vshll.u32 %v3045, 23
          %v3047 = vor.u32 4788187, %v3046
          %v3048 = vand.u32 2147483647, %v3047
          %v3050 = vcvt.s32.f32 %v3043
          %v3051 = vmul.f32 %v3050, %v3048
          %v3052 = vxor.u32 %v3051, 2147483648
          %v3053 = vsel %vm2932, %v3052, %v3051
          %v3054 = vsub.s32 4, %v3030
          %v3055 = vsel %vm2932, %v3054, %v3030
          %v3056 = vsel %vm2931, %v588, %v3053
          %v3057 = vsel %vm2931, 0, %v3055
          %v3058 = vmul.f32 %v3056, %v3056
          %v3059 = vmul.f32 %v3058, -0.001358992
          %v3060 = vadd.f32 %v3059, 0.041655596
          %v3061 = vmul.f32 %v3058, %v3060
          %v3062 = vadd.f32 %v3061, -0.4999988
          %v3063 = vmul.f32 %v3058, %v3062
          %v3064 = vadd.f32 1.0, %v3063
          %v3065 = vmul.f32 %v3056, %v3056
          %v3066 = vmul.f32 %v3065, -0.00019511016
          %v3067 = vadd.f32 %v3066, 0.008332121
          %v3068 = vmul.f32 %v3065, %v3067
          %v3069 = vadd.f32 %v3068, -0.16666654
          %v3070 = vmul.f32 %v3065, %v3069
          %v3071 = vadd.f32 %v3070, 1.0
          %v3072 = vmul.f32 %v3071, %v3056
          %vm3073 = vweird.f32 %v588
          %v3074 = vadd.s32 %v3057, 3
          %v3075 = vand.u32 %v3074, 3
          %vm3076 = vcmp.lt.s32.totalorder %v3075, 2
          %vm3077 = vcmp.eq.s32.totalorder %v3075, 0
          %v3078 = vxor.u32 %v3072, 2147483648
          %v3079 = vsel %vm3077, %v3064, %v3078
          %vm3080 = vcmp.eq.s32.totalorder %v3075, 2
          %v3081 = vxor.u32 %v3064, 2147483648
          %v3082 = vsel %vm3080, %v3081, %v3072
          %v3083 = vsel %vm3076, %v3079, %v3082
          %v3084 = vsel %vm3073, nan, %v3083
          %v3085 = vand.u32 2147483647, %v589
          %vm3086 = vcmp.le.f32.partialorder %v3085, 0.7853982
          %vm3087 = vcmp.lt.s32.totalorder %v589, 0
          %v3088 = vand.u32 %v589, 2139095040
          %v3089 = vshrl.u32 %v3088, 23
          %v3090 = vsub.s32 %v3089, 127
          %v3091 = vand.u32 2147483647, %v589
          %v3092 = vand.u32 %v3091, 8388607
          %v3093 = vor.u32 %v3092, 8388608
          %v3094 = vsub.s32 0, %v3093
          %v3095 = vadd.s32 %v3090, 1
          %vm3096 = vcmp.gt.s32.totalorder %v3095, 0
          %v3097 = vsel %vm3096, %v3095, 0
          %v3098 = vshrl.u32 %v3097, 5
          %v3099 = vand.u32 %v3097, 31
          %v3100 = vsub.s32 32, %v3099
          %v3101 = vshrl.u32 683565275, %v3100
          %v3102 = vshll.u32 683565275, %v3099
          %v3103 = vshrl.u32 2475754826, %v3100
          %v3104 = vor.u32 %v3102, %v3103
          %v3105 = vshll.u32 2475754826, %v3099
          %v3106 = vshrl.u32 2131351028, %v3100
          %v3107 = vor.u32 %v3105, %v3106
          %v3108 = vshll.u32 2131351028, %v3099
          %v3109 = vshrl.u32 2102212464, %v3100
          %v3110 = vor.u32 %v3108, %v3109
          %v3111 = vshll.u32 2102212464, %v3099
          %v3112 = vshrl.u32 920167782, %v3100
          %v3113 = vor.u32 %v3111, %v3112
          %v3114 = vshll.u32 920167782, %v3099
          %v3115 = vshrl.u32 1326507024, %v3100
          %v3116 = vor.u32 %v3114, %v3115
          %vm3117 = vcmp.lt.s32.totalorder %v3098, 1
          %vm3118 = vcmp.lt.s32.totalorder %v3098, 2
          %vm3119 = vcmp.lt.s32.totalorder %v3098, 3
          %vm3120 = vcmp.lt.s32.totalorder %v3098, 4
          %v3121 = vsel %vm3117, %v3101, %v3104
          %v3122 = vsel %vm3120, %v3110, 2102212464
          %v3123 = vsel %vm3119, %v3107, %v3122
          %v3124 = vsel %vm3118, %v3121, %v3123
          %v3125 = vsel %vm3117, %v3104, %v3107
          %v3126 = vsel %vm3120, %v3113, 920167782
          %v3127 = vsel %vm3119, %v3110, %v3126
          %v3128 = vsel %vm3118, %v3125, %v3127
          %v3129 = vsel %vm3117, %v3107, %v3110
          %v3130 = vsel %vm3120, %v3116, 1326507024
          %v3131 = vsel %vm3119, %v3113, %v3130
          %v3132 = vsel %vm3118, %v3129, %v3131
          %v3133 = vshll.u32 %v3093, 8
          %v3134 = vand.u32 %v3133, 65535
          %v3135 = vshrl.u32 %v3133, 16
          %v3136 = vand.u32 %v3132, 65535
          %v3137 = vshrl.u32 %v3132, 16
          %v3138 = vmul.u32 %v3134, %v3136
          %v3139 = vmul.u32 %v3134, %v3137
          %v3140 = vmul.u32 %v3135, %v3136
          %v3141 = vmul.u32 %v3135, %v3137
          %v3142 = vshll.u32 %v3139, 16
          %v3143 = vshrl.u32 %v3139, 16
          %v3144 = vshll.u32 %v3140, 16
          %v3145 = vshrl.u32 %v3140, 16
          %vm3146 = vc.u32 %v3138, %v3142
          %v3147 = vsel %vm3146, 1, 0
          %v3148 = vadd.s32 %v3138, %v3142
          %v3149 = vadd.s32 %v3141, %v3147
          %vm3150 = vc.u32 %v3148, %v3144
          %v3151 = vsel %vm3150, 1, 0
          %v3152 = vadd.s32 %v3148, %v3144
          %v3153 = vadd.s32 %v3149, %v3151
          %v3154 = vadd.s32 %v3153, %v3143
          %v3155 = vadd.s32 %v3154, %v3145
          %v3156 = vand.u32 %v3133, 65535
          %v3157 = vshrl.u32 %v3133, 16
          %v3158 = vand.u32 %v3128, 65535
          %v3159 = vshrl.u32 %v3128, 16
          %v3160 = vmul.u32 %v3156, %v3158
          %v3161 = vmul.u32 %v3156, %v3159
          %v3162 = vmul.u32 %v3157, %v3158
          %v3163 = vmul.u32 %v3157, %v3159
          %v3164 = vshll.u32 %v3161, 16
          %v3165 = vshrl.u32 %v3161, 16
          %v3166 = vshll.u32 %v3162, 16
          %v3167 = vshrl.u32 %v3162, 16
          %vm3168 = vc.u32 %v3160, %v3164
          %v3169 = vsel %vm3168, 1, 0
          %v3170 = vadd.s32 %v3160, %v3164
          %v3171 = vadd.s32 %v3163, %v3169
          %vm3172 = vc.u32 %v3170, %v3166
          %v3173 = vsel %vm3172, 1, 0
          %v3174 = vadd.s32 %v3170, %v3166
          %v3175 = vadd.s32 %v3171, %v3173
          %v3176 = vadd.s32 %v3175, %v3165
          %v3177 = vadd.s32 %v3176, %v3167
          %v3178 = vmul.u32 %v3133, %v3124
          %v3179 = vadd.s32 %v3155, %v3174
          %vm3180 = vc.u32 %v3155, %v3174
          %v3181 = vadd.s32 %v3177, 1
          %v3182 = vsel %vm3180, %v3181, %v3177
          %v3183 = vadd.s32 %v3178, %v3182
          %v3184 = vadd.s32 %v3183, 536870912
          %v3185 = vshrl.u32 %v3184, 30
          %v3186 = vshll.u32 %v3185, 30
          %v3187 = vsub.s32 %v3183, %v3186
          %vm3188 = vcmp.lt.s32.totalorder %v3187, 0
          %v3189 = vsub.s32 0, %v3187
          %v3190 = vsel %vm3188, %v3189, %v3187
          %v3191 = vclz %v3190
          %v3192 = vsub.s32 %v3191, 2
          %vm3193 = vcmp.gt.s32.totalorder 0, %v3192
          %v3194 = vsel %vm3193, 0, %v3192
          %v3195 = vsub.s32 32, %v3194
          %v3196 = vshll.u32 %v3187, %v3194
          %v3197 = vshrl.u32 %v3179, %v3195
          %v3198 = vor.u32 %v3196, %v3197
          %v3199 = vsub.s32 4294967266, %v3194
          %v3200 = vadd.s32 %v3199, 127
          %v3201 = vshll.u32 %v3200, 23
          %v3202 = vor.u32 4788187, %v3201
          %v3203 = vand.u32 2147483647, %v3202
          %v3205 = vcvt.s32.f32 %v3198
          %v3206 = vmul.f32 %v3205, %v3203
          %v3207 = vxor.u32 %v3206, 2147483648
          %v3208 = vsel %vm3087, %v3207, %v3206
          %v3209 = vsub.s32 4, %v3185
          %v3210 = vsel %vm3087, %v3209, %v3185
          %v3211 = vsel %vm3086, %v589, %v3208
          %v3212 = vsel %vm3086, 0, %v3210
          %v3213 = vmul.f32 %v3211, %v3211
          %v3214 = vmul.f32 %v3213, -0.001358992
          %v3215 = vadd.f32 %v3214, 0.041655596
          %v3216 = vmul.f32 %v3213, %v3215
          %v3217 = vadd.f32 %v3216, -0.4999988
          %v3218 = vmul.f32 %v3213, %v3217
          %v3219 = vadd.f32 1.0, %v3218
          %v3220 = vmul.f32 %v3211, %v3211
          %v3221 = vmul.f32 %v3220, -0.00019511016
          %v3222 = vadd.f32 %v3221, 0.008332121
          %v3223 = vmul.f32 %v3220, %v3222
          %v3224 = vadd.f32 %v3223, -0.16666654
          %v3225 = vmul.f32 %v3220, %v3224
          %v3226 = vadd.f32 %v3225, 1.0
          %v3227 = vmul.f32 %v3226, %v3211
          %vm3228 = vweird.f32 %v589
          %v3229 = vadd.s32 %v3212, 3
          %v3230 = vand.u32 %v3229, 3
          %vm3231 = vcmp.lt.s32.totalorder %v3230, 2
          %vm3232 = vcmp.eq.s32.totalorder %v3230, 0
          %v3233 = vxor.u32 %v3227, 2147483648
          %v3234 = vsel %vm3232, %v3219, %v3233
          %vm3235 = vcmp.eq.s32.totalorder %v3230, 2
          %v3236 = vxor.u32 %v3219, 2147483648
          %v3237 = vsel %vm3235, %v3236, %v3227
          %v3238 = vsel %vm3231, %v3234, %v3237
          %v3239 = vsel %vm3228, nan, %v3238
          %v3240 = vand.u32 2147483647, %v590
          %vm3241 = vcmp.le.f32.partialorder %v3240, 0.7853982
          %vm3242 = vcmp.lt.s32.totalorder %v590, 0
          %v3243 = vand.u32 %v590, 2139095040
          %v3244 = vshrl.u32 %v3243, 23
          %v3245 = vsub.s32 %v3244, 127
          %v3246 = vand.u32 2147483647, %v590
          %v3247 = vand.u32 %v3246, 8388607
          %v3248 = vor.u32 %v3247, 8388608
          %v3249 = vsub.s32 0, %v3248
          %v3250 = vadd.s32 %v3245, 1
          %vm3251 = vcmp.gt.s32.totalorder %v3250, 0
          %v3252 = vsel %vm3251, %v3250, 0
          %v3253 = vshrl.u32 %v3252, 5
          %v3254 = vand.u32 %v3252, 31
          %v3255 = vsub.s32 32, %v3254
          %v3256 = vshrl.u32 683565275, %v3255
          %v3257 = vshll.u32 683565275, %v3254
          %v3258 = vshrl.u32 2475754826, %v3255
          %v3259 = vor.u32 %v3257, %v3258
          %v3260 = vshll.u32 2475754826, %v3254
          %v3261 = vshrl.u32 2131351028, %v3255
          %v3262 = vor.u32 %v3260, %v3261
          %v3263 = vshll.u32 2131351028, %v3254
          %v3264 = vshrl.u32 2102212464, %v3255
          %v3265 = vor.u32 %v3263, %v3264
          %v3266 = vshll.u32 2102212464, %v3254
          %v3267 = vshrl.u32 920167782, %v3255
          %v3268 = vor.u32 %v3266, %v3267
          %v3269 = vshll.u32 920167782, %v3254
          %v3270 = vshrl.u32 1326507024, %v3255
          %v3271 = vor.u32 %v3269, %v3270
          %vm3272 = vcmp.lt.s32.totalorder %v3253, 1
          %vm3273 = vcmp.lt.s32.totalorder %v3253, 2
          %vm3274 = vcmp.lt.s32.totalorder %v3253, 3
          %vm3275 = vcmp.lt.s32.totalorder %v3253, 4
          %v3276 = vsel %vm3272, %v3256, %v3259
          %v3277 = vsel %vm3275, %v3265, 2102212464
          %v3278 = vsel %vm3274, %v3262, %v3277
          %v3279 = vsel %vm3273, %v3276, %v3278
          %v3280 = vsel %vm3272, %v3259, %v3262
          %v3281 = vsel %vm3275, %v3268, 920167782
          %v3282 = vsel %vm3274, %v3265, %v3281
          %v3283 = vsel %vm3273, %v3280, %v3282
          %v3284 = vsel %vm3272, %v3262, %v3265
          %v3285 = vsel %vm3275, %v3271, 1326507024
          %v3286 = vsel %vm3274, %v3268, %v3285
          %v3287 = vsel %vm3273, %v3284, %v3286
          %v3288 = vshll.u32 %v3248, 8
          %v3289 = vand.u32 %v3288, 65535
          %v3290 = vshrl.u32 %v3288, 16
          %v3291 = vand.u32 %v3287, 65535
          %v3292 = vshrl.u32 %v3287, 16
          %v3293 = vmul.u32 %v3289, %v3291
          %v3294 = vmul.u32 %v3289, %v3292
          %v3295 = vmul.u32 %v3290, %v3291
          %v3296 = vmul.u32 %v3290, %v3292
          %v3297 = vshll.u32 %v3294, 16
          %v3298 = vshrl.u32 %v3294, 16
          %v3299 = vshll.u32 %v3295, 16
          %v3300 = vshrl.u32 %v3295, 16
          %vm3301 = vc.u32 %v3293, %v3297
          %v3302 = vsel %vm3301, 1, 0
          %v3303 = vadd.s32 %v3293, %v3297
          %v3304 = vadd.s32 %v3296, %v3302
          %vm3305 = vc.u32 %v3303, %v3299
          %v3306 = vsel %vm3305, 1, 0
          %v3307 = vadd.s32 %v3303, %v3299
          %v3308 = vadd.s32 %v3304, %v3306
          %v3309 = vadd.s32 %v3308, %v3298
          %v3310 = vadd.s32 %v3309, %v3300
          %v3311 = vand.u32 %v3288, 65535
          %v3312 = vshrl.u32 %v3288, 16
          %v3313 = vand.u32 %v3283, 65535
          %v3314 = vshrl.u32 %v3283, 16
          %v3315 = vmul.u32 %v3311, %v3313
          %v3316 = vmul.u32 %v3311, %v3314
          %v3317 = vmul.u32 %v3312, %v3313
          %v3318 = vmul.u32 %v3312, %v3314
          %v3319 = vshll.u32 %v3316, 16
          %v3320 = vshrl.u32 %v3316, 16
          %v3321 = vshll.u32 %v3317, 16
          %v3322 = vshrl.u32 %v3317, 16
          %vm3323 = vc.u32 %v3315, %v3319
          %v3324 = vsel %vm3323, 1, 0
          %v3325 = vadd.s32 %v3315, %v3319
          %v3326 = vadd.s32 %v3318, %v3324
          %vm3327 = vc.u32 %v3325, %v3321
          %v3328 = vsel %vm3327, 1, 0
          %v3329 = vadd.s32 %v3325, %v3321
          %v3330 = vadd.s32 %v3326, %v3328
          %v3331 = vadd.s32 %v3330, %v3320
          %v3332 = vadd.s32 %v3331, %v3322
          %v3333 = vmul.u32 %v3288, %v3279
          %v3334 = vadd.s32 %v3310, %v3329
          %vm3335 = vc.u32 %v3310, %v3329
          %v3336 = vadd.s32 %v3332, 1
          %v3337 = vsel %vm3335, %v3336, %v3332
          %v3338 = vadd.s32 %v3333, %v3337
          %v3339 = vadd.s32 %v3338, 536870912
          %v3340 = vshrl.u32 %v3339, 30
          %v3341 = vshll.u32 %v3340, 30
          %v3342 = vsub.s32 %v3338, %v3341
          %vm3343 = vcmp.lt.s32.totalorder %v3342, 0
          %v3344 = vsub.s32 0, %v3342
          %v3345 = vsel %vm3343, %v3344, %v3342
          %v3346 = vclz %v3345
          %v3347 = vsub.s32 %v3346, 2
          %vm3348 = vcmp.gt.s32.totalorder 0, %v3347
          %v3349 = vsel %vm3348, 0, %v3347
          %v3350 = vsub.s32 32, %v3349
          %v3351 = vshll.u32 %v3342, %v3349
          %v3352 = vshrl.u32 %v3334, %v3350
          %v3353 = vor.u32 %v3351, %v3352
          %v3354 = vsub.s32 4294967266, %v3349
          %v3355 = vadd.s32 %v3354, 127
          %v3356 = vshll.u32 %v3355, 23
          %v3357 = vor.u32 4788187, %v3356
          %v3358 = vand.u32 2147483647, %v3357
          %v3360 = vcvt.s32.f32 %v3353
          %v3361 = vmul.f32 %v3360, %v3358
          %v3362 = vxor.u32 %v3361, 2147483648
          %v3363 = vsel %vm3242, %v3362, %v3361
          %v3364 = vsub.s32 4, %v3340
          %v3365 = vsel %vm3242, %v3364, %v3340
          %v3366 = vsel %vm3241, %v590, %v3363
          %v3367 = vsel %vm3241, 0, %v3365
          %v3368 = vmul.f32 %v3366, %v3366
          %v3369 = vmul.f32 %v3368, -0.001358992
          %v3370 = vadd.f32 %v3369, 0.041655596
          %v3371 = vmul.f32 %v3368, %v3370
          %v3372 = vadd.f32 %v3371, -0.4999988
          %v3373 = vmul.f32 %v3368, %v3372
          %v3374 = vadd.f32 1.0, %v3373
          %v3375 = vmul.f32 %v3366, %v3366
          %v3376 = vmul.f32 %v3375, -0.00019511016
          %v3377 = vadd.f32 %v3376, 0.008332121
          %v3378 = vmul.f32 %v3375, %v3377
          %v3379 = vadd.f32 %v3378, -0.16666654
          %v3380 = vmul.f32 %v3375, %v3379
          %v3381 = vadd.f32 %v3380, 1.0
          %v3382 = vmul.f32 %v3381, %v3366
          %vm3383 = vweird.f32 %v590
          %v3384 = vadd.s32 %v3367, 3
          %v3385 = vand.u32 %v3384, 3
          %vm3386 = vcmp.lt.s32.totalorder %v3385, 2
          %vm3387 = vcmp.eq.s32.totalorder %v3385, 0
          %v3388 = vxor.u32 %v3382, 2147483648
          %v3389 = vsel %vm3387, %v3374, %v3388
          %vm3390 = vcmp.eq.s32.totalorder %v3385, 2
          %v3391 = vxor.u32 %v3374, 2147483648
          %v3392 = vsel %vm3390, %v3391, %v3382
          %v3393 = vsel %vm3386, %v3389, %v3392
          %v3394 = vsel %vm3383, nan, %v3393
          %v3395 = vand.u32 2147483647, %v591
          %vm3396 = vcmp.le.f32.partialorder %v3395, 0.7853982
          %vm3397 = vcmp.lt.s32.totalorder %v591, 0
          %v3398 = vand.u32 %v591, 2139095040
          %v3399 = vshrl.u32 %v3398, 23
          %v3400 = vsub.s32 %v3399, 127
          %v3401 = vand.u32 2147483647, %v591
          %v3402 = vand.u32 %v3401, 8388607
          %v3403 = vor.u32 %v3402, 8388608
          %v3404 = vsub.s32 0, %v3403
          %v3405 = vadd.s32 %v3400, 1
          %vm3406 = vcmp.gt.s32.totalorder %v3405, 0
          %v3407 = vsel %vm3406, %v3405, 0
          %v3408 = vshrl.u32 %v3407, 5
          %v3409 = vand.u32 %v3407, 31
          %v3410 = vsub.s32 32, %v3409
          %v3411 = vshrl.u32 683565275, %v3410
          %v3412 = vshll.u32 683565275, %v3409
          %v3413 = vshrl.u32 2475754826, %v3410
          %v3414 = vor.u32 %v3412, %v3413
          %v3415 = vshll.u32 2475754826, %v3409
          %v3416 = vshrl.u32 2131351028, %v3410
          %v3417 = vor.u32 %v3415, %v3416
          %v3418 = vshll.u32 2131351028, %v3409
          %v3419 = vshrl.u32 2102212464, %v3410
          %v3420 = vor.u32 %v3418, %v3419
          %v3421 = vshll.u32 2102212464, %v3409
          %v3422 = vshrl.u32 920167782, %v3410
          %v3423 = vor.u32 %v3421, %v3422
          %v3424 = vshll.u32 920167782, %v3409
          %v3425 = vshrl.u32 1326507024, %v3410
          %v3426 = vor.u32 %v3424, %v3425
          %vm3427 = vcmp.lt.s32.totalorder %v3408, 1
          %vm3428 = vcmp.lt.s32.totalorder %v3408, 2
          %vm3429 = vcmp.lt.s32.totalorder %v3408, 3
          %vm3430 = vcmp.lt.s32.totalorder %v3408, 4
          %v3431 = vsel %vm3427, %v3411, %v3414
          %v3432 = vsel %vm3430, %v3420, 2102212464
          %v3433 = vsel %vm3429, %v3417, %v3432
          %v3434 = vsel %vm3428, %v3431, %v3433
          %v3435 = vsel %vm3427, %v3414, %v3417
          %v3436 = vsel %vm3430, %v3423, 920167782
          %v3437 = vsel %vm3429, %v3420, %v3436
          %v3438 = vsel %vm3428, %v3435, %v3437
          %v3439 = vsel %vm3427, %v3417, %v3420
          %v3440 = vsel %vm3430, %v3426, 1326507024
          %v3441 = vsel %vm3429, %v3423, %v3440
          %v3442 = vsel %vm3428, %v3439, %v3441
          %v3443 = vshll.u32 %v3403, 8
          %v3444 = vand.u32 %v3443, 65535
          %v3445 = vshrl.u32 %v3443, 16
          %v3446 = vand.u32 %v3442, 65535
          %v3447 = vshrl.u32 %v3442, 16
          %v3448 = vmul.u32 %v3444, %v3446
          %v3449 = vmul.u32 %v3444, %v3447
          %v3450 = vmul.u32 %v3445, %v3446
          %v3451 = vmul.u32 %v3445, %v3447
          %v3452 = vshll.u32 %v3449, 16
          %v3453 = vshrl.u32 %v3449, 16
          %v3454 = vshll.u32 %v3450, 16
          %v3455 = vshrl.u32 %v3450, 16
          %vm3456 = vc.u32 %v3448, %v3452
          %v3457 = vsel %vm3456, 1, 0
          %v3458 = vadd.s32 %v3448, %v3452
          %v3459 = vadd.s32 %v3451, %v3457
          %vm3460 = vc.u32 %v3458, %v3454
          %v3461 = vsel %vm3460, 1, 0
          %v3462 = vadd.s32 %v3458, %v3454
          %v3463 = vadd.s32 %v3459, %v3461
          %v3464 = vadd.s32 %v3463, %v3453
          %v3465 = vadd.s32 %v3464, %v3455
          %v3466 = vand.u32 %v3443, 65535
          %v3467 = vshrl.u32 %v3443, 16
          %v3468 = vand.u32 %v3438, 65535
          %v3469 = vshrl.u32 %v3438, 16
          %v3470 = vmul.u32 %v3466, %v3468
          %v3471 = vmul.u32 %v3466, %v3469
          %v3472 = vmul.u32 %v3467, %v3468
          %v3473 = vmul.u32 %v3467, %v3469
          %v3474 = vshll.u32 %v3471, 16
          %v3475 = vshrl.u32 %v3471, 16
          %v3476 = vshll.u32 %v3472, 16
          %v3477 = vshrl.u32 %v3472, 16
          %vm3478 = vc.u32 %v3470, %v3474
          %v3479 = vsel %vm3478, 1, 0
          %v3480 = vadd.s32 %v3470, %v3474
          %v3481 = vadd.s32 %v3473, %v3479
          %vm3482 = vc.u32 %v3480, %v3476
          %v3483 = vsel %vm3482, 1, 0
          %v3484 = vadd.s32 %v3480, %v3476
          %v3485 = vadd.s32 %v3481, %v3483
          %v3486 = vadd.s32 %v3485, %v3475
          %v3487 = vadd.s32 %v3486, %v3477
          %v3488 = vmul.u32 %v3443, %v3434
          %v3489 = vadd.s32 %v3465, %v3484
          %vm3490 = vc.u32 %v3465, %v3484
          %v3491 = vadd.s32 %v3487, 1
          %v3492 = vsel %vm3490, %v3491, %v3487
          %v3493 = vadd.s32 %v3488, %v3492
          %v3494 = vadd.s32 %v3493, 536870912
          %v3495 = vshrl.u32 %v3494, 30
          %v3496 = vshll.u32 %v3495, 30
          %v3497 = vsub.s32 %v3493, %v3496
          %vm3498 = vcmp.lt.s32.totalorder %v3497, 0
          %v3499 = vsub.s32 0, %v3497
          %v3500 = vsel %vm3498, %v3499, %v3497
          %v3501 = vclz %v3500
          %v3502 = vsub.s32 %v3501, 2
          %vm3503 = vcmp.gt.s32.totalorder 0, %v3502
          %v3504 = vsel %vm3503, 0, %v3502
          %v3505 = vsub.s32 32, %v3504
          %v3506 = vshll.u32 %v3497, %v3504
          %v3507 = vshrl.u32 %v3489, %v3505
          %v3508 = vor.u32 %v3506, %v3507
          %v3509 = vsub.s32 4294967266, %v3504
          %v3510 = vadd.s32 %v3509, 127
          %v3511 = vshll.u32 %v3510, 23
          %v3512 = vor.u32 4788187, %v3511
          %v3513 = vand.u32 2147483647, %v3512
          %v3515 = vcvt.s32.f32 %v3508
          %v3516 = vmul.f32 %v3515, %v3513
          %v3517 = vxor.u32 %v3516, 2147483648
          %v3518 = vsel %vm3397, %v3517, %v3516
          %v3519 = vsub.s32 4, %v3495
          %v3520 = vsel %vm3397, %v3519, %v3495
          %v3521 = vsel %vm3396, %v591, %v3518
          %v3522 = vsel %vm3396, 0, %v3520
          %v3523 = vmul.f32 %v3521, %v3521
          %v3524 = vmul.f32 %v3523, -0.001358992
          %v3525 = vadd.f32 %v3524, 0.041655596
          %v3526 = vmul.f32 %v3523, %v3525
          %v3527 = vadd.f32 %v3526, -0.4999988
          %v3528 = vmul.f32 %v3523, %v3527
          %v3529 = vadd.f32 1.0, %v3528
          %v3530 = vmul.f32 %v3521, %v3521
          %v3531 = vmul.f32 %v3530, -0.00019511016
          %v3532 = vadd.f32 %v3531, 0.008332121
          %v3533 = vmul.f32 %v3530, %v3532
          %v3534 = vadd.f32 %v3533, -0.16666654
          %v3535 = vmul.f32 %v3530, %v3534
          %v3536 = vadd.f32 %v3535, 1.0
          %v3537 = vmul.f32 %v3536, %v3521
          %vm3538 = vweird.f32 %v591
          %v3539 = vadd.s32 %v3522, 3
          %v3540 = vand.u32 %v3539, 3
          %vm3541 = vcmp.lt.s32.totalorder %v3540, 2
          %vm3542 = vcmp.eq.s32.totalorder %v3540, 0
          %v3543 = vxor.u32 %v3537, 2147483648
          %v3544 = vsel %vm3542, %v3529, %v3543
          %vm3545 = vcmp.eq.s32.totalorder %v3540, 2
          %v3546 = vxor.u32 %v3529, 2147483648
          %v3547 = vsel %vm3545, %v3546, %v3537
          %v3548 = vsel %vm3541, %v3544, %v3547
          %v3549 = vsel %vm3538, nan, %v3548
          %v3550 = vand.u32 2147483647, %v592
          %vm3551 = vcmp.le.f32.partialorder %v3550, 0.7853982
          %vm3552 = vcmp.lt.s32.totalorder %v592, 0
          %v3553 = vand.u32 %v592, 2139095040
          %v3554 = vshrl.u32 %v3553, 23
          %v3555 = vsub.s32 %v3554, 127
          %v3556 = vand.u32 2147483647, %v592
          %v3557 = vand.u32 %v3556, 8388607
          %v3558 = vor.u32 %v3557, 8388608
          %v3559 = vsub.s32 0, %v3558
          %v3560 = vadd.s32 %v3555, 1
          %vm3561 = vcmp.gt.s32.totalorder %v3560, 0
          %v3562 = vsel %vm3561, %v3560, 0
          %v3563 = vshrl.u32 %v3562, 5
          %v3564 = vand.u32 %v3562, 31
          %v3565 = vsub.s32 32, %v3564
          %v3566 = vshrl.u32 683565275, %v3565
          %v3567 = vshll.u32 683565275, %v3564
          %v3568 = vshrl.u32 2475754826, %v3565
          %v3569 = vor.u32 %v3567, %v3568
          %v3570 = vshll.u32 2475754826, %v3564
          %v3571 = vshrl.u32 2131351028, %v3565
          %v3572 = vor.u32 %v3570, %v3571
          %v3573 = vshll.u32 2131351028, %v3564
          %v3574 = vshrl.u32 2102212464, %v3565
          %v3575 = vor.u32 %v3573, %v3574
          %v3576 = vshll.u32 2102212464, %v3564
          %v3577 = vshrl.u32 920167782, %v3565
          %v3578 = vor.u32 %v3576, %v3577
          %v3579 = vshll.u32 920167782, %v3564
          %v3580 = vshrl.u32 1326507024, %v3565
          %v3581 = vor.u32 %v3579, %v3580
          %vm3582 = vcmp.lt.s32.totalorder %v3563, 1
          %vm3583 = vcmp.lt.s32.totalorder %v3563, 2
          %vm3584 = vcmp.lt.s32.totalorder %v3563, 3
          %vm3585 = vcmp.lt.s32.totalorder %v3563, 4
          %v3586 = vsel %vm3582, %v3566, %v3569
          %v3587 = vsel %vm3585, %v3575, 2102212464
          %v3588 = vsel %vm3584, %v3572, %v3587
          %v3589 = vsel %vm3583, %v3586, %v3588
          %v3590 = vsel %vm3582, %v3569, %v3572
          %v3591 = vsel %vm3585, %v3578, 920167782
          %v3592 = vsel %vm3584, %v3575, %v3591
          %v3593 = vsel %vm3583, %v3590, %v3592
          %v3594 = vsel %vm3582, %v3572, %v3575
          %v3595 = vsel %vm3585, %v3581, 1326507024
          %v3596 = vsel %vm3584, %v3578, %v3595
          %v3597 = vsel %vm3583, %v3594, %v3596
          %v3598 = vshll.u32 %v3558, 8
          %v3599 = vand.u32 %v3598, 65535
          %v3600 = vshrl.u32 %v3598, 16
          %v3601 = vand.u32 %v3597, 65535
          %v3602 = vshrl.u32 %v3597, 16
          %v3603 = vmul.u32 %v3599, %v3601
          %v3604 = vmul.u32 %v3599, %v3602
          %v3605 = vmul.u32 %v3600, %v3601
          %v3606 = vmul.u32 %v3600, %v3602
          %v3607 = vshll.u32 %v3604, 16
          %v3608 = vshrl.u32 %v3604, 16
          %v3609 = vshll.u32 %v3605, 16
          %v3610 = vshrl.u32 %v3605, 16
          %vm3611 = vc.u32 %v3603, %v3607
          %v3612 = vsel %vm3611, 1, 0
          %v3613 = vadd.s32 %v3603, %v3607
          %v3614 = vadd.s32 %v3606, %v3612
          %vm3615 = vc.u32 %v3613, %v3609
          %v3616 = vsel %vm3615, 1, 0
          %v3617 = vadd.s32 %v3613, %v3609
          %v3618 = vadd.s32 %v3614, %v3616
          %v3619 = vadd.s32 %v3618, %v3608
          %v3620 = vadd.s32 %v3619, %v3610
          %v3621 = vand.u32 %v3598, 65535
          %v3622 = vshrl.u32 %v3598, 16
          %v3623 = vand.u32 %v3593, 65535
          %v3624 = vshrl.u32 %v3593, 16
          %v3625 = vmul.u32 %v3621, %v3623
          %v3626 = vmul.u32 %v3621, %v3624
          %v3627 = vmul.u32 %v3622, %v3623
          %v3628 = vmul.u32 %v3622, %v3624
          %v3629 = vshll.u32 %v3626, 16
          %v3630 = vshrl.u32 %v3626, 16
          %v3631 = vshll.u32 %v3627, 16
          %v3632 = vshrl.u32 %v3627, 16
          %vm3633 = vc.u32 %v3625, %v3629
          %v3634 = vsel %vm3633, 1, 0
          %v3635 = vadd.s32 %v3625, %v3629
          %v3636 = vadd.s32 %v3628, %v3634
          %vm3637 = vc.u32 %v3635, %v3631
          %v3638 = vsel %vm3637, 1, 0
          %v3639 = vadd.s32 %v3635, %v3631
          %v3640 = vadd.s32 %v3636, %v3638
          %v3641 = vadd.s32 %v3640, %v3630
          %v3642 = vadd.s32 %v3641, %v3632
          %v3643 = vmul.u32 %v3598, %v3589
          %v3644 = vadd.s32 %v3620, %v3639
          %vm3645 = vc.u32 %v3620, %v3639
          %v3646 = vadd.s32 %v3642, 1
          %v3647 = vsel %vm3645, %v3646, %v3642
          %v3648 = vadd.s32 %v3643, %v3647
          %v3649 = vadd.s32 %v3648, 536870912
          %v3650 = vshrl.u32 %v3649, 30
          %v3651 = vshll.u32 %v3650, 30
          %v3652 = vsub.s32 %v3648, %v3651
          %vm3653 = vcmp.lt.s32.totalorder %v3652, 0
          %v3654 = vsub.s32 0, %v3652
          %v3655 = vsel %vm3653, %v3654, %v3652
          %v3656 = vclz %v3655
          %v3657 = vsub.s32 %v3656, 2
          %vm3658 = vcmp.gt.s32.totalorder 0, %v3657
          %v3659 = vsel %vm3658, 0, %v3657
          %v3660 = vsub.s32 32, %v3659
          %v3661 = vshll.u32 %v3652, %v3659
          %v3662 = vshrl.u32 %v3644, %v3660
          %v3663 = vor.u32 %v3661, %v3662
          %v3664 = vsub.s32 4294967266, %v3659
          %v3665 = vadd.s32 %v3664, 127
          %v3666 = vshll.u32 %v3665, 23
          %v3667 = vor.u32 4788187, %v3666
          %v3668 = vand.u32 2147483647, %v3667
          %v3670 = vcvt.s32.f32 %v3663
          %v3671 = vmul.f32 %v3670, %v3668
          %v3672 = vxor.u32 %v3671, 2147483648
          %v3673 = vsel %vm3552, %v3672, %v3671
          %v3674 = vsub.s32 4, %v3650
          %v3675 = vsel %vm3552, %v3674, %v3650
          %v3676 = vsel %vm3551, %v592, %v3673
          %v3677 = vsel %vm3551, 0, %v3675
          %v3678 = vmul.f32 %v3676, %v3676
          %v3679 = vmul.f32 %v3678, -0.001358992
          %v3680 = vadd.f32 %v3679, 0.041655596
          %v3681 = vmul.f32 %v3678, %v3680
          %v3682 = vadd.f32 %v3681, -0.4999988
          %v3683 = vmul.f32 %v3678, %v3682
          %v3684 = vadd.f32 1.0, %v3683
          %v3685 = vmul.f32 %v3676, %v3676
          %v3686 = vmul.f32 %v3685, -0.00019511016
          %v3687 = vadd.f32 %v3686, 0.008332121
          %v3688 = vmul.f32 %v3685, %v3687
          %v3689 = vadd.f32 %v3688, -0.16666654
          %v3690 = vmul.f32 %v3685, %v3689
          %v3691 = vadd.f32 %v3690, 1.0
          %v3692 = vmul.f32 %v3691, %v3676
          %vm3693 = vweird.f32 %v592
          %v3694 = vadd.s32 %v3677, 3
          %v3695 = vand.u32 %v3694, 3
          %vm3696 = vcmp.lt.s32.totalorder %v3695, 2
          %vm3697 = vcmp.eq.s32.totalorder %v3695, 0
          %v3698 = vxor.u32 %v3692, 2147483648
          %v3699 = vsel %vm3697, %v3684, %v3698
          %vm3700 = vcmp.eq.s32.totalorder %v3695, 2
          %v3701 = vxor.u32 %v3684, 2147483648
          %v3702 = vsel %vm3700, %v3701, %v3692
          %v3703 = vsel %vm3696, %v3699, %v3702
          %v3704 = vsel %vm3693, nan, %v3703
          %v3705 = vand.u32 2147483647, %v593
          %vm3706 = vcmp.le.f32.partialorder %v3705, 0.7853982
          %vm3707 = vcmp.lt.s32.totalorder %v593, 0
          %v3708 = vand.u32 %v593, 2139095040
          %v3709 = vshrl.u32 %v3708, 23
          %v3710 = vsub.s32 %v3709, 127
          %v3711 = vand.u32 2147483647, %v593
          %v3712 = vand.u32 %v3711, 8388607
          %v3713 = vor.u32 %v3712, 8388608
          %v3714 = vsub.s32 0, %v3713
          %v3715 = vadd.s32 %v3710, 1
          %vm3716 = vcmp.gt.s32.totalorder %v3715, 0
          %v3717 = vsel %vm3716, %v3715, 0
          %v3718 = vshrl.u32 %v3717, 5
          %v3719 = vand.u32 %v3717, 31
          %v3720 = vsub.s32 32, %v3719
          %v3721 = vshrl.u32 683565275, %v3720
          %v3722 = vshll.u32 683565275, %v3719
          %v3723 = vshrl.u32 2475754826, %v3720
          %v3724 = vor.u32 %v3722, %v3723
          %v3725 = vshll.u32 2475754826, %v3719
          %v3726 = vshrl.u32 2131351028, %v3720
          %v3727 = vor.u32 %v3725, %v3726
          %v3728 = vshll.u32 2131351028, %v3719
          %v3729 = vshrl.u32 2102212464, %v3720
          %v3730 = vor.u32 %v3728, %v3729
          %v3731 = vshll.u32 2102212464, %v3719
          %v3732 = vshrl.u32 920167782, %v3720
          %v3733 = vor.u32 %v3731, %v3732
          %v3734 = vshll.u32 920167782, %v3719
          %v3735 = vshrl.u32 1326507024, %v3720
          %v3736 = vor.u32 %v3734, %v3735
          %vm3737 = vcmp.lt.s32.totalorder %v3718, 1
          %vm3738 = vcmp.lt.s32.totalorder %v3718, 2
          %vm3739 = vcmp.lt.s32.totalorder %v3718, 3
          %vm3740 = vcmp.lt.s32.totalorder %v3718, 4
          %v3741 = vsel %vm3737, %v3721, %v3724
          %v3742 = vsel %vm3740, %v3730, 2102212464
          %v3743 = vsel %vm3739, %v3727, %v3742
          %v3744 = vsel %vm3738, %v3741, %v3743
          %v3745 = vsel %vm3737, %v3724, %v3727
          %v3746 = vsel %vm3740, %v3733, 920167782
          %v3747 = vsel %vm3739, %v3730, %v3746
          %v3748 = vsel %vm3738, %v3745, %v3747
          %v3749 = vsel %vm3737, %v3727, %v3730
          %v3750 = vsel %vm3740, %v3736, 1326507024
          %v3751 = vsel %vm3739, %v3733, %v3750
          %v3752 = vsel %vm3738, %v3749, %v3751
          %v3753 = vshll.u32 %v3713, 8
          %v3754 = vand.u32 %v3753, 65535
          %v3755 = vshrl.u32 %v3753, 16
          %v3756 = vand.u32 %v3752, 65535
          %v3757 = vshrl.u32 %v3752, 16
          %v3758 = vmul.u32 %v3754, %v3756
          %v3759 = vmul.u32 %v3754, %v3757
          %v3760 = vmul.u32 %v3755, %v3756
          %v3761 = vmul.u32 %v3755, %v3757
          %v3762 = vshll.u32 %v3759, 16
          %v3763 = vshrl.u32 %v3759, 16
          %v3764 = vshll.u32 %v3760, 16
          %v3765 = vshrl.u32 %v3760, 16
          %vm3766 = vc.u32 %v3758, %v3762
          %v3767 = vsel %vm3766, 1, 0
          %v3768 = vadd.s32 %v3758, %v3762
          %v3769 = vadd.s32 %v3761, %v3767
          %vm3770 = vc.u32 %v3768, %v3764
          %v3771 = vsel %vm3770, 1, 0
          %v3772 = vadd.s32 %v3768, %v3764
          %v3773 = vadd.s32 %v3769, %v3771
          %v3774 = vadd.s32 %v3773, %v3763
          %v3775 = vadd.s32 %v3774, %v3765
          %v3776 = vand.u32 %v3753, 65535
          %v3777 = vshrl.u32 %v3753, 16
          %v3778 = vand.u32 %v3748, 65535
          %v3779 = vshrl.u32 %v3748, 16
          %v3780 = vmul.u32 %v3776, %v3778
          %v3781 = vmul.u32 %v3776, %v3779
          %v3782 = vmul.u32 %v3777, %v3778
          %v3783 = vmul.u32 %v3777, %v3779
          %v3784 = vshll.u32 %v3781, 16
          %v3785 = vshrl.u32 %v3781, 16
          %v3786 = vshll.u32 %v3782, 16
          %v3787 = vshrl.u32 %v3782, 16
          %vm3788 = vc.u32 %v3780, %v3784
          %v3789 = vsel %vm3788, 1, 0
          %v3790 = vadd.s32 %v3780, %v3784
          %v3791 = vadd.s32 %v3783, %v3789
          %vm3792 = vc.u32 %v3790, %v3786
          %v3793 = vsel %vm3792, 1, 0
          %v3794 = vadd.s32 %v3790, %v3786
          %v3795 = vadd.s32 %v3791, %v3793
          %v3796 = vadd.s32 %v3795, %v3785
          %v3797 = vadd.s32 %v3796, %v3787
          %v3798 = vmul.u32 %v3753, %v3744
          %v3799 = vadd.s32 %v3775, %v3794
          %vm3800 = vc.u32 %v3775, %v3794
          %v3801 = vadd.s32 %v3797, 1
          %v3802 = vsel %vm3800, %v3801, %v3797
          %v3803 = vadd.s32 %v3798, %v3802
          %v3804 = vadd.s32 %v3803, 536870912
          %v3805 = vshrl.u32 %v3804, 30
          %v3806 = vshll.u32 %v3805, 30
          %v3807 = vsub.s32 %v3803, %v3806
          %vm3808 = vcmp.lt.s32.totalorder %v3807, 0
          %v3809 = vsub.s32 0, %v3807
          %v3810 = vsel %vm3808, %v3809, %v3807
          %v3811 = vclz %v3810
          %v3812 = vsub.s32 %v3811, 2
          %vm3813 = vcmp.gt.s32.totalorder 0, %v3812
          %v3814 = vsel %vm3813, 0, %v3812
          %v3815 = vsub.s32 32, %v3814
          %v3816 = vshll.u32 %v3807, %v3814
          %v3817 = vshrl.u32 %v3799, %v3815
          %v3818 = vor.u32 %v3816, %v3817
          %v3819 = vsub.s32 4294967266, %v3814
          %v3820 = vadd.s32 %v3819, 127
          %v3821 = vshll.u32 %v3820, 23
          %v3822 = vor.u32 4788187, %v3821
          %v3823 = vand.u32 2147483647, %v3822
          %v3825 = vcvt.s32.f32 %v3818
          %v3826 = vmul.f32 %v3825, %v3823
          %v3827 = vxor.u32 %v3826, 2147483648
          %v3828 = vsel %vm3707, %v3827, %v3826
          %v3829 = vsub.s32 4, %v3805
          %v3830 = vsel %vm3707, %v3829, %v3805
          %v3831 = vsel %vm3706, %v593, %v3828
          %v3832 = vsel %vm3706, 0, %v3830
          %v3833 = vmul.f32 %v3831, %v3831
          %v3834 = vmul.f32 %v3833, -0.001358992
          %v3835 = vadd.f32 %v3834, 0.041655596
          %v3836 = vmul.f32 %v3833, %v3835
          %v3837 = vadd.f32 %v3836, -0.4999988
          %v3838 = vmul.f32 %v3833, %v3837
          %v3839 = vadd.f32 1.0, %v3838
          %v3840 = vmul.f32 %v3831, %v3831
          %v3841 = vmul.f32 %v3840, -0.00019511016
          %v3842 = vadd.f32 %v3841, 0.008332121
          %v3843 = vmul.f32 %v3840, %v3842
          %v3844 = vadd.f32 %v3843, -0.16666654
          %v3845 = vmul.f32 %v3840, %v3844
          %v3846 = vadd.f32 %v3845, 1.0
          %v3847 = vmul.f32 %v3846, %v3831
          %vm3848 = vweird.f32 %v593
          %v3849 = vadd.s32 %v3832, 3
          %v3850 = vand.u32 %v3849, 3
          %vm3851 = vcmp.lt.s32.totalorder %v3850, 2
          %vm3852 = vcmp.eq.s32.totalorder %v3850, 0
          %v3853 = vxor.u32 %v3847, 2147483648
          %v3854 = vsel %vm3852, %v3839, %v3853
          %vm3855 = vcmp.eq.s32.totalorder %v3850, 2
          %v3856 = vxor.u32 %v3839, 2147483648
          %v3857 = vsel %vm3855, %v3856, %v3847
          %v3858 = vsel %vm3851, %v3854, %v3857
          %v3859 = vsel %vm3848, nan, %v3858
          %v3860 = vand.u32 2147483647, %v594
          %vm3861 = vcmp.le.f32.partialorder %v3860, 0.7853982
          %vm3862 = vcmp.lt.s32.totalorder %v594, 0
          %v3863 = vand.u32 %v594, 2139095040
          %v3864 = vshrl.u32 %v3863, 23
          %v3865 = vsub.s32 %v3864, 127
          %v3866 = vand.u32 2147483647, %v594
          %v3867 = vand.u32 %v3866, 8388607
          %v3868 = vor.u32 %v3867, 8388608
          %v3869 = vsub.s32 0, %v3868
          %v3870 = vadd.s32 %v3865, 1
          %vm3871 = vcmp.gt.s32.totalorder %v3870, 0
          %v3872 = vsel %vm3871, %v3870, 0
          %v3873 = vshrl.u32 %v3872, 5
          %v3874 = vand.u32 %v3872, 31
          %v3875 = vsub.s32 32, %v3874
          %v3876 = vshrl.u32 683565275, %v3875
          %v3877 = vshll.u32 683565275, %v3874
          %v3878 = vshrl.u32 2475754826, %v3875
          %v3879 = vor.u32 %v3877, %v3878
          %v3880 = vshll.u32 2475754826, %v3874
          %v3881 = vshrl.u32 2131351028, %v3875
          %v3882 = vor.u32 %v3880, %v3881
          %v3883 = vshll.u32 2131351028, %v3874
          %v3884 = vshrl.u32 2102212464, %v3875
          %v3885 = vor.u32 %v3883, %v3884
          %v3886 = vshll.u32 2102212464, %v3874
          %v3887 = vshrl.u32 920167782, %v3875
          %v3888 = vor.u32 %v3886, %v3887
          %v3889 = vshll.u32 920167782, %v3874
          %v3890 = vshrl.u32 1326507024, %v3875
          %v3891 = vor.u32 %v3889, %v3890
          %vm3892 = vcmp.lt.s32.totalorder %v3873, 1
          %vm3893 = vcmp.lt.s32.totalorder %v3873, 2
          %vm3894 = vcmp.lt.s32.totalorder %v3873, 3
          %vm3895 = vcmp.lt.s32.totalorder %v3873, 4
          %v3896 = vsel %vm3892, %v3876, %v3879
          %v3897 = vsel %vm3895, %v3885, 2102212464
          %v3898 = vsel %vm3894, %v3882, %v3897
          %v3899 = vsel %vm3893, %v3896, %v3898
          %v3900 = vsel %vm3892, %v3879, %v3882
          %v3901 = vsel %vm3895, %v3888, 920167782
          %v3902 = vsel %vm3894, %v3885, %v3901
          %v3903 = vsel %vm3893, %v3900, %v3902
          %v3904 = vsel %vm3892, %v3882, %v3885
          %v3905 = vsel %vm3895, %v3891, 1326507024
          %v3906 = vsel %vm3894, %v3888, %v3905
          %v3907 = vsel %vm3893, %v3904, %v3906
          %v3908 = vshll.u32 %v3868, 8
          %v3909 = vand.u32 %v3908, 65535
          %v3910 = vshrl.u32 %v3908, 16
          %v3911 = vand.u32 %v3907, 65535
          %v3912 = vshrl.u32 %v3907, 16
          %v3913 = vmul.u32 %v3909, %v3911
          %v3914 = vmul.u32 %v3909, %v3912
          %v3915 = vmul.u32 %v3910, %v3911
          %v3916 = vmul.u32 %v3910, %v3912
          %v3917 = vshll.u32 %v3914, 16
          %v3918 = vshrl.u32 %v3914, 16
          %v3919 = vshll.u32 %v3915, 16
          %v3920 = vshrl.u32 %v3915, 16
          %vm3921 = vc.u32 %v3913, %v3917
          %v3922 = vsel %vm3921, 1, 0
          %v3923 = vadd.s32 %v3913, %v3917
          %v3924 = vadd.s32 %v3916, %v3922
          %vm3925 = vc.u32 %v3923, %v3919
          %v3926 = vsel %vm3925, 1, 0
          %v3927 = vadd.s32 %v3923, %v3919
          %v3928 = vadd.s32 %v3924, %v3926
          %v3929 = vadd.s32 %v3928, %v3918
          %v3930 = vadd.s32 %v3929, %v3920
          %v3931 = vand.u32 %v3908, 65535
          %v3932 = vshrl.u32 %v3908, 16
          %v3933 = vand.u32 %v3903, 65535
          %v3934 = vshrl.u32 %v3903, 16
          %v3935 = vmul.u32 %v3931, %v3933
          %v3936 = vmul.u32 %v3931, %v3934
          %v3937 = vmul.u32 %v3932, %v3933
          %v3938 = vmul.u32 %v3932, %v3934
          %v3939 = vshll.u32 %v3936, 16
          %v3940 = vshrl.u32 %v3936, 16
          %v3941 = vshll.u32 %v3937, 16
          %v3942 = vshrl.u32 %v3937, 16
          %vm3943 = vc.u32 %v3935, %v3939
          %v3944 = vsel %vm3943, 1, 0
          %v3945 = vadd.s32 %v3935, %v3939
          %v3946 = vadd.s32 %v3938, %v3944
          %vm3947 = vc.u32 %v3945, %v3941
          %v3948 = vsel %vm3947, 1, 0
          %v3949 = vadd.s32 %v3945, %v3941
          %v3950 = vadd.s32 %v3946, %v3948
          %v3951 = vadd.s32 %v3950, %v3940
          %v3952 = vadd.s32 %v3951, %v3942
          %v3953 = vmul.u32 %v3908, %v3899
          %v3954 = vadd.s32 %v3930, %v3949
          %vm3955 = vc.u32 %v3930, %v3949
          %v3956 = vadd.s32 %v3952, 1
          %v3957 = vsel %vm3955, %v3956, %v3952
          %v3958 = vadd.s32 %v3953, %v3957
          %v3959 = vadd.s32 %v3958, 536870912
          %v3960 = vshrl.u32 %v3959, 30
          %v3961 = vshll.u32 %v3960, 30
          %v3962 = vsub.s32 %v3958, %v3961
          %vm3963 = vcmp.lt.s32.totalorder %v3962, 0
          %v3964 = vsub.s32 0, %v3962
          %v3965 = vsel %vm3963, %v3964, %v3962
          %v3966 = vclz %v3965
          %v3967 = vsub.s32 %v3966, 2
          %vm3968 = vcmp.gt.s32.totalorder 0, %v3967
          %v3969 = vsel %vm3968, 0, %v3967
          %v3970 = vsub.s32 32, %v3969
          %v3971 = vshll.u32 %v3962, %v3969
          %v3972 = vshrl.u32 %v3954, %v3970
          %v3973 = vor.u32 %v3971, %v3972
          %v3974 = vsub.s32 4294967266, %v3969
          %v3975 = vadd.s32 %v3974, 127
          %v3976 = vshll.u32 %v3975, 23
          %v3977 = vor.u32 4788187, %v3976
          %v3978 = vand.u32 2147483647, %v3977
          %v3980 = vcvt.s32.f32 %v3973
          %v3981 = vmul.f32 %v3980, %v3978
          %v3982 = vxor.u32 %v3981, 2147483648
          %v3983 = vsel %vm3862, %v3982, %v3981
          %v3984 = vsub.s32 4, %v3960
          %v3985 = vsel %vm3862, %v3984, %v3960
          %v3986 = vsel %vm3861, %v594, %v3983
          %v3987 = vsel %vm3861, 0, %v3985
          %v3988 = vmul.f32 %v3986, %v3986
          %v3989 = vmul.f32 %v3988, -0.001358992
          %v3990 = vadd.f32 %v3989, 0.041655596
          %v3991 = vmul.f32 %v3988, %v3990
          %v3992 = vadd.f32 %v3991, -0.4999988
          %v3993 = vmul.f32 %v3988, %v3992
          %v3994 = vadd.f32 1.0, %v3993
          %v3995 = vmul.f32 %v3986, %v3986
          %v3996 = vmul.f32 %v3995, -0.00019511016
          %v3997 = vadd.f32 %v3996, 0.008332121
          %v3998 = vmul.f32 %v3995, %v3997
          %v3999 = vadd.f32 %v3998, -0.16666654
          %v4000 = vmul.f32 %v3995, %v3999
          %v4001 = vadd.f32 %v4000, 1.0
          %v4002 = vmul.f32 %v4001, %v3986
          %vm4003 = vweird.f32 %v594
          %v4004 = vadd.s32 %v3987, 3
          %v4005 = vand.u32 %v4004, 3
          %vm4006 = vcmp.lt.s32.totalorder %v4005, 2
          %vm4007 = vcmp.eq.s32.totalorder %v4005, 0
          %v4008 = vxor.u32 %v4002, 2147483648
          %v4009 = vsel %vm4007, %v3994, %v4008
          %vm4010 = vcmp.eq.s32.totalorder %v4005, 2
          %v4011 = vxor.u32 %v3994, 2147483648
          %v4012 = vsel %vm4010, %v4011, %v4002
          %v4013 = vsel %vm4006, %v4009, %v4012
          %v4014 = vsel %vm4003, nan, %v4013
          %v4015 = vand.u32 2147483647, %v595
          %vm4016 = vcmp.le.f32.partialorder %v4015, 0.7853982
          %vm4017 = vcmp.lt.s32.totalorder %v595, 0
          %v4018 = vand.u32 %v595, 2139095040
          %v4019 = vshrl.u32 %v4018, 23
          %v4020 = vsub.s32 %v4019, 127
          %v4021 = vand.u32 2147483647, %v595
          %v4022 = vand.u32 %v4021, 8388607
          %v4023 = vor.u32 %v4022, 8388608
          %v4024 = vsub.s32 0, %v4023
          %v4025 = vadd.s32 %v4020, 1
          %vm4026 = vcmp.gt.s32.totalorder %v4025, 0
          %v4027 = vsel %vm4026, %v4025, 0
          %v4028 = vshrl.u32 %v4027, 5
          %v4029 = vand.u32 %v4027, 31
          %v4030 = vsub.s32 32, %v4029
          %v4031 = vshrl.u32 683565275, %v4030
          %v4032 = vshll.u32 683565275, %v4029
          %v4033 = vshrl.u32 2475754826, %v4030
          %v4034 = vor.u32 %v4032, %v4033
          %v4035 = vshll.u32 2475754826, %v4029
          %v4036 = vshrl.u32 2131351028, %v4030
          %v4037 = vor.u32 %v4035, %v4036
          %v4038 = vshll.u32 2131351028, %v4029
          %v4039 = vshrl.u32 2102212464, %v4030
          %v4040 = vor.u32 %v4038, %v4039
          %v4041 = vshll.u32 2102212464, %v4029
          %v4042 = vshrl.u32 920167782, %v4030
          %v4043 = vor.u32 %v4041, %v4042
          %v4044 = vshll.u32 920167782, %v4029
          %v4045 = vshrl.u32 1326507024, %v4030
          %v4046 = vor.u32 %v4044, %v4045
          %vm4047 = vcmp.lt.s32.totalorder %v4028, 1
          %vm4048 = vcmp.lt.s32.totalorder %v4028, 2
          %vm4049 = vcmp.lt.s32.totalorder %v4028, 3
          %vm4050 = vcmp.lt.s32.totalorder %v4028, 4
          %v4051 = vsel %vm4047, %v4031, %v4034
          %v4052 = vsel %vm4050, %v4040, 2102212464
          %v4053 = vsel %vm4049, %v4037, %v4052
          %v4054 = vsel %vm4048, %v4051, %v4053
          %v4055 = vsel %vm4047, %v4034, %v4037
          %v4056 = vsel %vm4050, %v4043, 920167782
          %v4057 = vsel %vm4049, %v4040, %v4056
          %v4058 = vsel %vm4048, %v4055, %v4057
          %v4059 = vsel %vm4047, %v4037, %v4040
          %v4060 = vsel %vm4050, %v4046, 1326507024
          %v4061 = vsel %vm4049, %v4043, %v4060
          %v4062 = vsel %vm4048, %v4059, %v4061
          %v4063 = vshll.u32 %v4023, 8
          %v4064 = vand.u32 %v4063, 65535
          %v4065 = vshrl.u32 %v4063, 16
          %v4066 = vand.u32 %v4062, 65535
          %v4067 = vshrl.u32 %v4062, 16
          %v4068 = vmul.u32 %v4064, %v4066
          %v4069 = vmul.u32 %v4064, %v4067
          %v4070 = vmul.u32 %v4065, %v4066
          %v4071 = vmul.u32 %v4065, %v4067
          %v4072 = vshll.u32 %v4069, 16
          %v4073 = vshrl.u32 %v4069, 16
          %v4074 = vshll.u32 %v4070, 16
          %v4075 = vshrl.u32 %v4070, 16
          %vm4076 = vc.u32 %v4068, %v4072
          %v4077 = vsel %vm4076, 1, 0
          %v4078 = vadd.s32 %v4068, %v4072
          %v4079 = vadd.s32 %v4071, %v4077
          %vm4080 = vc.u32 %v4078, %v4074
          %v4081 = vsel %vm4080, 1, 0
          %v4082 = vadd.s32 %v4078, %v4074
          %v4083 = vadd.s32 %v4079, %v4081
          %v4084 = vadd.s32 %v4083, %v4073
          %v4085 = vadd.s32 %v4084, %v4075
          %v4086 = vand.u32 %v4063, 65535
          %v4087 = vshrl.u32 %v4063, 16
          %v4088 = vand.u32 %v4058, 65535
          %v4089 = vshrl.u32 %v4058, 16
          %v4090 = vmul.u32 %v4086, %v4088
          %v4091 = vmul.u32 %v4086, %v4089
          %v4092 = vmul.u32 %v4087, %v4088
          %v4093 = vmul.u32 %v4087, %v4089
          %v4094 = vshll.u32 %v4091, 16
          %v4095 = vshrl.u32 %v4091, 16
          %v4096 = vshll.u32 %v4092, 16
          %v4097 = vshrl.u32 %v4092, 16
          %vm4098 = vc.u32 %v4090, %v4094
          %v4099 = vsel %vm4098, 1, 0
          %v4100 = vadd.s32 %v4090, %v4094
          %v4101 = vadd.s32 %v4093, %v4099
          %vm4102 = vc.u32 %v4100, %v4096
          %v4103 = vsel %vm4102, 1, 0
          %v4104 = vadd.s32 %v4100, %v4096
          %v4105 = vadd.s32 %v4101, %v4103
          %v4106 = vadd.s32 %v4105, %v4095
          %v4107 = vadd.s32 %v4106, %v4097
          %v4108 = vmul.u32 %v4063, %v4054
          %v4109 = vadd.s32 %v4085, %v4104
          %vm4110 = vc.u32 %v4085, %v4104
          %v4111 = vadd.s32 %v4107, 1
          %v4112 = vsel %vm4110, %v4111, %v4107
          %v4113 = vadd.s32 %v4108, %v4112
          %v4114 = vadd.s32 %v4113, 536870912
          %v4115 = vshrl.u32 %v4114, 30
          %v4116 = vshll.u32 %v4115, 30
          %v4117 = vsub.s32 %v4113, %v4116
          %vm4118 = vcmp.lt.s32.totalorder %v4117, 0
          %v4119 = vsub.s32 0, %v4117
          %v4120 = vsel %vm4118, %v4119, %v4117
          %v4121 = vclz %v4120
          %v4122 = vsub.s32 %v4121, 2
          %vm4123 = vcmp.gt.s32.totalorder 0, %v4122
          %v4124 = vsel %vm4123, 0, %v4122
          %v4125 = vsub.s32 32, %v4124
          %v4126 = vshll.u32 %v4117, %v4124
          %v4127 = vshrl.u32 %v4109, %v4125
          %v4128 = vor.u32 %v4126, %v4127
          %v4129 = vsub.s32 4294967266, %v4124
          %v4130 = vadd.s32 %v4129, 127
          %v4131 = vshll.u32 %v4130, 23
          %v4132 = vor.u32 4788187, %v4131
          %v4133 = vand.u32 2147483647, %v4132
          %v4135 = vcvt.s32.f32 %v4128
          %v4136 = vmul.f32 %v4135, %v4133
          %v4137 = vxor.u32 %v4136, 2147483648
          %v4138 = vsel %vm4017, %v4137, %v4136
          %v4139 = vsub.s32 4, %v4115
          %v4140 = vsel %vm4017, %v4139, %v4115
          %v4141 = vsel %vm4016, %v595, %v4138
          %v4142 = vsel %vm4016, 0, %v4140
          %v4143 = vmul.f32 %v4141, %v4141
          %v4144 = vmul.f32 %v4143, -0.001358992
          %v4145 = vadd.f32 %v4144, 0.041655596
          %v4146 = vmul.f32 %v4143, %v4145
          %v4147 = vadd.f32 %v4146, -0.4999988
          %v4148 = vmul.f32 %v4143, %v4147
          %v4149 = vadd.f32 1.0, %v4148
          %v4150 = vmul.f32 %v4141, %v4141
          %v4151 = vmul.f32 %v4150, -0.00019511016
          %v4152 = vadd.f32 %v4151, 0.008332121
          %v4153 = vmul.f32 %v4150, %v4152
          %v4154 = vadd.f32 %v4153, -0.16666654
          %v4155 = vmul.f32 %v4150, %v4154
          %v4156 = vadd.f32 %v4155, 1.0
          %v4157 = vmul.f32 %v4156, %v4141
          %vm4158 = vweird.f32 %v595
          %v4159 = vadd.s32 %v4142, 3
          %v4160 = vand.u32 %v4159, 3
          %vm4161 = vcmp.lt.s32.totalorder %v4160, 2
          %vm4162 = vcmp.eq.s32.totalorder %v4160, 0
          %v4163 = vxor.u32 %v4157, 2147483648
          %v4164 = vsel %vm4162, %v4149, %v4163
          %vm4165 = vcmp.eq.s32.totalorder %v4160, 2
          %v4166 = vxor.u32 %v4149, 2147483648
          %v4167 = vsel %vm4165, %v4166, %v4157
          %v4168 = vsel %vm4161, %v4164, %v4167
          %v4169 = vsel %vm4158, nan, %v4168
          %v4170 = vand.u32 2147483647, %v596
          %vm4171 = vcmp.le.f32.partialorder %v4170, 0.7853982
          %vm4172 = vcmp.lt.s32.totalorder %v596, 0
          %v4173 = vand.u32 %v596, 2139095040
          %v4174 = vshrl.u32 %v4173, 23
          %v4175 = vsub.s32 %v4174, 127
          %v4176 = vand.u32 2147483647, %v596
          %v4177 = vand.u32 %v4176, 8388607
          %v4178 = vor.u32 %v4177, 8388608
          %v4179 = vsub.s32 0, %v4178
          %v4180 = vadd.s32 %v4175, 1
          %vm4181 = vcmp.gt.s32.totalorder %v4180, 0
          %v4182 = vsel %vm4181, %v4180, 0
          %v4183 = vshrl.u32 %v4182, 5
          %v4184 = vand.u32 %v4182, 31
          %v4185 = vsub.s32 32, %v4184
          %v4186 = vshrl.u32 683565275, %v4185
          %v4187 = vshll.u32 683565275, %v4184
          %v4188 = vshrl.u32 2475754826, %v4185
          %v4189 = vor.u32 %v4187, %v4188
          %v4190 = vshll.u32 2475754826, %v4184
          %v4191 = vshrl.u32 2131351028, %v4185
          %v4192 = vor.u32 %v4190, %v4191
          %v4193 = vshll.u32 2131351028, %v4184
          %v4194 = vshrl.u32 2102212464, %v4185
          %v4195 = vor.u32 %v4193, %v4194
          %v4196 = vshll.u32 2102212464, %v4184
          %v4197 = vshrl.u32 920167782, %v4185
          %v4198 = vor.u32 %v4196, %v4197
          %v4199 = vshll.u32 920167782, %v4184
          %v4200 = vshrl.u32 1326507024, %v4185
          %v4201 = vor.u32 %v4199, %v4200
          %vm4202 = vcmp.lt.s32.totalorder %v4183, 1
          %vm4203 = vcmp.lt.s32.totalorder %v4183, 2
          %vm4204 = vcmp.lt.s32.totalorder %v4183, 3
          %vm4205 = vcmp.lt.s32.totalorder %v4183, 4
          %v4206 = vsel %vm4202, %v4186, %v4189
          %v4207 = vsel %vm4205, %v4195, 2102212464
          %v4208 = vsel %vm4204, %v4192, %v4207
          %v4209 = vsel %vm4203, %v4206, %v4208
          %v4210 = vsel %vm4202, %v4189, %v4192
          %v4211 = vsel %vm4205, %v4198, 920167782
          %v4212 = vsel %vm4204, %v4195, %v4211
          %v4213 = vsel %vm4203, %v4210, %v4212
          %v4214 = vsel %vm4202, %v4192, %v4195
          %v4215 = vsel %vm4205, %v4201, 1326507024
          %v4216 = vsel %vm4204, %v4198, %v4215
          %v4217 = vsel %vm4203, %v4214, %v4216
          %v4218 = vshll.u32 %v4178, 8
          %v4219 = vand.u32 %v4218, 65535
          %v4220 = vshrl.u32 %v4218, 16
          %v4221 = vand.u32 %v4217, 65535
          %v4222 = vshrl.u32 %v4217, 16
          %v4223 = vmul.u32 %v4219, %v4221
          %v4224 = vmul.u32 %v4219, %v4222
          %v4225 = vmul.u32 %v4220, %v4221
          %v4226 = vmul.u32 %v4220, %v4222
          %v4227 = vshll.u32 %v4224, 16
          %v4228 = vshrl.u32 %v4224, 16
          %v4229 = vshll.u32 %v4225, 16
          %v4230 = vshrl.u32 %v4225, 16
          %vm4231 = vc.u32 %v4223, %v4227
          %v4232 = vsel %vm4231, 1, 0
          %v4233 = vadd.s32 %v4223, %v4227
          %v4234 = vadd.s32 %v4226, %v4232
          %vm4235 = vc.u32 %v4233, %v4229
          %v4236 = vsel %vm4235, 1, 0
          %v4237 = vadd.s32 %v4233, %v4229
          %v4238 = vadd.s32 %v4234, %v4236
          %v4239 = vadd.s32 %v4238, %v4228
          %v4240 = vadd.s32 %v4239, %v4230
          %v4241 = vand.u32 %v4218, 65535
          %v4242 = vshrl.u32 %v4218, 16
          %v4243 = vand.u32 %v4213, 65535
          %v4244 = vshrl.u32 %v4213, 16
          %v4245 = vmul.u32 %v4241, %v4243
          %v4246 = vmul.u32 %v4241, %v4244
          %v4247 = vmul.u32 %v4242, %v4243
          %v4248 = vmul.u32 %v4242, %v4244
          %v4249 = vshll.u32 %v4246, 16
          %v4250 = vshrl.u32 %v4246, 16
          %v4251 = vshll.u32 %v4247, 16
          %v4252 = vshrl.u32 %v4247, 16
          %vm4253 = vc.u32 %v4245, %v4249
          %v4254 = vsel %vm4253, 1, 0
          %v4255 = vadd.s32 %v4245, %v4249
          %v4256 = vadd.s32 %v4248, %v4254
          %vm4257 = vc.u32 %v4255, %v4251
          %v4258 = vsel %vm4257, 1, 0
          %v4259 = vadd.s32 %v4255, %v4251
          %v4260 = vadd.s32 %v4256, %v4258
          %v4261 = vadd.s32 %v4260, %v4250
          %v4262 = vadd.s32 %v4261, %v4252
          %v4263 = vmul.u32 %v4218, %v4209
          %v4264 = vadd.s32 %v4240, %v4259
          %vm4265 = vc.u32 %v4240, %v4259
          %v4266 = vadd.s32 %v4262, 1
          %v4267 = vsel %vm4265, %v4266, %v4262
          %v4268 = vadd.s32 %v4263, %v4267
          %v4269 = vadd.s32 %v4268, 536870912
          %v4270 = vshrl.u32 %v4269, 30
          %v4271 = vshll.u32 %v4270, 30
          %v4272 = vsub.s32 %v4268, %v4271
          %vm4273 = vcmp.lt.s32.totalorder %v4272, 0
          %v4274 = vsub.s32 0, %v4272
          %v4275 = vsel %vm4273, %v4274, %v4272
          %v4276 = vclz %v4275
          %v4277 = vsub.s32 %v4276, 2
          %vm4278 = vcmp.gt.s32.totalorder 0, %v4277
          %v4279 = vsel %vm4278, 0, %v4277
          %v4280 = vsub.s32 32, %v4279
          %v4281 = vshll.u32 %v4272, %v4279
          %v4282 = vshrl.u32 %v4264, %v4280
          %v4283 = vor.u32 %v4281, %v4282
          %v4284 = vsub.s32 4294967266, %v4279
          %v4285 = vadd.s32 %v4284, 127
          %v4286 = vshll.u32 %v4285, 23
          %v4287 = vor.u32 4788187, %v4286
          %v4288 = vand.u32 2147483647, %v4287
          %v4290 = vcvt.s32.f32 %v4283
          %v4291 = vmul.f32 %v4290, %v4288
          %v4292 = vxor.u32 %v4291, 2147483648
          %v4293 = vsel %vm4172, %v4292, %v4291
          %v4294 = vsub.s32 4, %v4270
          %v4295 = vsel %vm4172, %v4294, %v4270
          %v4296 = vsel %vm4171, %v596, %v4293
          %v4297 = vsel %vm4171, 0, %v4295
          %v4298 = vmul.f32 %v4296, %v4296
          %v4299 = vmul.f32 %v4298, -0.001358992
          %v4300 = vadd.f32 %v4299, 0.041655596
          %v4301 = vmul.f32 %v4298, %v4300
          %v4302 = vadd.f32 %v4301, -0.4999988
          %v4303 = vmul.f32 %v4298, %v4302
          %v4304 = vadd.f32 1.0, %v4303
          %v4305 = vmul.f32 %v4296, %v4296
          %v4306 = vmul.f32 %v4305, -0.00019511016
          %v4307 = vadd.f32 %v4306, 0.008332121
          %v4308 = vmul.f32 %v4305, %v4307
          %v4309 = vadd.f32 %v4308, -0.16666654
          %v4310 = vmul.f32 %v4305, %v4309
          %v4311 = vadd.f32 %v4310, 1.0
          %v4312 = vmul.f32 %v4311, %v4296
          %vm4313 = vweird.f32 %v596
          %v4314 = vadd.s32 %v4297, 3
          %v4315 = vand.u32 %v4314, 3
          %vm4316 = vcmp.lt.s32.totalorder %v4315, 2
          %vm4317 = vcmp.eq.s32.totalorder %v4315, 0
          %v4318 = vxor.u32 %v4312, 2147483648
          %v4319 = vsel %vm4317, %v4304, %v4318
          %vm4320 = vcmp.eq.s32.totalorder %v4315, 2
          %v4321 = vxor.u32 %v4304, 2147483648
          %v4322 = vsel %vm4320, %v4321, %v4312
          %v4323 = vsel %vm4316, %v4319, %v4322
          %v4324 = vsel %vm4313, nan, %v4323
          %v4325 = vand.u32 2147483647, %v597
          %vm4326 = vcmp.le.f32.partialorder %v4325, 0.7853982
          %vm4327 = vcmp.lt.s32.totalorder %v597, 0
          %v4328 = vand.u32 %v597, 2139095040
          %v4329 = vshrl.u32 %v4328, 23
          %v4330 = vsub.s32 %v4329, 127
          %v4331 = vand.u32 2147483647, %v597
          %v4332 = vand.u32 %v4331, 8388607
          %v4333 = vor.u32 %v4332, 8388608
          %v4334 = vsub.s32 0, %v4333
          %v4335 = vadd.s32 %v4330, 1
          %vm4336 = vcmp.gt.s32.totalorder %v4335, 0
          %v4337 = vsel %vm4336, %v4335, 0
          %v4338 = vshrl.u32 %v4337, 5
          %v4339 = vand.u32 %v4337, 31
          %v4340 = vsub.s32 32, %v4339
          %v4341 = vshrl.u32 683565275, %v4340
          %v4342 = vshll.u32 683565275, %v4339
          %v4343 = vshrl.u32 2475754826, %v4340
          %v4344 = vor.u32 %v4342, %v4343
          %v4345 = vshll.u32 2475754826, %v4339
          %v4346 = vshrl.u32 2131351028, %v4340
          %v4347 = vor.u32 %v4345, %v4346
          %v4348 = vshll.u32 2131351028, %v4339
          %v4349 = vshrl.u32 2102212464, %v4340
          %v4350 = vor.u32 %v4348, %v4349
          %v4351 = vshll.u32 2102212464, %v4339
          %v4352 = vshrl.u32 920167782, %v4340
          %v4353 = vor.u32 %v4351, %v4352
          %v4354 = vshll.u32 920167782, %v4339
          %v4355 = vshrl.u32 1326507024, %v4340
          %v4356 = vor.u32 %v4354, %v4355
          %vm4357 = vcmp.lt.s32.totalorder %v4338, 1
          %vm4358 = vcmp.lt.s32.totalorder %v4338, 2
          %vm4359 = vcmp.lt.s32.totalorder %v4338, 3
          %vm4360 = vcmp.lt.s32.totalorder %v4338, 4
          %v4361 = vsel %vm4357, %v4341, %v4344
          %v4362 = vsel %vm4360, %v4350, 2102212464
          %v4363 = vsel %vm4359, %v4347, %v4362
          %v4364 = vsel %vm4358, %v4361, %v4363
          %v4365 = vsel %vm4357, %v4344, %v4347
          %v4366 = vsel %vm4360, %v4353, 920167782
          %v4367 = vsel %vm4359, %v4350, %v4366
          %v4368 = vsel %vm4358, %v4365, %v4367
          %v4369 = vsel %vm4357, %v4347, %v4350
          %v4370 = vsel %vm4360, %v4356, 1326507024
          %v4371 = vsel %vm4359, %v4353, %v4370
          %v4372 = vsel %vm4358, %v4369, %v4371
          %v4373 = vshll.u32 %v4333, 8
          %v4374 = vand.u32 %v4373, 65535
          %v4375 = vshrl.u32 %v4373, 16
          %v4376 = vand.u32 %v4372, 65535
          %v4377 = vshrl.u32 %v4372, 16
          %v4378 = vmul.u32 %v4374, %v4376
          %v4379 = vmul.u32 %v4374, %v4377
          %v4380 = vmul.u32 %v4375, %v4376
          %v4381 = vmul.u32 %v4375, %v4377
          %v4382 = vshll.u32 %v4379, 16
          %v4383 = vshrl.u32 %v4379, 16
          %v4384 = vshll.u32 %v4380, 16
          %v4385 = vshrl.u32 %v4380, 16
          %vm4386 = vc.u32 %v4378, %v4382
          %v4387 = vsel %vm4386, 1, 0
          %v4388 = vadd.s32 %v4378, %v4382
          %v4389 = vadd.s32 %v4381, %v4387
          %vm4390 = vc.u32 %v4388, %v4384
          %v4391 = vsel %vm4390, 1, 0
          %v4392 = vadd.s32 %v4388, %v4384
          %v4393 = vadd.s32 %v4389, %v4391
          %v4394 = vadd.s32 %v4393, %v4383
          %v4395 = vadd.s32 %v4394, %v4385
          %v4396 = vand.u32 %v4373, 65535
          %v4397 = vshrl.u32 %v4373, 16
          %v4398 = vand.u32 %v4368, 65535
          %v4399 = vshrl.u32 %v4368, 16
          %v4400 = vmul.u32 %v4396, %v4398
          %v4401 = vmul.u32 %v4396, %v4399
          %v4402 = vmul.u32 %v4397, %v4398
          %v4403 = vmul.u32 %v4397, %v4399
          %v4404 = vshll.u32 %v4401, 16
          %v4405 = vshrl.u32 %v4401, 16
          %v4406 = vshll.u32 %v4402, 16
          %v4407 = vshrl.u32 %v4402, 16
          %vm4408 = vc.u32 %v4400, %v4404
          %v4409 = vsel %vm4408, 1, 0
          %v4410 = vadd.s32 %v4400, %v4404
          %v4411 = vadd.s32 %v4403, %v4409
          %vm4412 = vc.u32 %v4410, %v4406
          %v4413 = vsel %vm4412, 1, 0
          %v4414 = vadd.s32 %v4410, %v4406
          %v4415 = vadd.s32 %v4411, %v4413
          %v4416 = vadd.s32 %v4415, %v4405
          %v4417 = vadd.s32 %v4416, %v4407
          %v4418 = vmul.u32 %v4373, %v4364
          %v4419 = vadd.s32 %v4395, %v4414
          %vm4420 = vc.u32 %v4395, %v4414
          %v4421 = vadd.s32 %v4417, 1
          %v4422 = vsel %vm4420, %v4421, %v4417
          %v4423 = vadd.s32 %v4418, %v4422
          %v4424 = vadd.s32 %v4423, 536870912
          %v4425 = vshrl.u32 %v4424, 30
          %v4426 = vshll.u32 %v4425, 30
          %v4427 = vsub.s32 %v4423, %v4426
          %vm4428 = vcmp.lt.s32.totalorder %v4427, 0
          %v4429 = vsub.s32 0, %v4427
          %v4430 = vsel %vm4428, %v4429, %v4427
          %v4431 = vclz %v4430
          %v4432 = vsub.s32 %v4431, 2
          %vm4433 = vcmp.gt.s32.totalorder 0, %v4432
          %v4434 = vsel %vm4433, 0, %v4432
          %v4435 = vsub.s32 32, %v4434
          %v4436 = vshll.u32 %v4427, %v4434
          %v4437 = vshrl.u32 %v4419, %v4435
          %v4438 = vor.u32 %v4436, %v4437
          %v4439 = vsub.s32 4294967266, %v4434
          %v4440 = vadd.s32 %v4439, 127
          %v4441 = vshll.u32 %v4440, 23
          %v4442 = vor.u32 4788187, %v4441
          %v4443 = vand.u32 2147483647, %v4442
          %v4445 = vcvt.s32.f32 %v4438
          %v4446 = vmul.f32 %v4445, %v4443
          %v4447 = vxor.u32 %v4446, 2147483648
          %v4448 = vsel %vm4327, %v4447, %v4446
          %v4449 = vsub.s32 4, %v4425
          %v4450 = vsel %vm4327, %v4449, %v4425
          %v4451 = vsel %vm4326, %v597, %v4448
          %v4452 = vsel %vm4326, 0, %v4450
          %v4453 = vmul.f32 %v4451, %v4451
          %v4454 = vmul.f32 %v4453, -0.001358992
          %v4455 = vadd.f32 %v4454, 0.041655596
          %v4456 = vmul.f32 %v4453, %v4455
          %v4457 = vadd.f32 %v4456, -0.4999988
          %v4458 = vmul.f32 %v4453, %v4457
          %v4459 = vadd.f32 1.0, %v4458
          %v4460 = vmul.f32 %v4451, %v4451
          %v4461 = vmul.f32 %v4460, -0.00019511016
          %v4462 = vadd.f32 %v4461, 0.008332121
          %v4463 = vmul.f32 %v4460, %v4462
          %v4464 = vadd.f32 %v4463, -0.16666654
          %v4465 = vmul.f32 %v4460, %v4464
          %v4466 = vadd.f32 %v4465, 1.0
          %v4467 = vmul.f32 %v4466, %v4451
          %vm4468 = vweird.f32 %v597
          %v4469 = vadd.s32 %v4452, 3
          %v4470 = vand.u32 %v4469, 3
          %vm4471 = vcmp.lt.s32.totalorder %v4470, 2
          %vm4472 = vcmp.eq.s32.totalorder %v4470, 0
          %v4473 = vxor.u32 %v4467, 2147483648
          %v4474 = vsel %vm4472, %v4459, %v4473
          %vm4475 = vcmp.eq.s32.totalorder %v4470, 2
          %v4476 = vxor.u32 %v4459, 2147483648
          %v4477 = vsel %vm4475, %v4476, %v4467
          %v4478 = vsel %vm4471, %v4474, %v4477
          %v4479 = vsel %vm4468, nan, %v4478
          %v4480 = vand.u32 2147483647, %v598
          %vm4481 = vcmp.le.f32.partialorder %v4480, 0.7853982
          %vm4482 = vcmp.lt.s32.totalorder %v598, 0
          %v4483 = vand.u32 %v598, 2139095040
          %v4484 = vshrl.u32 %v4483, 23
          %v4485 = vsub.s32 %v4484, 127
          %v4486 = vand.u32 2147483647, %v598
          %v4487 = vand.u32 %v4486, 8388607
          %v4488 = vor.u32 %v4487, 8388608
          %v4489 = vsub.s32 0, %v4488
          %v4490 = vadd.s32 %v4485, 1
          %vm4491 = vcmp.gt.s32.totalorder %v4490, 0
          %v4492 = vsel %vm4491, %v4490, 0
          %v4493 = vshrl.u32 %v4492, 5
          %v4494 = vand.u32 %v4492, 31
          %v4495 = vsub.s32 32, %v4494
          %v4496 = vshrl.u32 683565275, %v4495
          %v4497 = vshll.u32 683565275, %v4494
          %v4498 = vshrl.u32 2475754826, %v4495
          %v4499 = vor.u32 %v4497, %v4498
          %v4500 = vshll.u32 2475754826, %v4494
          %v4501 = vshrl.u32 2131351028, %v4495
          %v4502 = vor.u32 %v4500, %v4501
          %v4503 = vshll.u32 2131351028, %v4494
          %v4504 = vshrl.u32 2102212464, %v4495
          %v4505 = vor.u32 %v4503, %v4504
          %v4506 = vshll.u32 2102212464, %v4494
          %v4507 = vshrl.u32 920167782, %v4495
          %v4508 = vor.u32 %v4506, %v4507
          %v4509 = vshll.u32 920167782, %v4494
          %v4510 = vshrl.u32 1326507024, %v4495
          %v4511 = vor.u32 %v4509, %v4510
          %vm4512 = vcmp.lt.s32.totalorder %v4493, 1
          %vm4513 = vcmp.lt.s32.totalorder %v4493, 2
          %vm4514 = vcmp.lt.s32.totalorder %v4493, 3
          %vm4515 = vcmp.lt.s32.totalorder %v4493, 4
          %v4516 = vsel %vm4512, %v4496, %v4499
          %v4517 = vsel %vm4515, %v4505, 2102212464
          %v4518 = vsel %vm4514, %v4502, %v4517
          %v4519 = vsel %vm4513, %v4516, %v4518
          %v4520 = vsel %vm4512, %v4499, %v4502
          %v4521 = vsel %vm4515, %v4508, 920167782
          %v4522 = vsel %vm4514, %v4505, %v4521
          %v4523 = vsel %vm4513, %v4520, %v4522
          %v4524 = vsel %vm4512, %v4502, %v4505
          %v4525 = vsel %vm4515, %v4511, 1326507024
          %v4526 = vsel %vm4514, %v4508, %v4525
          %v4527 = vsel %vm4513, %v4524, %v4526
          %v4528 = vshll.u32 %v4488, 8
          %v4529 = vand.u32 %v4528, 65535
          %v4530 = vshrl.u32 %v4528, 16
          %v4531 = vand.u32 %v4527, 65535
          %v4532 = vshrl.u32 %v4527, 16
          %v4533 = vmul.u32 %v4529, %v4531
          %v4534 = vmul.u32 %v4529, %v4532
          %v4535 = vmul.u32 %v4530, %v4531
          %v4536 = vmul.u32 %v4530, %v4532
          %v4537 = vshll.u32 %v4534, 16
          %v4538 = vshrl.u32 %v4534, 16
          %v4539 = vshll.u32 %v4535, 16
          %v4540 = vshrl.u32 %v4535, 16
          %vm4541 = vc.u32 %v4533, %v4537
          %v4542 = vsel %vm4541, 1, 0
          %v4543 = vadd.s32 %v4533, %v4537
          %v4544 = vadd.s32 %v4536, %v4542
          %vm4545 = vc.u32 %v4543, %v4539
          %v4546 = vsel %vm4545, 1, 0
          %v4547 = vadd.s32 %v4543, %v4539
          %v4548 = vadd.s32 %v4544, %v4546
          %v4549 = vadd.s32 %v4548, %v4538
          %v4550 = vadd.s32 %v4549, %v4540
          %v4551 = vand.u32 %v4528, 65535
          %v4552 = vshrl.u32 %v4528, 16
          %v4553 = vand.u32 %v4523, 65535
          %v4554 = vshrl.u32 %v4523, 16
          %v4555 = vmul.u32 %v4551, %v4553
          %v4556 = vmul.u32 %v4551, %v4554
          %v4557 = vmul.u32 %v4552, %v4553
          %v4558 = vmul.u32 %v4552, %v4554
          %v4559 = vshll.u32 %v4556, 16
          %v4560 = vshrl.u32 %v4556, 16
          %v4561 = vshll.u32 %v4557, 16
          %v4562 = vshrl.u32 %v4557, 16
          %vm4563 = vc.u32 %v4555, %v4559
          %v4564 = vsel %vm4563, 1, 0
          %v4565 = vadd.s32 %v4555, %v4559
          %v4566 = vadd.s32 %v4558, %v4564
          %vm4567 = vc.u32 %v4565, %v4561
          %v4568 = vsel %vm4567, 1, 0
          %v4569 = vadd.s32 %v4565, %v4561
          %v4570 = vadd.s32 %v4566, %v4568
          %v4571 = vadd.s32 %v4570, %v4560
          %v4572 = vadd.s32 %v4571, %v4562
          %v4573 = vmul.u32 %v4528, %v4519
          %v4574 = vadd.s32 %v4550, %v4569
          %vm4575 = vc.u32 %v4550, %v4569
          %v4576 = vadd.s32 %v4572, 1
          %v4577 = vsel %vm4575, %v4576, %v4572
          %v4578 = vadd.s32 %v4573, %v4577
          %v4579 = vadd.s32 %v4578, 536870912
          %v4580 = vshrl.u32 %v4579, 30
          %v4581 = vshll.u32 %v4580, 30
          %v4582 = vsub.s32 %v4578, %v4581
          %vm4583 = vcmp.lt.s32.totalorder %v4582, 0
          %v4584 = vsub.s32 0, %v4582
          %v4585 = vsel %vm4583, %v4584, %v4582
          %v4586 = vclz %v4585
          %v4587 = vsub.s32 %v4586, 2
          %vm4588 = vcmp.gt.s32.totalorder 0, %v4587
          %v4589 = vsel %vm4588, 0, %v4587
          %v4590 = vsub.s32 32, %v4589
          %v4591 = vshll.u32 %v4582, %v4589
          %v4592 = vshrl.u32 %v4574, %v4590
          %v4593 = vor.u32 %v4591, %v4592
          %v4594 = vsub.s32 4294967266, %v4589
          %v4595 = vadd.s32 %v4594, 127
          %v4596 = vshll.u32 %v4595, 23
          %v4597 = vor.u32 4788187, %v4596
          %v4598 = vand.u32 2147483647, %v4597
          %v4600 = vcvt.s32.f32 %v4593
          %v4601 = vmul.f32 %v4600, %v4598
          %v4602 = vxor.u32 %v4601, 2147483648
          %v4603 = vsel %vm4482, %v4602, %v4601
          %v4604 = vsub.s32 4, %v4580
          %v4605 = vsel %vm4482, %v4604, %v4580
          %v4606 = vsel %vm4481, %v598, %v4603
          %v4607 = vsel %vm4481, 0, %v4605
          %v4608 = vmul.f32 %v4606, %v4606
          %v4609 = vmul.f32 %v4608, -0.001358992
          %v4610 = vadd.f32 %v4609, 0.041655596
          %v4611 = vmul.f32 %v4608, %v4610
          %v4612 = vadd.f32 %v4611, -0.4999988
          %v4613 = vmul.f32 %v4608, %v4612
          %v4614 = vadd.f32 1.0, %v4613
          %v4615 = vmul.f32 %v4606, %v4606
          %v4616 = vmul.f32 %v4615, -0.00019511016
          %v4617 = vadd.f32 %v4616, 0.008332121
          %v4618 = vmul.f32 %v4615, %v4617
          %v4619 = vadd.f32 %v4618, -0.16666654
          %v4620 = vmul.f32 %v4615, %v4619
          %v4621 = vadd.f32 %v4620, 1.0
          %v4622 = vmul.f32 %v4621, %v4606
          %vm4623 = vweird.f32 %v598
          %v4624 = vadd.s32 %v4607, 3
          %v4625 = vand.u32 %v4624, 3
          %vm4626 = vcmp.lt.s32.totalorder %v4625, 2
          %vm4627 = vcmp.eq.s32.totalorder %v4625, 0
          %v4628 = vxor.u32 %v4622, 2147483648
          %v4629 = vsel %vm4627, %v4614, %v4628
          %vm4630 = vcmp.eq.s32.totalorder %v4625, 2
          %v4631 = vxor.u32 %v4614, 2147483648
          %v4632 = vsel %vm4630, %v4631, %v4622
          %v4633 = vsel %vm4626, %v4629, %v4632
          %v4634 = vsel %vm4623, nan, %v4633
          %v4635 = vand.u32 2147483647, %v599
          %vm4636 = vcmp.le.f32.partialorder %v4635, 0.7853982
          %vm4637 = vcmp.lt.s32.totalorder %v599, 0
          %v4638 = vand.u32 %v599, 2139095040
          %v4639 = vshrl.u32 %v4638, 23
          %v4640 = vsub.s32 %v4639, 127
          %v4641 = vand.u32 2147483647, %v599
          %v4642 = vand.u32 %v4641, 8388607
          %v4643 = vor.u32 %v4642, 8388608
          %v4644 = vsub.s32 0, %v4643
          %v4645 = vadd.s32 %v4640, 1
          %vm4646 = vcmp.gt.s32.totalorder %v4645, 0
          %v4647 = vsel %vm4646, %v4645, 0
          %v4648 = vshrl.u32 %v4647, 5
          %v4649 = vand.u32 %v4647, 31
          %v4650 = vsub.s32 32, %v4649
          %v4651 = vshrl.u32 683565275, %v4650
          %v4652 = vshll.u32 683565275, %v4649
          %v4653 = vshrl.u32 2475754826, %v4650
          %v4654 = vor.u32 %v4652, %v4653
          %v4655 = vshll.u32 2475754826, %v4649
          %v4656 = vshrl.u32 2131351028, %v4650
          %v4657 = vor.u32 %v4655, %v4656
          %v4658 = vshll.u32 2131351028, %v4649
          %v4659 = vshrl.u32 2102212464, %v4650
          %v4660 = vor.u32 %v4658, %v4659
          %v4661 = vshll.u32 2102212464, %v4649
          %v4662 = vshrl.u32 920167782, %v4650
          %v4663 = vor.u32 %v4661, %v4662
          %v4664 = vshll.u32 920167782, %v4649
          %v4665 = vshrl.u32 1326507024, %v4650
          %v4666 = vor.u32 %v4664, %v4665
          %vm4667 = vcmp.lt.s32.totalorder %v4648, 1
          %vm4668 = vcmp.lt.s32.totalorder %v4648, 2
          %vm4669 = vcmp.lt.s32.totalorder %v4648, 3
          %vm4670 = vcmp.lt.s32.totalorder %v4648, 4
          %v4671 = vsel %vm4667, %v4651, %v4654
          %v4672 = vsel %vm4670, %v4660, 2102212464
          %v4673 = vsel %vm4669, %v4657, %v4672
          %v4674 = vsel %vm4668, %v4671, %v4673
          %v4675 = vsel %vm4667, %v4654, %v4657
          %v4676 = vsel %vm4670, %v4663, 920167782
          %v4677 = vsel %vm4669, %v4660, %v4676
          %v4678 = vsel %vm4668, %v4675, %v4677
          %v4679 = vsel %vm4667, %v4657, %v4660
          %v4680 = vsel %vm4670, %v4666, 1326507024
          %v4681 = vsel %vm4669, %v4663, %v4680
          %v4682 = vsel %vm4668, %v4679, %v4681
          %v4683 = vshll.u32 %v4643, 8
          %v4684 = vand.u32 %v4683, 65535
          %v4685 = vshrl.u32 %v4683, 16
          %v4686 = vand.u32 %v4682, 65535
          %v4687 = vshrl.u32 %v4682, 16
          %v4688 = vmul.u32 %v4684, %v4686
          %v4689 = vmul.u32 %v4684, %v4687
          %v4690 = vmul.u32 %v4685, %v4686
          %v4691 = vmul.u32 %v4685, %v4687
          %v4692 = vshll.u32 %v4689, 16
          %v4693 = vshrl.u32 %v4689, 16
          %v4694 = vshll.u32 %v4690, 16
          %v4695 = vshrl.u32 %v4690, 16
          %vm4696 = vc.u32 %v4688, %v4692
          %v4697 = vsel %vm4696, 1, 0
          %v4698 = vadd.s32 %v4688, %v4692
          %v4699 = vadd.s32 %v4691, %v4697
          %vm4700 = vc.u32 %v4698, %v4694
          %v4701 = vsel %vm4700, 1, 0
          %v4702 = vadd.s32 %v4698, %v4694
          %v4703 = vadd.s32 %v4699, %v4701
          %v4704 = vadd.s32 %v4703, %v4693
          %v4705 = vadd.s32 %v4704, %v4695
          %v4706 = vand.u32 %v4683, 65535
          %v4707 = vshrl.u32 %v4683, 16
          %v4708 = vand.u32 %v4678, 65535
          %v4709 = vshrl.u32 %v4678, 16
          %v4710 = vmul.u32 %v4706, %v4708
          %v4711 = vmul.u32 %v4706, %v4709
          %v4712 = vmul.u32 %v4707, %v4708
          %v4713 = vmul.u32 %v4707, %v4709
          %v4714 = vshll.u32 %v4711, 16
          %v4715 = vshrl.u32 %v4711, 16
          %v4716 = vshll.u32 %v4712, 16
          %v4717 = vshrl.u32 %v4712, 16
          %vm4718 = vc.u32 %v4710, %v4714
          %v4719 = vsel %vm4718, 1, 0
          %v4720 = vadd.s32 %v4710, %v4714
          %v4721 = vadd.s32 %v4713, %v4719
          %vm4722 = vc.u32 %v4720, %v4716
          %v4723 = vsel %vm4722, 1, 0
          %v4724 = vadd.s32 %v4720, %v4716
          %v4725 = vadd.s32 %v4721, %v4723
          %v4726 = vadd.s32 %v4725, %v4715
          %v4727 = vadd.s32 %v4726, %v4717
          %v4728 = vmul.u32 %v4683, %v4674
          %v4729 = vadd.s32 %v4705, %v4724
          %vm4730 = vc.u32 %v4705, %v4724
          %v4731 = vadd.s32 %v4727, 1
          %v4732 = vsel %vm4730, %v4731, %v4727
          %v4733 = vadd.s32 %v4728, %v4732
          %v4734 = vadd.s32 %v4733, 536870912
          %v4735 = vshrl.u32 %v4734, 30
          %v4736 = vshll.u32 %v4735, 30
          %v4737 = vsub.s32 %v4733, %v4736
          %vm4738 = vcmp.lt.s32.totalorder %v4737, 0
          %v4739 = vsub.s32 0, %v4737
          %v4740 = vsel %vm4738, %v4739, %v4737
          %v4741 = vclz %v4740
          %v4742 = vsub.s32 %v4741, 2
          %vm4743 = vcmp.gt.s32.totalorder 0, %v4742
          %v4744 = vsel %vm4743, 0, %v4742
          %v4745 = vsub.s32 32, %v4744
          %v4746 = vshll.u32 %v4737, %v4744
          %v4747 = vshrl.u32 %v4729, %v4745
          %v4748 = vor.u32 %v4746, %v4747
          %v4749 = vsub.s32 4294967266, %v4744
          %v4750 = vadd.s32 %v4749, 127
          %v4751 = vshll.u32 %v4750, 23
          %v4752 = vor.u32 4788187, %v4751
          %v4753 = vand.u32 2147483647, %v4752
          %v4755 = vcvt.s32.f32 %v4748
          %v4756 = vmul.f32 %v4755, %v4753
          %v4757 = vxor.u32 %v4756, 2147483648
          %v4758 = vsel %vm4637, %v4757, %v4756
          %v4759 = vsub.s32 4, %v4735
          %v4760 = vsel %vm4637, %v4759, %v4735
          %v4761 = vsel %vm4636, %v599, %v4758
          %v4762 = vsel %vm4636, 0, %v4760
          %v4763 = vmul.f32 %v4761, %v4761
          %v4764 = vmul.f32 %v4763, -0.001358992
          %v4765 = vadd.f32 %v4764, 0.041655596
          %v4766 = vmul.f32 %v4763, %v4765
          %v4767 = vadd.f32 %v4766, -0.4999988
          %v4768 = vmul.f32 %v4763, %v4767
          %v4769 = vadd.f32 1.0, %v4768
          %v4770 = vmul.f32 %v4761, %v4761
          %v4771 = vmul.f32 %v4770, -0.00019511016
          %v4772 = vadd.f32 %v4771, 0.008332121
          %v4773 = vmul.f32 %v4770, %v4772
          %v4774 = vadd.f32 %v4773, -0.16666654
          %v4775 = vmul.f32 %v4770, %v4774
          %v4776 = vadd.f32 %v4775, 1.0
          %v4777 = vmul.f32 %v4776, %v4761
          %vm4778 = vweird.f32 %v599
          %v4779 = vadd.s32 %v4762, 3
          %v4780 = vand.u32 %v4779, 3
          %vm4781 = vcmp.lt.s32.totalorder %v4780, 2
          %vm4782 = vcmp.eq.s32.totalorder %v4780, 0
          %v4783 = vxor.u32 %v4777, 2147483648
          %v4784 = vsel %vm4782, %v4769, %v4783
          %vm4785 = vcmp.eq.s32.totalorder %v4780, 2
          %v4786 = vxor.u32 %v4769, 2147483648
          %v4787 = vsel %vm4785, %v4786, %v4777
          %v4788 = vsel %vm4781, %v4784, %v4787
          %v4789 = vsel %vm4778, nan, %v4788
          %v4790 = vand.u32 2147483647, %v600
          %vm4791 = vcmp.le.f32.partialorder %v4790, 0.7853982
          %vm4792 = vcmp.lt.s32.totalorder %v600, 0
          %v4793 = vand.u32 %v600, 2139095040
          %v4794 = vshrl.u32 %v4793, 23
          %v4795 = vsub.s32 %v4794, 127
          %v4796 = vand.u32 2147483647, %v600
          %v4797 = vand.u32 %v4796, 8388607
          %v4798 = vor.u32 %v4797, 8388608
          %v4799 = vsub.s32 0, %v4798
          %v4800 = vadd.s32 %v4795, 1
          %vm4801 = vcmp.gt.s32.totalorder %v4800, 0
          %v4802 = vsel %vm4801, %v4800, 0
          %v4803 = vshrl.u32 %v4802, 5
          %v4804 = vand.u32 %v4802, 31
          %v4805 = vsub.s32 32, %v4804
          %v4806 = vshrl.u32 683565275, %v4805
          %v4807 = vshll.u32 683565275, %v4804
          %v4808 = vshrl.u32 2475754826, %v4805
          %v4809 = vor.u32 %v4807, %v4808
          %v4810 = vshll.u32 2475754826, %v4804
          %v4811 = vshrl.u32 2131351028, %v4805
          %v4812 = vor.u32 %v4810, %v4811
          %v4813 = vshll.u32 2131351028, %v4804
          %v4814 = vshrl.u32 2102212464, %v4805
          %v4815 = vor.u32 %v4813, %v4814
          %v4816 = vshll.u32 2102212464, %v4804
          %v4817 = vshrl.u32 920167782, %v4805
          %v4818 = vor.u32 %v4816, %v4817
          %v4819 = vshll.u32 920167782, %v4804
          %v4820 = vshrl.u32 1326507024, %v4805
          %v4821 = vor.u32 %v4819, %v4820
          %vm4822 = vcmp.lt.s32.totalorder %v4803, 1
          %vm4823 = vcmp.lt.s32.totalorder %v4803, 2
          %vm4824 = vcmp.lt.s32.totalorder %v4803, 3
          %vm4825 = vcmp.lt.s32.totalorder %v4803, 4
          %v4826 = vsel %vm4822, %v4806, %v4809
          %v4827 = vsel %vm4825, %v4815, 2102212464
          %v4828 = vsel %vm4824, %v4812, %v4827
          %v4829 = vsel %vm4823, %v4826, %v4828
          %v4830 = vsel %vm4822, %v4809, %v4812
          %v4831 = vsel %vm4825, %v4818, 920167782
          %v4832 = vsel %vm4824, %v4815, %v4831
          %v4833 = vsel %vm4823, %v4830, %v4832
          %v4834 = vsel %vm4822, %v4812, %v4815
          %v4835 = vsel %vm4825, %v4821, 1326507024
          %v4836 = vsel %vm4824, %v4818, %v4835
          %v4837 = vsel %vm4823, %v4834, %v4836
          %v4838 = vshll.u32 %v4798, 8
          %v4839 = vand.u32 %v4838, 65535
          %v4840 = vshrl.u32 %v4838, 16
          %v4841 = vand.u32 %v4837, 65535
          %v4842 = vshrl.u32 %v4837, 16
          %v4843 = vmul.u32 %v4839, %v4841
          %v4844 = vmul.u32 %v4839, %v4842
          %v4845 = vmul.u32 %v4840, %v4841
          %v4846 = vmul.u32 %v4840, %v4842
          %v4847 = vshll.u32 %v4844, 16
          %v4848 = vshrl.u32 %v4844, 16
          %v4849 = vshll.u32 %v4845, 16
          %v4850 = vshrl.u32 %v4845, 16
          %vm4851 = vc.u32 %v4843, %v4847
          %v4852 = vsel %vm4851, 1, 0
          %v4853 = vadd.s32 %v4843, %v4847
          %v4854 = vadd.s32 %v4846, %v4852
          %vm4855 = vc.u32 %v4853, %v4849
          %v4856 = vsel %vm4855, 1, 0
          %v4857 = vadd.s32 %v4853, %v4849
          %v4858 = vadd.s32 %v4854, %v4856
          %v4859 = vadd.s32 %v4858, %v4848
          %v4860 = vadd.s32 %v4859, %v4850
          %v4861 = vand.u32 %v4838, 65535
          %v4862 = vshrl.u32 %v4838, 16
          %v4863 = vand.u32 %v4833, 65535
          %v4864 = vshrl.u32 %v4833, 16
          %v4865 = vmul.u32 %v4861, %v4863
          %v4866 = vmul.u32 %v4861, %v4864
          %v4867 = vmul.u32 %v4862, %v4863
          %v4868 = vmul.u32 %v4862, %v4864
          %v4869 = vshll.u32 %v4866, 16
          %v4870 = vshrl.u32 %v4866, 16
          %v4871 = vshll.u32 %v4867, 16
          %v4872 = vshrl.u32 %v4867, 16
          %vm4873 = vc.u32 %v4865, %v4869
          %v4874 = vsel %vm4873, 1, 0
          %v4875 = vadd.s32 %v4865, %v4869
          %v4876 = vadd.s32 %v4868, %v4874
          %vm4877 = vc.u32 %v4875, %v4871
          %v4878 = vsel %vm4877, 1, 0
          %v4879 = vadd.s32 %v4875, %v4871
          %v4880 = vadd.s32 %v4876, %v4878
          %v4881 = vadd.s32 %v4880, %v4870
          %v4882 = vadd.s32 %v4881, %v4872
          %v4883 = vmul.u32 %v4838, %v4829
          %v4884 = vadd.s32 %v4860, %v4879
          %vm4885 = vc.u32 %v4860, %v4879
          %v4886 = vadd.s32 %v4882, 1
          %v4887 = vsel %vm4885, %v4886, %v4882
          %v4888 = vadd.s32 %v4883, %v4887
          %v4889 = vadd.s32 %v4888, 536870912
          %v4890 = vshrl.u32 %v4889, 30
          %v4891 = vshll.u32 %v4890, 30
          %v4892 = vsub.s32 %v4888, %v4891
          %vm4893 = vcmp.lt.s32.totalorder %v4892, 0
          %v4894 = vsub.s32 0, %v4892
          %v4895 = vsel %vm4893, %v4894, %v4892
          %v4896 = vclz %v4895
          %v4897 = vsub.s32 %v4896, 2
          %vm4898 = vcmp.gt.s32.totalorder 0, %v4897
          %v4899 = vsel %vm4898, 0, %v4897
          %v4900 = vsub.s32 32, %v4899
          %v4901 = vshll.u32 %v4892, %v4899
          %v4902 = vshrl.u32 %v4884, %v4900
          %v4903 = vor.u32 %v4901, %v4902
          %v4904 = vsub.s32 4294967266, %v4899
          %v4905 = vadd.s32 %v4904, 127
          %v4906 = vshll.u32 %v4905, 23
          %v4907 = vor.u32 4788187, %v4906
          %v4908 = vand.u32 2147483647, %v4907
          %v4910 = vcvt.s32.f32 %v4903
          %v4911 = vmul.f32 %v4910, %v4908
          %v4912 = vxor.u32 %v4911, 2147483648
          %v4913 = vsel %vm4792, %v4912, %v4911
          %v4914 = vsub.s32 4, %v4890
          %v4915 = vsel %vm4792, %v4914, %v4890
          %v4916 = vsel %vm4791, %v600, %v4913
          %v4917 = vsel %vm4791, 0, %v4915
          %v4918 = vmul.f32 %v4916, %v4916
          %v4919 = vmul.f32 %v4918, -0.001358992
          %v4920 = vadd.f32 %v4919, 0.041655596
          %v4921 = vmul.f32 %v4918, %v4920
          %v4922 = vadd.f32 %v4921, -0.4999988
          %v4923 = vmul.f32 %v4918, %v4922
          %v4924 = vadd.f32 1.0, %v4923
          %v4925 = vmul.f32 %v4916, %v4916
          %v4926 = vmul.f32 %v4925, -0.00019511016
          %v4927 = vadd.f32 %v4926, 0.008332121
          %v4928 = vmul.f32 %v4925, %v4927
          %v4929 = vadd.f32 %v4928, -0.16666654
          %v4930 = vmul.f32 %v4925, %v4929
          %v4931 = vadd.f32 %v4930, 1.0
          %v4932 = vmul.f32 %v4931, %v4916
          %vm4933 = vweird.f32 %v600
          %v4934 = vadd.s32 %v4917, 3
          %v4935 = vand.u32 %v4934, 3
          %vm4936 = vcmp.lt.s32.totalorder %v4935, 2
          %vm4937 = vcmp.eq.s32.totalorder %v4935, 0
          %v4938 = vxor.u32 %v4932, 2147483648
          %v4939 = vsel %vm4937, %v4924, %v4938
          %vm4940 = vcmp.eq.s32.totalorder %v4935, 2
          %v4941 = vxor.u32 %v4924, 2147483648
          %v4942 = vsel %vm4940, %v4941, %v4932
          %v4943 = vsel %vm4936, %v4939, %v4942
          %v4944 = vsel %vm4933, nan, %v4943
          %v4945 = vand.u32 2147483647, %v601
          %vm4946 = vcmp.le.f32.partialorder %v4945, 0.7853982
          %vm4947 = vcmp.lt.s32.totalorder %v601, 0
          %v4948 = vand.u32 %v601, 2139095040
          %v4949 = vshrl.u32 %v4948, 23
          %v4950 = vsub.s32 %v4949, 127
          %v4951 = vand.u32 2147483647, %v601
          %v4952 = vand.u32 %v4951, 8388607
          %v4953 = vor.u32 %v4952, 8388608
          %v4954 = vsub.s32 0, %v4953
          %v4955 = vadd.s32 %v4950, 1
          %vm4956 = vcmp.gt.s32.totalorder %v4955, 0
          %v4957 = vsel %vm4956, %v4955, 0
          %v4958 = vshrl.u32 %v4957, 5
          %v4959 = vand.u32 %v4957, 31
          %v4960 = vsub.s32 32, %v4959
          %v4961 = vshrl.u32 683565275, %v4960
          %v4962 = vshll.u32 683565275, %v4959
          %v4963 = vshrl.u32 2475754826, %v4960
          %v4964 = vor.u32 %v4962, %v4963
          %v4965 = vshll.u32 2475754826, %v4959
          %v4966 = vshrl.u32 2131351028, %v4960
          %v4967 = vor.u32 %v4965, %v4966
          %v4968 = vshll.u32 2131351028, %v4959
          %v4969 = vshrl.u32 2102212464, %v4960
          %v4970 = vor.u32 %v4968, %v4969
          %v4971 = vshll.u32 2102212464, %v4959
          %v4972 = vshrl.u32 920167782, %v4960
          %v4973 = vor.u32 %v4971, %v4972
          %v4974 = vshll.u32 920167782, %v4959
          %v4975 = vshrl.u32 1326507024, %v4960
          %v4976 = vor.u32 %v4974, %v4975
          %vm4977 = vcmp.lt.s32.totalorder %v4958, 1
          %vm4978 = vcmp.lt.s32.totalorder %v4958, 2
          %vm4979 = vcmp.lt.s32.totalorder %v4958, 3
          %vm4980 = vcmp.lt.s32.totalorder %v4958, 4
          %v4981 = vsel %vm4977, %v4961, %v4964
          %v4982 = vsel %vm4980, %v4970, 2102212464
          %v4983 = vsel %vm4979, %v4967, %v4982
          %v4984 = vsel %vm4978, %v4981, %v4983
          %v4985 = vsel %vm4977, %v4964, %v4967
          %v4986 = vsel %vm4980, %v4973, 920167782
          %v4987 = vsel %vm4979, %v4970, %v4986
          %v4988 = vsel %vm4978, %v4985, %v4987
          %v4989 = vsel %vm4977, %v4967, %v4970
          %v4990 = vsel %vm4980, %v4976, 1326507024
          %v4991 = vsel %vm4979, %v4973, %v4990
          %v4992 = vsel %vm4978, %v4989, %v4991
          %v4993 = vshll.u32 %v4953, 8
          %v4994 = vand.u32 %v4993, 65535
          %v4995 = vshrl.u32 %v4993, 16
          %v4996 = vand.u32 %v4992, 65535
          %v4997 = vshrl.u32 %v4992, 16
          %v4998 = vmul.u32 %v4994, %v4996
          %v4999 = vmul.u32 %v4994, %v4997
          %v5000 = vmul.u32 %v4995, %v4996
          %v5001 = vmul.u32 %v4995, %v4997
          %v5002 = vshll.u32 %v4999, 16
          %v5003 = vshrl.u32 %v4999, 16
          %v5004 = vshll.u32 %v5000, 16
          %v5005 = vshrl.u32 %v5000, 16
          %vm5006 = vc.u32 %v4998, %v5002
          %v5007 = vsel %vm5006, 1, 0
          %v5008 = vadd.s32 %v4998, %v5002
          %v5009 = vadd.s32 %v5001, %v5007
          %vm5010 = vc.u32 %v5008, %v5004
          %v5011 = vsel %vm5010, 1, 0
          %v5012 = vadd.s32 %v5008, %v5004
          %v5013 = vadd.s32 %v5009, %v5011
          %v5014 = vadd.s32 %v5013, %v5003
          %v5015 = vadd.s32 %v5014, %v5005
          %v5016 = vand.u32 %v4993, 65535
          %v5017 = vshrl.u32 %v4993, 16
          %v5018 = vand.u32 %v4988, 65535
          %v5019 = vshrl.u32 %v4988, 16
          %v5020 = vmul.u32 %v5016, %v5018
          %v5021 = vmul.u32 %v5016, %v5019
          %v5022 = vmul.u32 %v5017, %v5018
          %v5023 = vmul.u32 %v5017, %v5019
          %v5024 = vshll.u32 %v5021, 16
          %v5025 = vshrl.u32 %v5021, 16
          %v5026 = vshll.u32 %v5022, 16
          %v5027 = vshrl.u32 %v5022, 16
          %vm5028 = vc.u32 %v5020, %v5024
          %v5029 = vsel %vm5028, 1, 0
          %v5030 = vadd.s32 %v5020, %v5024
          %v5031 = vadd.s32 %v5023, %v5029
          %vm5032 = vc.u32 %v5030, %v5026
          %v5033 = vsel %vm5032, 1, 0
          %v5034 = vadd.s32 %v5030, %v5026
          %v5035 = vadd.s32 %v5031, %v5033
          %v5036 = vadd.s32 %v5035, %v5025
          %v5037 = vadd.s32 %v5036, %v5027
          %v5038 = vmul.u32 %v4993, %v4984
          %v5039 = vadd.s32 %v5015, %v5034
          %vm5040 = vc.u32 %v5015, %v5034
          %v5041 = vadd.s32 %v5037, 1
          %v5042 = vsel %vm5040, %v5041, %v5037
          %v5043 = vadd.s32 %v5038, %v5042
          %v5044 = vadd.s32 %v5043, 536870912
          %v5045 = vshrl.u32 %v5044, 30
          %v5046 = vshll.u32 %v5045, 30
          %v5047 = vsub.s32 %v5043, %v5046
          %vm5048 = vcmp.lt.s32.totalorder %v5047, 0
          %v5049 = vsub.s32 0, %v5047
          %v5050 = vsel %vm5048, %v5049, %v5047
          %v5051 = vclz %v5050
          %v5052 = vsub.s32 %v5051, 2
          %vm5053 = vcmp.gt.s32.totalorder 0, %v5052
          %v5054 = vsel %vm5053, 0, %v5052
          %v5055 = vsub.s32 32, %v5054
          %v5056 = vshll.u32 %v5047, %v5054
          %v5057 = vshrl.u32 %v5039, %v5055
          %v5058 = vor.u32 %v5056, %v5057
          %v5059 = vsub.s32 4294967266, %v5054
          %v5060 = vadd.s32 %v5059, 127
          %v5061 = vshll.u32 %v5060, 23
          %v5062 = vor.u32 4788187, %v5061
          %v5063 = vand.u32 2147483647, %v5062
          %v5065 = vcvt.s32.f32 %v5058
          %v5066 = vmul.f32 %v5065, %v5063
          %v5067 = vxor.u32 %v5066, 2147483648
          %v5068 = vsel %vm4947, %v5067, %v5066
          %v5069 = vsub.s32 4, %v5045
          %v5070 = vsel %vm4947, %v5069, %v5045
          %v5071 = vsel %vm4946, %v601, %v5068
          %v5072 = vsel %vm4946, 0, %v5070
          %v5073 = vmul.f32 %v5071, %v5071
          %v5074 = vmul.f32 %v5073, -0.001358992
          %v5075 = vadd.f32 %v5074, 0.041655596
          %v5076 = vmul.f32 %v5073, %v5075
          %v5077 = vadd.f32 %v5076, -0.4999988
          %v5078 = vmul.f32 %v5073, %v5077
          %v5079 = vadd.f32 1.0, %v5078
          %v5080 = vmul.f32 %v5071, %v5071
          %v5081 = vmul.f32 %v5080, -0.00019511016
          %v5082 = vadd.f32 %v5081, 0.008332121
          %v5083 = vmul.f32 %v5080, %v5082
          %v5084 = vadd.f32 %v5083, -0.16666654
          %v5085 = vmul.f32 %v5080, %v5084
          %v5086 = vadd.f32 %v5085, 1.0
          %v5087 = vmul.f32 %v5086, %v5071
          %vm5088 = vweird.f32 %v601
          %v5089 = vadd.s32 %v5072, 3
          %v5090 = vand.u32 %v5089, 3
          %vm5091 = vcmp.lt.s32.totalorder %v5090, 2
          %vm5092 = vcmp.eq.s32.totalorder %v5090, 0
          %v5093 = vxor.u32 %v5087, 2147483648
          %v5094 = vsel %vm5092, %v5079, %v5093
          %vm5095 = vcmp.eq.s32.totalorder %v5090, 2
          %v5096 = vxor.u32 %v5079, 2147483648
          %v5097 = vsel %vm5095, %v5096, %v5087
          %v5098 = vsel %vm5091, %v5094, %v5097
          %v5099 = vsel %vm5088, nan, %v5098
          %v5100 = vand.u32 2147483647, %v602
          %vm5101 = vcmp.le.f32.partialorder %v5100, 0.7853982
          %vm5102 = vcmp.lt.s32.totalorder %v602, 0
          %v5103 = vand.u32 %v602, 2139095040
          %v5104 = vshrl.u32 %v5103, 23
          %v5105 = vsub.s32 %v5104, 127
          %v5106 = vand.u32 2147483647, %v602
          %v5107 = vand.u32 %v5106, 8388607
          %v5108 = vor.u32 %v5107, 8388608
          %v5109 = vsub.s32 0, %v5108
          %v5110 = vadd.s32 %v5105, 1
          %vm5111 = vcmp.gt.s32.totalorder %v5110, 0
          %v5112 = vsel %vm5111, %v5110, 0
          %v5113 = vshrl.u32 %v5112, 5
          %v5114 = vand.u32 %v5112, 31
          %v5115 = vsub.s32 32, %v5114
          %v5116 = vshrl.u32 683565275, %v5115
          %v5117 = vshll.u32 683565275, %v5114
          %v5118 = vshrl.u32 2475754826, %v5115
          %v5119 = vor.u32 %v5117, %v5118
          %v5120 = vshll.u32 2475754826, %v5114
          %v5121 = vshrl.u32 2131351028, %v5115
          %v5122 = vor.u32 %v5120, %v5121
          %v5123 = vshll.u32 2131351028, %v5114
          %v5124 = vshrl.u32 2102212464, %v5115
          %v5125 = vor.u32 %v5123, %v5124
          %v5126 = vshll.u32 2102212464, %v5114
          %v5127 = vshrl.u32 920167782, %v5115
          %v5128 = vor.u32 %v5126, %v5127
          %v5129 = vshll.u32 920167782, %v5114
          %v5130 = vshrl.u32 1326507024, %v5115
          %v5131 = vor.u32 %v5129, %v5130
          %vm5132 = vcmp.lt.s32.totalorder %v5113, 1
          %vm5133 = vcmp.lt.s32.totalorder %v5113, 2
          %vm5134 = vcmp.lt.s32.totalorder %v5113, 3
          %vm5135 = vcmp.lt.s32.totalorder %v5113, 4
          %v5136 = vsel %vm5132, %v5116, %v5119
          %v5137 = vsel %vm5135, %v5125, 2102212464
          %v5138 = vsel %vm5134, %v5122, %v5137
          %v5139 = vsel %vm5133, %v5136, %v5138
          %v5140 = vsel %vm5132, %v5119, %v5122
          %v5141 = vsel %vm5135, %v5128, 920167782
          %v5142 = vsel %vm5134, %v5125, %v5141
          %v5143 = vsel %vm5133, %v5140, %v5142
          %v5144 = vsel %vm5132, %v5122, %v5125
          %v5145 = vsel %vm5135, %v5131, 1326507024
          %v5146 = vsel %vm5134, %v5128, %v5145
          %v5147 = vsel %vm5133, %v5144, %v5146
          %v5148 = vshll.u32 %v5108, 8
          %v5149 = vand.u32 %v5148, 65535
          %v5150 = vshrl.u32 %v5148, 16
          %v5151 = vand.u32 %v5147, 65535
          %v5152 = vshrl.u32 %v5147, 16
          %v5153 = vmul.u32 %v5149, %v5151
          %v5154 = vmul.u32 %v5149, %v5152
          %v5155 = vmul.u32 %v5150, %v5151
          %v5156 = vmul.u32 %v5150, %v5152
          %v5157 = vshll.u32 %v5154, 16
          %v5158 = vshrl.u32 %v5154, 16
          %v5159 = vshll.u32 %v5155, 16
          %v5160 = vshrl.u32 %v5155, 16
          %vm5161 = vc.u32 %v5153, %v5157
          %v5162 = vsel %vm5161, 1, 0
          %v5163 = vadd.s32 %v5153, %v5157
          %v5164 = vadd.s32 %v5156, %v5162
          %vm5165 = vc.u32 %v5163, %v5159
          %v5166 = vsel %vm5165, 1, 0
          %v5167 = vadd.s32 %v5163, %v5159
          %v5168 = vadd.s32 %v5164, %v5166
          %v5169 = vadd.s32 %v5168, %v5158
          %v5170 = vadd.s32 %v5169, %v5160
          %v5171 = vand.u32 %v5148, 65535
          %v5172 = vshrl.u32 %v5148, 16
          %v5173 = vand.u32 %v5143, 65535
          %v5174 = vshrl.u32 %v5143, 16
          %v5175 = vmul.u32 %v5171, %v5173
          %v5176 = vmul.u32 %v5171, %v5174
          %v5177 = vmul.u32 %v5172, %v5173
          %v5178 = vmul.u32 %v5172, %v5174
          %v5179 = vshll.u32 %v5176, 16
          %v5180 = vshrl.u32 %v5176, 16
          %v5181 = vshll.u32 %v5177, 16
          %v5182 = vshrl.u32 %v5177, 16
          %vm5183 = vc.u32 %v5175, %v5179
          %v5184 = vsel %vm5183, 1, 0
          %v5185 = vadd.s32 %v5175, %v5179
          %v5186 = vadd.s32 %v5178, %v5184
          %vm5187 = vc.u32 %v5185, %v5181
          %v5188 = vsel %vm5187, 1, 0
          %v5189 = vadd.s32 %v5185, %v5181
          %v5190 = vadd.s32 %v5186, %v5188
          %v5191 = vadd.s32 %v5190, %v5180
          %v5192 = vadd.s32 %v5191, %v5182
          %v5193 = vmul.u32 %v5148, %v5139
          %v5194 = vadd.s32 %v5170, %v5189
          %vm5195 = vc.u32 %v5170, %v5189
          %v5196 = vadd.s32 %v5192, 1
          %v5197 = vsel %vm5195, %v5196, %v5192
          %v5198 = vadd.s32 %v5193, %v5197
          %v5199 = vadd.s32 %v5198, 536870912
          %v5200 = vshrl.u32 %v5199, 30
          %v5201 = vshll.u32 %v5200, 30
          %v5202 = vsub.s32 %v5198, %v5201
          %vm5203 = vcmp.lt.s32.totalorder %v5202, 0
          %v5204 = vsub.s32 0, %v5202
          %v5205 = vsel %vm5203, %v5204, %v5202
          %v5206 = vclz %v5205
          %v5207 = vsub.s32 %v5206, 2
          %vm5208 = vcmp.gt.s32.totalorder 0, %v5207
          %v5209 = vsel %vm5208, 0, %v5207
          %v5210 = vsub.s32 32, %v5209
          %v5211 = vshll.u32 %v5202, %v5209
          %v5212 = vshrl.u32 %v5194, %v5210
          %v5213 = vor.u32 %v5211, %v5212
          %v5214 = vsub.s32 4294967266, %v5209
          %v5215 = vadd.s32 %v5214, 127
          %v5216 = vshll.u32 %v5215, 23
          %v5217 = vor.u32 4788187, %v5216
          %v5218 = vand.u32 2147483647, %v5217
          %v5220 = vcvt.s32.f32 %v5213
          %v5221 = vmul.f32 %v5220, %v5218
          %v5222 = vxor.u32 %v5221, 2147483648
          %v5223 = vsel %vm5102, %v5222, %v5221
          %v5224 = vsub.s32 4, %v5200
          %v5225 = vsel %vm5102, %v5224, %v5200
          %v5226 = vsel %vm5101, %v602, %v5223
          %v5227 = vsel %vm5101, 0, %v5225
          %v5228 = vmul.f32 %v5226, %v5226
          %v5229 = vmul.f32 %v5228, -0.001358992
          %v5230 = vadd.f32 %v5229, 0.041655596
          %v5231 = vmul.f32 %v5228, %v5230
          %v5232 = vadd.f32 %v5231, -0.4999988
          %v5233 = vmul.f32 %v5228, %v5232
          %v5234 = vadd.f32 1.0, %v5233
          %v5235 = vmul.f32 %v5226, %v5226
          %v5236 = vmul.f32 %v5235, -0.00019511016
          %v5237 = vadd.f32 %v5236, 0.008332121
          %v5238 = vmul.f32 %v5235, %v5237
          %v5239 = vadd.f32 %v5238, -0.16666654
          %v5240 = vmul.f32 %v5235, %v5239
          %v5241 = vadd.f32 %v5240, 1.0
          %v5242 = vmul.f32 %v5241, %v5226
          %vm5243 = vweird.f32 %v602
          %v5244 = vadd.s32 %v5227, 3
          %v5245 = vand.u32 %v5244, 3
          %vm5246 = vcmp.lt.s32.totalorder %v5245, 2
          %vm5247 = vcmp.eq.s32.totalorder %v5245, 0
          %v5248 = vxor.u32 %v5242, 2147483648
          %v5249 = vsel %vm5247, %v5234, %v5248
          %vm5250 = vcmp.eq.s32.totalorder %v5245, 2
          %v5251 = vxor.u32 %v5234, 2147483648
          %v5252 = vsel %vm5250, %v5251, %v5242
          %v5253 = vsel %vm5246, %v5249, %v5252
          %v5254 = vsel %vm5243, nan, %v5253
          %v5255 = vand.u32 2147483647, %v603
          %vm5256 = vcmp.le.f32.partialorder %v5255, 0.7853982
          %vm5257 = vcmp.lt.s32.totalorder %v603, 0
          %v5258 = vand.u32 %v603, 2139095040
          %v5259 = vshrl.u32 %v5258, 23
          %v5260 = vsub.s32 %v5259, 127
          %v5261 = vand.u32 2147483647, %v603
          %v5262 = vand.u32 %v5261, 8388607
          %v5263 = vor.u32 %v5262, 8388608
          %v5264 = vsub.s32 0, %v5263
          %v5265 = vadd.s32 %v5260, 1
          %vm5266 = vcmp.gt.s32.totalorder %v5265, 0
          %v5267 = vsel %vm5266, %v5265, 0
          %v5268 = vshrl.u32 %v5267, 5
          %v5269 = vand.u32 %v5267, 31
          %v5270 = vsub.s32 32, %v5269
          %v5271 = vshrl.u32 683565275, %v5270
          %v5272 = vshll.u32 683565275, %v5269
          %v5273 = vshrl.u32 2475754826, %v5270
          %v5274 = vor.u32 %v5272, %v5273
          %v5275 = vshll.u32 2475754826, %v5269
          %v5276 = vshrl.u32 2131351028, %v5270
          %v5277 = vor.u32 %v5275, %v5276
          %v5278 = vshll.u32 2131351028, %v5269
          %v5279 = vshrl.u32 2102212464, %v5270
          %v5280 = vor.u32 %v5278, %v5279
          %v5281 = vshll.u32 2102212464, %v5269
          %v5282 = vshrl.u32 920167782, %v5270
          %v5283 = vor.u32 %v5281, %v5282
          %v5284 = vshll.u32 920167782, %v5269
          %v5285 = vshrl.u32 1326507024, %v5270
          %v5286 = vor.u32 %v5284, %v5285
          %vm5287 = vcmp.lt.s32.totalorder %v5268, 1
          %vm5288 = vcmp.lt.s32.totalorder %v5268, 2
          %vm5289 = vcmp.lt.s32.totalorder %v5268, 3
          %vm5290 = vcmp.lt.s32.totalorder %v5268, 4
          %v5291 = vsel %vm5287, %v5271, %v5274
          %v5292 = vsel %vm5290, %v5280, 2102212464
          %v5293 = vsel %vm5289, %v5277, %v5292
          %v5294 = vsel %vm5288, %v5291, %v5293
          %v5295 = vsel %vm5287, %v5274, %v5277
          %v5296 = vsel %vm5290, %v5283, 920167782
          %v5297 = vsel %vm5289, %v5280, %v5296
          %v5298 = vsel %vm5288, %v5295, %v5297
          %v5299 = vsel %vm5287, %v5277, %v5280
          %v5300 = vsel %vm5290, %v5286, 1326507024
          %v5301 = vsel %vm5289, %v5283, %v5300
          %v5302 = vsel %vm5288, %v5299, %v5301
          %v5303 = vshll.u32 %v5263, 8
          %v5304 = vand.u32 %v5303, 65535
          %v5305 = vshrl.u32 %v5303, 16
          %v5306 = vand.u32 %v5302, 65535
          %v5307 = vshrl.u32 %v5302, 16
          %v5308 = vmul.u32 %v5304, %v5306
          %v5309 = vmul.u32 %v5304, %v5307
          %v5310 = vmul.u32 %v5305, %v5306
          %v5311 = vmul.u32 %v5305, %v5307
          %v5312 = vshll.u32 %v5309, 16
          %v5313 = vshrl.u32 %v5309, 16
          %v5314 = vshll.u32 %v5310, 16
          %v5315 = vshrl.u32 %v5310, 16
          %vm5316 = vc.u32 %v5308, %v5312
          %v5317 = vsel %vm5316, 1, 0
          %v5318 = vadd.s32 %v5308, %v5312
          %v5319 = vadd.s32 %v5311, %v5317
          %vm5320 = vc.u32 %v5318, %v5314
          %v5321 = vsel %vm5320, 1, 0
          %v5322 = vadd.s32 %v5318, %v5314
          %v5323 = vadd.s32 %v5319, %v5321
          %v5324 = vadd.s32 %v5323, %v5313
          %v5325 = vadd.s32 %v5324, %v5315
          %v5326 = vand.u32 %v5303, 65535
          %v5327 = vshrl.u32 %v5303, 16
          %v5328 = vand.u32 %v5298, 65535
          %v5329 = vshrl.u32 %v5298, 16
          %v5330 = vmul.u32 %v5326, %v5328
          %v5331 = vmul.u32 %v5326, %v5329
          %v5332 = vmul.u32 %v5327, %v5328
          %v5333 = vmul.u32 %v5327, %v5329
          %v5334 = vshll.u32 %v5331, 16
          %v5335 = vshrl.u32 %v5331, 16
          %v5336 = vshll.u32 %v5332, 16
          %v5337 = vshrl.u32 %v5332, 16
          %vm5338 = vc.u32 %v5330, %v5334
          %v5339 = vsel %vm5338, 1, 0
          %v5340 = vadd.s32 %v5330, %v5334
          %v5341 = vadd.s32 %v5333, %v5339
          %vm5342 = vc.u32 %v5340, %v5336
          %v5343 = vsel %vm5342, 1, 0
          %v5344 = vadd.s32 %v5340, %v5336
          %v5345 = vadd.s32 %v5341, %v5343
          %v5346 = vadd.s32 %v5345, %v5335
          %v5347 = vadd.s32 %v5346, %v5337
          %v5348 = vmul.u32 %v5303, %v5294
          %v5349 = vadd.s32 %v5325, %v5344
          %vm5350 = vc.u32 %v5325, %v5344
          %v5351 = vadd.s32 %v5347, 1
          %v5352 = vsel %vm5350, %v5351, %v5347
          %v5353 = vadd.s32 %v5348, %v5352
          %v5354 = vadd.s32 %v5353, 536870912
          %v5355 = vshrl.u32 %v5354, 30
          %v5356 = vshll.u32 %v5355, 30
          %v5357 = vsub.s32 %v5353, %v5356
          %vm5358 = vcmp.lt.s32.totalorder %v5357, 0
          %v5359 = vsub.s32 0, %v5357
          %v5360 = vsel %vm5358, %v5359, %v5357
          %v5361 = vclz %v5360
          %v5362 = vsub.s32 %v5361, 2
          %vm5363 = vcmp.gt.s32.totalorder 0, %v5362
          %v5364 = vsel %vm5363, 0, %v5362
          %v5365 = vsub.s32 32, %v5364
          %v5366 = vshll.u32 %v5357, %v5364
          %v5367 = vshrl.u32 %v5349, %v5365
          %v5368 = vor.u32 %v5366, %v5367
          %v5369 = vsub.s32 4294967266, %v5364
          %v5370 = vadd.s32 %v5369, 127
          %v5371 = vshll.u32 %v5370, 23
          %v5372 = vor.u32 4788187, %v5371
          %v5373 = vand.u32 2147483647, %v5372
          %v5375 = vcvt.s32.f32 %v5368
          %v5376 = vmul.f32 %v5375, %v5373
          %v5377 = vxor.u32 %v5376, 2147483648
          %v5378 = vsel %vm5257, %v5377, %v5376
          %v5379 = vsub.s32 4, %v5355
          %v5380 = vsel %vm5257, %v5379, %v5355
          %v5381 = vsel %vm5256, %v603, %v5378
          %v5382 = vsel %vm5256, 0, %v5380
          %v5383 = vmul.f32 %v5381, %v5381
          %v5384 = vmul.f32 %v5383, -0.001358992
          %v5385 = vadd.f32 %v5384, 0.041655596
          %v5386 = vmul.f32 %v5383, %v5385
          %v5387 = vadd.f32 %v5386, -0.4999988
          %v5388 = vmul.f32 %v5383, %v5387
          %v5389 = vadd.f32 1.0, %v5388
          %v5390 = vmul.f32 %v5381, %v5381
          %v5391 = vmul.f32 %v5390, -0.00019511016
          %v5392 = vadd.f32 %v5391, 0.008332121
          %v5393 = vmul.f32 %v5390, %v5392
          %v5394 = vadd.f32 %v5393, -0.16666654
          %v5395 = vmul.f32 %v5390, %v5394
          %v5396 = vadd.f32 %v5395, 1.0
          %v5397 = vmul.f32 %v5396, %v5381
          %vm5398 = vweird.f32 %v603
          %v5399 = vadd.s32 %v5382, 3
          %v5400 = vand.u32 %v5399, 3
          %vm5401 = vcmp.lt.s32.totalorder %v5400, 2
          %vm5402 = vcmp.eq.s32.totalorder %v5400, 0
          %v5403 = vxor.u32 %v5397, 2147483648
          %v5404 = vsel %vm5402, %v5389, %v5403
          %vm5405 = vcmp.eq.s32.totalorder %v5400, 2
          %v5406 = vxor.u32 %v5389, 2147483648
          %v5407 = vsel %vm5405, %v5406, %v5397
          %v5408 = vsel %vm5401, %v5404, %v5407
          %v5409 = vsel %vm5398, nan, %v5408
          %v5410 = vand.u32 2147483647, %v604
          %vm5411 = vcmp.le.f32.partialorder %v5410, 0.7853982
          %vm5412 = vcmp.lt.s32.totalorder %v604, 0
          %v5413 = vand.u32 %v604, 2139095040
          %v5414 = vshrl.u32 %v5413, 23
          %v5415 = vsub.s32 %v5414, 127
          %v5416 = vand.u32 2147483647, %v604
          %v5417 = vand.u32 %v5416, 8388607
          %v5418 = vor.u32 %v5417, 8388608
          %v5419 = vsub.s32 0, %v5418
          %v5420 = vadd.s32 %v5415, 1
          %vm5421 = vcmp.gt.s32.totalorder %v5420, 0
          %v5422 = vsel %vm5421, %v5420, 0
          %v5423 = vshrl.u32 %v5422, 5
          %v5424 = vand.u32 %v5422, 31
          %v5425 = vsub.s32 32, %v5424
          %v5426 = vshrl.u32 683565275, %v5425
          %v5427 = vshll.u32 683565275, %v5424
          %v5428 = vshrl.u32 2475754826, %v5425
          %v5429 = vor.u32 %v5427, %v5428
          %v5430 = vshll.u32 2475754826, %v5424
          %v5431 = vshrl.u32 2131351028, %v5425
          %v5432 = vor.u32 %v5430, %v5431
          %v5433 = vshll.u32 2131351028, %v5424
          %v5434 = vshrl.u32 2102212464, %v5425
          %v5435 = vor.u32 %v5433, %v5434
          %v5436 = vshll.u32 2102212464, %v5424
          %v5437 = vshrl.u32 920167782, %v5425
          %v5438 = vor.u32 %v5436, %v5437
          %v5439 = vshll.u32 920167782, %v5424
          %v5440 = vshrl.u32 1326507024, %v5425
          %v5441 = vor.u32 %v5439, %v5440
          %vm5442 = vcmp.lt.s32.totalorder %v5423, 1
          %vm5443 = vcmp.lt.s32.totalorder %v5423, 2
          %vm5444 = vcmp.lt.s32.totalorder %v5423, 3
          %vm5445 = vcmp.lt.s32.totalorder %v5423, 4
          %v5446 = vsel %vm5442, %v5426, %v5429
          %v5447 = vsel %vm5445, %v5435, 2102212464
          %v5448 = vsel %vm5444, %v5432, %v5447
          %v5449 = vsel %vm5443, %v5446, %v5448
          %v5450 = vsel %vm5442, %v5429, %v5432
          %v5451 = vsel %vm5445, %v5438, 920167782
          %v5452 = vsel %vm5444, %v5435, %v5451
          %v5453 = vsel %vm5443, %v5450, %v5452
          %v5454 = vsel %vm5442, %v5432, %v5435
          %v5455 = vsel %vm5445, %v5441, 1326507024
          %v5456 = vsel %vm5444, %v5438, %v5455
          %v5457 = vsel %vm5443, %v5454, %v5456
          %v5458 = vshll.u32 %v5418, 8
          %v5459 = vand.u32 %v5458, 65535
          %v5460 = vshrl.u32 %v5458, 16
          %v5461 = vand.u32 %v5457, 65535
          %v5462 = vshrl.u32 %v5457, 16
          %v5463 = vmul.u32 %v5459, %v5461
          %v5464 = vmul.u32 %v5459, %v5462
          %v5465 = vmul.u32 %v5460, %v5461
          %v5466 = vmul.u32 %v5460, %v5462
          %v5467 = vshll.u32 %v5464, 16
          %v5468 = vshrl.u32 %v5464, 16
          %v5469 = vshll.u32 %v5465, 16
          %v5470 = vshrl.u32 %v5465, 16
          %vm5471 = vc.u32 %v5463, %v5467
          %v5472 = vsel %vm5471, 1, 0
          %v5473 = vadd.s32 %v5463, %v5467
          %v5474 = vadd.s32 %v5466, %v5472
          %vm5475 = vc.u32 %v5473, %v5469
          %v5476 = vsel %vm5475, 1, 0
          %v5477 = vadd.s32 %v5473, %v5469
          %v5478 = vadd.s32 %v5474, %v5476
          %v5479 = vadd.s32 %v5478, %v5468
          %v5480 = vadd.s32 %v5479, %v5470
          %v5481 = vand.u32 %v5458, 65535
          %v5482 = vshrl.u32 %v5458, 16
          %v5483 = vand.u32 %v5453, 65535
          %v5484 = vshrl.u32 %v5453, 16
          %v5485 = vmul.u32 %v5481, %v5483
          %v5486 = vmul.u32 %v5481, %v5484
          %v5487 = vmul.u32 %v5482, %v5483
          %v5488 = vmul.u32 %v5482, %v5484
          %v5489 = vshll.u32 %v5486, 16
          %v5490 = vshrl.u32 %v5486, 16
          %v5491 = vshll.u32 %v5487, 16
          %v5492 = vshrl.u32 %v5487, 16
          %vm5493 = vc.u32 %v5485, %v5489
          %v5494 = vsel %vm5493, 1, 0
          %v5495 = vadd.s32 %v5485, %v5489
          %v5496 = vadd.s32 %v5488, %v5494
          %vm5497 = vc.u32 %v5495, %v5491
          %v5498 = vsel %vm5497, 1, 0
          %v5499 = vadd.s32 %v5495, %v5491
          %v5500 = vadd.s32 %v5496, %v5498
          %v5501 = vadd.s32 %v5500, %v5490
          %v5502 = vadd.s32 %v5501, %v5492
          %v5503 = vmul.u32 %v5458, %v5449
          %v5504 = vadd.s32 %v5480, %v5499
          %vm5505 = vc.u32 %v5480, %v5499
          %v5506 = vadd.s32 %v5502, 1
          %v5507 = vsel %vm5505, %v5506, %v5502
          %v5508 = vadd.s32 %v5503, %v5507
          %v5509 = vadd.s32 %v5508, 536870912
          %v5510 = vshrl.u32 %v5509, 30
          %v5511 = vshll.u32 %v5510, 30
          %v5512 = vsub.s32 %v5508, %v5511
          %vm5513 = vcmp.lt.s32.totalorder %v5512, 0
          %v5514 = vsub.s32 0, %v5512
          %v5515 = vsel %vm5513, %v5514, %v5512
          %v5516 = vclz %v5515
          %v5517 = vsub.s32 %v5516, 2
          %vm5518 = vcmp.gt.s32.totalorder 0, %v5517
          %v5519 = vsel %vm5518, 0, %v5517
          %v5520 = vsub.s32 32, %v5519
          %v5521 = vshll.u32 %v5512, %v5519
          %v5522 = vshrl.u32 %v5504, %v5520
          %v5523 = vor.u32 %v5521, %v5522
          %v5524 = vsub.s32 4294967266, %v5519
          %v5525 = vadd.s32 %v5524, 127
          %v5526 = vshll.u32 %v5525, 23
          %v5527 = vor.u32 4788187, %v5526
          %v5528 = vand.u32 2147483647, %v5527
          %v5530 = vcvt.s32.f32 %v5523
          %v5531 = vmul.f32 %v5530, %v5528
          %v5532 = vxor.u32 %v5531, 2147483648
          %v5533 = vsel %vm5412, %v5532, %v5531
          %v5534 = vsub.s32 4, %v5510
          %v5535 = vsel %vm5412, %v5534, %v5510
          %v5536 = vsel %vm5411, %v604, %v5533
          %v5537 = vsel %vm5411, 0, %v5535
          %v5538 = vmul.f32 %v5536, %v5536
          %v5539 = vmul.f32 %v5538, -0.001358992
          %v5540 = vadd.f32 %v5539, 0.041655596
          %v5541 = vmul.f32 %v5538, %v5540
          %v5542 = vadd.f32 %v5541, -0.4999988
          %v5543 = vmul.f32 %v5538, %v5542
          %v5544 = vadd.f32 1.0, %v5543
          %v5545 = vmul.f32 %v5536, %v5536
          %v5546 = vmul.f32 %v5545, -0.00019511016
          %v5547 = vadd.f32 %v5546, 0.008332121
          %v5548 = vmul.f32 %v5545, %v5547
          %v5549 = vadd.f32 %v5548, -0.16666654
          %v5550 = vmul.f32 %v5545, %v5549
          %v5551 = vadd.f32 %v5550, 1.0
          %v5552 = vmul.f32 %v5551, %v5536
          %vm5553 = vweird.f32 %v604
          %v5554 = vadd.s32 %v5537, 3
          %v5555 = vand.u32 %v5554, 3
          %vm5556 = vcmp.lt.s32.totalorder %v5555, 2
          %vm5557 = vcmp.eq.s32.totalorder %v5555, 0
          %v5558 = vxor.u32 %v5552, 2147483648
          %v5559 = vsel %vm5557, %v5544, %v5558
          %vm5560 = vcmp.eq.s32.totalorder %v5555, 2
          %v5561 = vxor.u32 %v5544, 2147483648
          %v5562 = vsel %vm5560, %v5561, %v5552
          %v5563 = vsel %vm5556, %v5559, %v5562
          %v5564 = vsel %vm5553, nan, %v5563
          %s5565 = scalar_lea.vmem %s137, %s152 [#allocation2]
          %5566 = vst [vmem:[%s5565] sm:$0xff] %v759
          %5567 = vst [vmem:[%s5565 + $0x8] sm:$0xff] %v914
          %5568 = vst [vmem:[%s5565 + $0x10] sm:$0xff] %v1069
          %5569 = vst [vmem:[%s5565 + $0x18] sm:$0xff] %v1224
          %5570 = vst [vmem:[%s5565 + $0x20] sm:$0xff] %v1379
          %5571 = vst [vmem:[%s5565 + $0x28] sm:$0xff] %v1534
          %5572 = vst [vmem:[%s5565 + $0x30] sm:$0xff] %v1689
          %5573 = vst [vmem:[%s5565 + $0x38] sm:$0xff] %v1844
          %5574 = vst [vmem:[%s5565 + $0x40] sm:$0xff] %v1999
          %5575 = vst [vmem:[%s5565 + $0x48] sm:$0xff] %v2154
          %5576 = vst [vmem:[%s5565 + $0x50] sm:$0xff] %v2309
          %5577 = vst [vmem:[%s5565 + $0x58] sm:$0xff] %v2464
          %5578 = vst [vmem:[%s5565 + $0x60] sm:$0xff] %v2619
          %5579 = vst [vmem:[%s5565 + $0x68] sm:$0xff] %v2774
          %5580 = vst [vmem:[%s5565 + $0x70] sm:$0xff] %v2929
          %5581 = vst [vmem:[%s5565 + $0x78] sm:$0xff] %v3084
          %5582 = vst [vmem:[%s5565 + $0x80] sm:$0xff] %v3239
          %5583 = vst [vmem:[%s5565 + $0x88] sm:$0xff] %v3394
          %5584 = vst [vmem:[%s5565 + $0x90] sm:$0xff] %v3549
          %5585 = vst [vmem:[%s5565 + $0x98] sm:$0xff] %v3704
          %5586 = vst [vmem:[%s5565 + $0xa0] sm:$0xff] %v3859
          %5587 = vst [vmem:[%s5565 + $0xa8] sm:$0xff] %v4014
          %5588 = vst [vmem:[%s5565 + $0xb0] sm:$0xff] %v4169
          %5589 = vst [vmem:[%s5565 + $0xb8] sm:$0xff] %v4324
          %5590 = vst [vmem:[%s5565 + $0xc0] sm:$0xff] %v4479
          %5591 = vst [vmem:[%s5565 + $0xc8] sm:$0xff] %v4634
          %5592 = vst [vmem:[%s5565 + $0xd0] sm:$0xff] %v4789
          %5593 = vst [vmem:[%s5565 + $0xd8] sm:$0xff] %v4944
          %5594 = vst [vmem:[%s5565 + $0xe0] sm:$0xff] %v5099
          %5595 = vst [vmem:[%s5565 + $0xe8] sm:$0xff] %v5254
          %5596 = vst [vmem:[%s5565 + $0xf0] sm:$0xff] %v5409
          %5597 = vst [vmem:[%s5565 + $0xf8] sm:$0xff] %v5564
        $region33: #{tpu_custom_call.1} parent=27 // loop_footer
          %s151 = sadd.s32 1, %s147
        $region34: #{tpu_custom_call.1} parent=27 // loop_footer_branch
          %146 = sbr.rel target = $region30
        $region35: #{tpu_custom_call.1} parent=27 // loop_exit
          _
        %s5598 = sand.u32 %s71, 1
        %s5599 = scalar_lea.sflag [#allocation3], %s5598
        %s5600 = sand.u32 %s71, 1
        %s5601 = smul.addr %s5600, 1024
        %s5602 = scalar_lea.vmem [#allocation2], %s5601
        // Predicated region
        $region36: #{tpu_custom_call.1} parent=27 // pred_check
          %p5603 = pneg %p81
        $region37: #{tpu_custom_call.1} parent=27 // pred_check_branch
          %5605 = sbr.rel (%p5603) target = $region39
        $region38: #{tpu_custom_call.1} parent=27 // pred_region
          %s5606 = smul.u32 128, %s16
          %5608 = vsyncadd %s5599, 0
          %s5609 = smul.addr %s5606, 8
          %s5610 = scalar_lea.hbm %s2, %s5609
          %s5611 = sshll.u32 %s5602, 4
          %s5612 = int_to_ptr.vmem [resolvable:$true] %s5611
          %s5613 = sshll.u32 %s5610, 4
          %s5614 = int_to_ptr.hbm [resolvable:$true] %s5613
          %5619 = dma.vmem_to_hbm [thread:$0]  %s5612, 16384, %s5614, %s5599, 128, 128, 8
        $region39: #{tpu_custom_call.1} parent=27 // pred_fallthru
          _
      $region28: #{tpu_custom_call.1} parent=5 // pred_fallthru
        _
      %p5620 = scmp.le.s32.totalorder 2, %s11
      // Predicated region
      $region40: #{tpu_custom_call.1} parent=5 // pred_check
        %p5621 = pneg %p5620
      $region41: #{tpu_custom_call.1} parent=5 // pred_check_branch
        %5623 = sbr.rel (%p5621) target = $region43
      $region42: #{tpu_custom_call.1} parent=5 // pred_region
        %s5624 = ssub.s32 %s11, 2
        // Predicated region
        $region44: #{tpu_custom_call.1} parent=42 // pred_check
          %p5625 = pneg %p87
        $region45: #{tpu_custom_call.1} parent=42 // pred_check_branch
          %5627 = sbr.rel (%p5625) target = $region47
        $region46: #{tpu_custom_call.1} parent=42 // pred_region
          %s5628 = sand.u32 %s72, 1
          %s5629 = scalar_lea.sflag [#allocation3], %s5628
          %s5630 = sand.u32 %s72, 1
          %s5631 = smul.addr %s5630, 1024
          %s5632 = scalar_lea.vmem [#allocation2], %s5631
          %5634 = dma.done %s5629, 16384
        $region47: #{tpu_custom_call.1} parent=42 // pred_fallthru
          _
      $region43: #{tpu_custom_call.1} parent=5 // pred_fallthru
        _
    $region6: #{tpu_custom_call.1} parent=1 // loop_footer
      %s15 = sadd.s32 1, %s11
    $region7: #{tpu_custom_call.1} parent=1 // loop_footer_branch
      %10 = sbr.rel target = $region3
    $region8: #{tpu_custom_call.1} parent=1 // loop_exit
      _
    %5635 = vsyncpa [#allocation3], 1
    %s5636 = scalar_lea.sflag [#allocation3], 1
    %5637 = vsyncpa %s5636, 1

</llo_original>
